<compile_context>
chip_gen: v6e
topology: v6e:2x2x1
jax: 0.10.0
libtpu: 0.0.40
codegen_flags: <defaults>
</compile_context>

<pallas_src>
import functools
import math

import jax
import jax.numpy as jnp
from jax import lax
from jax.experimental import pallas as pl
from jax.experimental.pallas import tpu as pltpu

PAD = 8  # padded coordinate width (xyz + 5 zero lanes/sublanes)


def _round_up(n, m):
    return ((n + m - 1) // m) * m


def _vmem_capacity_bytes():
    # Trace-time hardware query; falls back to the conservative v7x size.
    try:
        return int(pltpu.get_tpu_info().vmem_capacity_bytes)
    except Exception:
        return 64 << 20


def _vmem_limit(est_bytes, vmem_cap):
    hi = max(32 << 20, vmem_cap // 2)
    return int(min(hi, max(2 * est_bytes, 16 << 20)))


# ---------------------------------------------------------------------------
# Kernel 1: MLP batch statistics (sum / sum-of-squares of x@w + b, tiled over N)
# ---------------------------------------------------------------------------
def mlp_stats_kernel(x_ref, w_ref, b_ref, sum_ref, sq_ref, *, n_rows, tn):
    y = jnp.dot(x_ref[...], w_ref[...], preferred_element_type=jnp.float32) + b_ref[...]
    # mask padded tail rows (x was zero-padded, but y there would equal the bias)
    row = pl.program_id(0) * tn + lax.broadcasted_iota(jnp.int32, y.shape, 0)
    y = jnp.where(row < n_rows, y, 0.0)

    @pl.when(pl.program_id(0) == 0)
    def _():
        sum_ref[...] = jnp.zeros_like(sum_ref)
        sq_ref[...] = jnp.zeros_like(sq_ref)

    sum_ref[...] += jnp.sum(y, axis=0, keepdims=True)
    sq_ref[...] += jnp.sum(y * y, axis=0, keepdims=True)


def mlp_batch_stats(x, w, b, vmem_cap):
    N, Cin = x.shape
    Cout = w.shape[1]
    tn = min(2048, _round_up(N, 8))          # large row tiles: passes are HBM/overhead bound
    N_pad = _round_up(N, tn)
    if N_pad != N:
        x = jnp.pad(x, ((0, N_pad - N), (0, 0)))
    b2 = b.reshape(1, Cout)

    est = (2 * tn * Cin + Cin * Cout + 3 * Cout + 2 * tn * Cout) * 4
    kern = functools.partial(mlp_stats_kernel, n_rows=N, tn=tn)
    return pl.pallas_call(
        kern,
        out_shape=(jax.ShapeDtypeStruct((1, Cout), jnp.float32),
                   jax.ShapeDtypeStruct((1, Cout), jnp.float32)),
        grid=(N_pad // tn,),
        in_specs=[
            pl.BlockSpec((tn, Cin), lambda i: (i, 0)),
            pl.BlockSpec((Cin, Cout), lambda i: (0, 0)),
            pl.BlockSpec((1, Cout), lambda i: (0, 0)),
        ],
        out_specs=(pl.BlockSpec((1, Cout), lambda i: (0, 0)),
                   pl.BlockSpec((1, Cout), lambda i: (0, 0))),
        compiler_params=pltpu.CompilerParams(
            dimension_semantics=("arbitrary",),
            vmem_limit_bytes=_vmem_limit(est, vmem_cap)),
    )(x, w, b2)


# ---------------------------------------------------------------------------
# Kernel 2: Farthest point sampling (per point-cloud batch), VPU/XLU only
#   pos stored coords-on-sublanes [8, Nb]; only the selected lane index is kept
#   on the serial critical path; sampled positions are emitted afterwards with
#   chunked one-hot matmuls against a row-layout pos block.
# ---------------------------------------------------------------------------
def fps_kernel(pos_cols_ref, pos_rows_ref, sub_ref, sel_ref):
    pos_b = pos_cols_ref[0]                          # [8, Nb]  (xyz on sublanes 0..2)
    Nb = pos_b.shape[1]
    Mb = sub_ref.shape[1]

    lane_iota = lax.broadcasted_iota(jnp.int32, (1, Nb), 1)

    # TODO(synk): torch_geometric fps() picks a random start point per batch
    # (random_start=True); we deterministically start from the first point.
    sel_ref[0:1, :] = jnp.zeros((1, 1), jnp.int32)
    cur = pos_b[:, 0:1]                              # [8, 1]

    def body(t, carry):
        min_d, cur = carry
        # squared distance of every point to the current sample: VPU + sublane reduce
        d = jnp.sum(jnp.square(pos_b - cur), axis=0, keepdims=True)     # [1, Nb]
        min_d = jnp.minimum(min_d, d)
        mx = jnp.max(min_d)
        sel = jnp.min(jnp.where(min_d == mx, lane_iota, Nb))            # first argmax
        onehot = (lane_iota == sel).astype(jnp.float32)                 # [1, Nb]
        new_cur = jnp.sum(pos_b * onehot, axis=1, keepdims=True)        # [8, 1] lane reduce
        sel_ref[pl.ds(t, 1), :] = jnp.broadcast_to(sel, (1, 1))         # tiny scalar store
        return (min_d, new_cur)

    init_min = jnp.full((1, Nb), jnp.inf, jnp.float32)
    lax.fori_loop(1, Mb, body, (init_min, cur))

    # one-shot emit (off the serial chain): gather sampled positions via MXU matmuls
    pos_rows = pos_rows_ref[0]                                          # [Nb, 8]
    TC = min(Mb, 256)
    for s in range(0, Mb, TC):
        size = min(TC, Mb - s)
        sel_chunk = sel_ref[pl.ds(s, size), :]                          # [size, 1]
        oh = (lax.broadcasted_iota(jnp.int32, (size, Nb), 1)
              == sel_chunk).astype(jnp.float32)                         # [size, Nb]
        sub_ref[0, pl.ds(s, size), :] = jnp.dot(
            oh, pos_rows, preferred_element_type=jnp.float32)


def fps_forward(pos_cols, pos_rows, Mb, vmem_cap):
    B, _, Nb = pos_cols.shape
    TC = min(Mb, 256)
    est = (4 * PAD * Nb + 2 * Mb * PAD + Mb * 128 + TC * Nb + TC * PAD + 4 * Nb) * 4
    return pl.pallas_call(
        fps_kernel,
        out_shape=jax.ShapeDtypeStruct((B, Mb, PAD), jnp.float32),
        grid=(B,),
        in_specs=[pl.BlockSpec((1, PAD, Nb), lambda bb: (bb, 0, 0)),
                  pl.BlockSpec((1, Nb, PAD), lambda bb: (bb, 0, 0))],
        out_specs=pl.BlockSpec((1, Mb, PAD), lambda bb: (bb, 0, 0)),
        scratch_shapes=[pltpu.VMEM((Mb, 1), jnp.int32)],
        compiler_params=pltpu.CompilerParams(
            dimension_semantics=("parallel",),
            vmem_limit_bytes=_vmem_limit(est, vmem_cap)),
    )(pos_cols, pos_rows)
    # TODO(synk): when Nb < 128 several batches could be packed along the lane
    # axis of one FPS invocation to raise lane occupancy; not done here.


# ---------------------------------------------------------------------------
# Kernel 3: fused MLP-apply + kNN (per batch, tiled over queries) + scatter-max
#   h for the whole point-cloud batch is computed once (m == 0) into VMEM scratch.
#   Each of the k neighbors does its own one-hot gather + running max, so only
#   one [TM, Nb] one-hot is live at a time (no k-way concatenation).
# ---------------------------------------------------------------------------
def knn_mlp_kernel(x_ref, w_ref, b_ref, pos_ref, sub_ref, o_ref, h_ref, *, k):
    # Recompute shared MLP features (Linear+BN folded into w_eff/b_eff, then ReLU)
    # for this point-cloud batch once per batch.
    @pl.when(pl.program_id(1) == 0)
    def _():
        y = jnp.dot(x_ref[0], w_ref[...], preferred_element_type=jnp.float32) + b_ref[...]
        h_ref[...] = jnp.maximum(y, 0.0)

    pos_cols = pos_ref[0]                            # [8, Nb]
    sub_rows = sub_ref[0]                            # [TM, 8]
    Nb = pos_cols.shape[1]
    TM = sub_rows.shape[0]
    h = h_ref[...]                                   # [Nb, C]

    # rank-preserving squared distances per query row: ||x_j||^2 - 2 <y_m, x_j>
    nx = jnp.sum(pos_cols * pos_cols, axis=0, keepdims=True)                # [1, Nb]
    d = jnp.dot(sub_rows, pos_cols, preferred_element_type=jnp.float32)     # [TM, Nb]
    work = nx - 2.0 * d

    lane_iota = lax.broadcasted_iota(jnp.int32, (TM, Nb), 1)
    BIG = jnp.float32(3.4e38)

    acc = None
    for i in range(k):
        mval = jnp.min(work, axis=1, keepdims=True)                         # [TM, 1]
        sel = jnp.min(jnp.where(work <= mval, lane_iota, Nb),
                      axis=1, keepdims=True)                                # first argmin
        oh = lane_iota == sel                                               # [TM, Nb]
        g = jnp.dot(oh.astype(jnp.float32), h,
                    preferred_element_type=jnp.float32)                     # [TM, C]
        acc = g if acc is None else jnp.maximum(acc, g)
        if i + 1 < k:
            work = jnp.where(oh, BIG, work)

    o_ref[...] = acc[None]


def _knn_query_tile(Mb, Nb, Cin, Cout, budget):
    """Largest multiple-of-8 query tile whose VMEM footprint stays under budget."""
    def est(t):
        fixed = (2 * (Nb * Cin + PAD * Nb) + Nb * Cout + 2 * (Cin * Cout + Cout)) * 4
        per_t = (2 * (PAD + Cout) + 4 * Nb) * 4    # sub/out double-buffers + live [t,Nb] temps
        return fixed + t * per_t
    tm = min(512, _round_up(Mb, 8))
    while tm > 8 and est(tm) > budget:
        tm = max(8, _round_up(tm // 2, 8))
    return tm, est(tm)


def knn_mlp_forward(x_b, w_eff, b_eff, pos_cols, sub_rows, k, vmem_cap):
    B, Nb, Cin = x_b.shape
    Cout = w_eff.shape[1]
    Mb = sub_rows.shape[1]

    budget = min(28 << 20, max(12 << 20, vmem_cap // 4))   # re-derived per chip (v7x = 64 MiB)
    tm, est = _knn_query_tile(Mb, Nb, Cin, Cout, budget)
    Mb_pad = _round_up(Mb, tm)
    if Mb_pad != Mb:
        sub_rows = jnp.pad(sub_rows, ((0, 0), (0, Mb_pad - Mb), (0, 0)))

    kern = functools.partial(knn_mlp_kernel, k=k)
    out = pl.pallas_call(
        kern,
        out_shape=jax.ShapeDtypeStruct((B, Mb_pad, Cout), jnp.float32),
        grid=(B, Mb_pad // tm),
        in_specs=[
            pl.BlockSpec((1, Nb, Cin), lambda bb, m: (bb, 0, 0)),   # resident across m
            pl.BlockSpec((Cin, Cout), lambda bb, m: (0, 0)),
            pl.BlockSpec((1, Cout), lambda bb, m: (0, 0)),
            pl.BlockSpec((1, PAD, Nb), lambda bb, m: (bb, 0, 0)),   # resident across m
            pl.BlockSpec((1, tm, PAD), lambda bb, m: (bb, m, 0)),
        ],
        out_specs=pl.BlockSpec((1, tm, Cout), lambda bb, m: (bb, m, 0)),
        scratch_shapes=[pltpu.VMEM((Nb, Cout), jnp.float32)],
        compiler_params=pltpu.CompilerParams(
            dimension_semantics=("parallel", "arbitrary"),
            vmem_limit_bytes=_vmem_limit(est, vmem_cap)),
    )(x_b, w_eff, b_eff, pos_cols, sub_rows)
    return out, Mb_pad


# ---------------------------------------------------------------------------
# TransitionDown forward (glue in plain JAX, compute in Pallas)
# ---------------------------------------------------------------------------
def transition_down(x, pos, batch, w, b, gamma, beta, *, num_graphs, ratio=0.25, k=16):
    N, Cin = x.shape
    Cout = w.shape[1]
    B = num_graphs                # static: avoids a device->host sync on batch[-1]
    assert N % B == 0, "synthetic setup assumes equal-sized, contiguous batches"
    Nb = N // B
    assert Nb >= k, "each batch must have at least k points"
    Mb = math.ceil(ratio * Nb)
    vmem_cap = _vmem_capacity_bytes()

    x = x.astype(jnp.float32)
    pos_rows = jnp.zeros((B, Nb, PAD), jnp.float32).at[:, :, :3].set(
        pos.astype(jnp.float32).reshape(B, Nb, 3))
    pos_cols = jnp.swapaxes(pos_rows, 1, 2)          # coords-on-sublanes [B, 8, Nb]

    # 1) BatchNorm training statistics of y = x @ w + b  (Pallas, tiled over N)
    s, sq = mlp_batch_stats(x, w, b, vmem_cap)
    mean = s / N
    var = jnp.maximum(sq / N - mean * mean, 0.0)     # biased var (BN training mode)
    rstd = lax.rsqrt(var + 1e-5)
    # Fold BN scale/shift into the linear layer so the kNN kernel only needs (w_eff, b_eff):
    #   relu((x@w + b - mean) * rstd * gamma + beta) == relu(x @ w_eff + b_eff)
    scale = gamma.reshape(1, Cout) * rstd
    w_eff = w * scale
    b_eff = (b.reshape(1, Cout) - mean) * scale + beta.reshape(1, Cout)

    # 2) farthest point sampling per batch  -> sampled positions [B, Mb, 8]
    sub_rows = fps_forward(pos_cols, pos_rows, Mb, vmem_cap)

    # 3) fused MLP-apply + kNN + max-pool of features over the k neighbors
    out_b, _ = knn_mlp_forward(x.reshape(B, Nb, Cin), w_eff, b_eff,
                               pos_cols, sub_rows, k, vmem_cap)
    out = out_b[:, :Mb, :].reshape(B * Mb, Cout)
    sub_pos = sub_rows[:, :, :3].reshape(B * Mb, 3)
    sub_batch = jnp.repeat(jnp.arange(B, dtype=batch.dtype), Mb)
    return out, sub_pos, sub_batch


if __name__ == "__main__":
    key = jax.random.PRNGKey(0)
    B, Nb = 2, 32
    Cin, Cout = 16, 32
    ratio, k = 0.25, 16
    N = B * Nb

    kx, kp, kw, kb = jax.random.split(key, 4)
    x = jax.random.normal(kx, (N, Cin), jnp.float32)
    pos = jax.random.normal(kp, (N, 3), jnp.float32)
    batch = jnp.repeat(jnp.arange(B, dtype=jnp.int32), Nb)

    # deterministic parameters (Linear weight stored transposed: [Cin, Cout])
    w = jax.random.normal(kw, (Cin, Cout), jnp.float32) * (1.0 / math.sqrt(Cin))
    b = jax.random.normal(kb, (Cout,), jnp.float32) * 0.1
    gamma = jnp.ones((Cout,), jnp.float32)   # BatchNorm affine defaults
    beta = jnp.zeros((Cout,), jnp.float32)

    td = jax.jit(functools.partial(transition_down, num_graphs=B, ratio=ratio, k=k))
    out, sub_pos, sub_batch = td(x, pos, batch, w, b, gamma, beta)
    jax.block_until_ready((out, sub_pos, sub_batch))

    M = B * math.ceil(ratio * Nb)
    assert out.shape == (M, Cout)
    assert sub_pos.shape == (M, 3)
    assert sub_batch.shape == (M,)
    print("KERNEL_OK")
</pallas_src>

<mosaic_0001>
module attributes {stable_mosaic.version = 11 : i64} {
  func.func @fps_kernel(%arg0: i32, %arg1: memref<1x8x32xf32, #tpu.memory_space<vmem>>, %arg2: memref<1x32x8xf32, #tpu.memory_space<vmem>>, %arg3: memref<1x8x8xf32, #tpu.memory_space<vmem>>, %arg4: memref<8x1xi32, #tpu.memory_space<vmem>>) attributes {dimension_semantics = [#tpu.dimension_semantics<parallel>], iteration_bounds = array<i64: 2>, scalar_prefetch = 0 : i64, scratch_operands = 1 : i64, tpu.core_type = #tpu.core_type<tc>, window_params = [{transform_indices = @transform_0, window_bounds = array<i64: 1, 8, 32>}, {transform_indices = @transform_1, window_bounds = array<i64: 1, 32, 8>}, {transform_indices = @transform_2, window_bounds = array<i64: 1, 8, 8>}]} {
    %c0 = arith.constant 0 : index
    %c0_0 = arith.constant 0 : index
    %c0_1 = arith.constant 0 : index
    %0 = vector.load %arg1[%c0, %c0_0, %c0_1] : memref<1x8x32xf32, #tpu.memory_space<vmem>>, vector<1x8x32xf32>
    %1 = vector.shape_cast %0 : vector<1x8x32xf32> to vector<8x32xf32>
    %2 = tpu.iota {dimensions = array<i32: 1>} : vector<1x32xi32>
    %c0_i32 = arith.constant 0 : i32
    %3 = vector.broadcast %c0_i32 : i32 to vector<1x1xi32>
    %c0_2 = arith.constant 0 : index
    %c0_3 = arith.constant 0 : index
    %4 = vector.load %arg4[%c0_2, %c0_3] : memref<8x1xi32, #tpu.memory_space<vmem>>, vector<1x1xi32>
    tpu.vector_store %arg4[%c0_2, %c0_3], %3 {strides = array<i32>} : memref<8x1xi32, #tpu.memory_space<vmem>>, vector<1x1xi32>,
    %5 = vector.extract_strided_slice %1 {offsets = [0, 0], sizes = [8, 1], strides = [1, 1]} : vector<8x32xf32> to vector<8x1xf32>
    %cst = arith.constant 0x7F800000 : f32
    %6 = vector.broadcast %cst : f32 to vector<1x32xf32>
    %c1_i32 = arith.constant 1 : i32
    %c7_i32 = arith.constant 7 : i32
    %7 = arith.addi %c1_i32, %c7_i32 : i32
    %c1_i32_4 = arith.constant 1 : i32
    %8:2 = scf.for %arg5 = %c1_i32 to %7 step %c1_i32_4 iter_args(%arg6 = %6, %arg7 = %5) -> (vector<1x32xf32>, vector<8x1xf32>)  : i32 {
      %21 = vector.broadcast %arg7 : vector<8x1xf32> to vector<8x32xf32>
      %22 = arith.subf %1, %21 : vector<8x32xf32>
      %23 = arith.mulf %22, %22 : vector<8x32xf32>
      %cst_15 = arith.constant dense<0.000000e+00> : vector<32xf32>
      %24 = vector.multi_reduction <add>, %23, %cst_15 [0] : vector<8x32xf32> to vector<32xf32>
      %25 = vector.shape_cast %24 : vector<32xf32> to vector<1x32xf32>
      %26 = arith.minimumf %arg6, %25 : vector<1x32xf32>
      %27 = vector.shape_cast %26 : vector<1x32xf32> to vector<1x1x32xf32>
      %cst_16 = arith.constant dense<0xFF800000> : vector<1xf32>
      %28 = vector.multi_reduction <maximumf>, %27, %cst_16 [1, 2] : vector<1x1x32xf32> to vector<1xf32>
      %29 = vector.shape_cast %28 : vector<1xf32> to vector<1x1x1xf32>
      %30 = vector.extract %29[0, 0, 0] : f32 from vector<1x1x1xf32>
      %31 = vector.broadcast %30 : f32 to vector<1x32xf32>
      %32 = arith.cmpf oeq, %26, %31 : vector<1x32xf32>
      %c32_i32 = arith.constant 32 : i32
      %33 = vector.broadcast %c32_i32 : i32 to vector<1x32xi32>
      %34 = arith.select %32, %2, %33 : vector<1x32xi1>, vector<1x32xi32>
      %35 = vector.shape_cast %34 : vector<1x32xi32> to vector<1x1x32xi32>
      %cst_17 = arith.constant dense<2147483647> : vector<1xi32>
      %36 = vector.multi_reduction <minsi>, %35, %cst_17 [1, 2] : vector<1x1x32xi32> to vector<1xi32>
      %37 = vector.shape_cast %36 : vector<1xi32> to vector<1x1x1xi32>
      %38 = vector.extract %37[0, 0, 0] : i32 from vector<1x1x1xi32>
      %39 = vector.broadcast %38 : i32 to vector<1x32xi32>
      %40 = arith.cmpi eq, %2, %39 : vector<1x32xi32>
      %41 = arith.extui %40 : vector<1x32xi1> to vector<1x32xi32>
      %42 = arith.sitofp %41 : vector<1x32xi32> to vector<1x32xf32>
      %43 = vector.broadcast %42 : vector<1x32xf32> to vector<8x32xf32>
      %44 = arith.mulf %1, %43 : vector<8x32xf32>
      %cst_18 = arith.constant dense<0.000000e+00> : vector<8xf32>
      %45 = vector.multi_reduction <add>, %44, %cst_18 [1] : vector<8x32xf32> to vector<8xf32>
      %46 = vector.shape_cast %45 : vector<8xf32> to vector<8x1xf32>
      %47 = vector.broadcast %38 : i32 to vector<1x1xi32>
      %48 = arith.index_cast %arg5 : i32 to index
      %c0_19 = arith.constant 0 : index
      %49 = vector.load %arg4[%48, %c0_19] : memref<8x1xi32, #tpu.memory_space<vmem>>, vector<1x1xi32>
      tpu.vector_store %arg4[%48, %c0_19], %47 {strides = array<i32>} : memref<8x1xi32, #tpu.memory_space<vmem>>, vector<1x1xi32>,
      scf.yield %26, %46 : vector<1x32xf32>, vector<8x1xf32>
    }
    %c7_i32_5 = arith.constant 7 : i32
    %c0_6 = arith.constant 0 : index
    %c0_7 = arith.constant 0 : index
    %c0_8 = arith.constant 0 : index
    %9 = vector.load %arg2[%c0_6, %c0_7, %c0_8] : memref<1x32x8xf32, #tpu.memory_space<vmem>>, vector<1x32x8xf32>
    %10 = vector.shape_cast %9 : vector<1x32x8xf32> to vector<32x8xf32>
    %c0_9 = arith.constant 0 : index
    %c0_10 = arith.constant 0 : index
    %11 = vector.load %arg4[%c0_9, %c0_10] : memref<8x1xi32, #tpu.memory_space<vmem>>, vector<8x1xi32>
    %12 = tpu.iota {dimensions = array<i32: 1>} : vector<8x32xi32>
    %13 = vector.broadcast %11 : vector<8x1xi32> to vector<8x32xi32>
    %14 = arith.cmpi eq, %12, %13 : vector<8x32xi32>
    %15 = arith.extui %14 : vector<8x32xi1> to vector<8x32xi32>
    %16 = arith.sitofp %15 : vector<8x32xi32> to vector<8x32xf32>
    %cst_11 = arith.constant dense<0.000000e+00> : vector<8x8xf32>
    %17 = tpu.matmul %16, %10, %cst_11 {dimension_numbers = #tpu.dot_dimension_numbers<[1], [0], [0], [1], [0, 0, 1, 1], [], []>} : vector<8x32xf32>, vector<32x8xf32>, vector<8x8xf32> -> vector<8x8xf32>
    %c0_12 = arith.constant 0 : index
    %c0_13 = arith.constant 0 : index
    %c0_14 = arith.constant 0 : index
    %18 = vector.load %arg3[%c0_12, %c0_13, %c0_14] : memref<1x8x8xf32, #tpu.memory_space<vmem>>, vector<1x8x8xf32>
    %19 = vector.shape_cast %18 : vector<1x8x8xf32> to vector<8x8xf32>
    %20 = vector.shape_cast %17 : vector<8x8xf32> to vector<1x8x8xf32>
    tpu.vector_store %arg3[%c0_12, %c0_13, %c0_14], %20 {strides = array<i32>} : memref<1x8x8xf32, #tpu.memory_space<vmem>>, vector<1x8x8xf32>,
    return
  }
  func.func @transform_0(%arg0: i32) -> (i32, i32, i32) {
    %c0_i32 = arith.constant 0 : i32
    %c0_i32_0 = arith.constant 0 : i32
    %c0_i32_1 = arith.constant 0 : i32
    return %arg0, %c0_i32, %c0_i32_0 : i32, i32, i32
  }
  func.func @transform_1(%arg0: i32) -> (i32, i32, i32) {
    %c0_i32 = arith.constant 0 : i32
    %c0_i32_0 = arith.constant 0 : i32
    %c0_i32_1 = arith.constant 0 : i32
    return %arg0, %c0_i32, %c0_i32_0 : i32, i32, i32
  }
  func.func @transform_2(%arg0: i32) -> (i32, i32, i32) {
    %c0_i32 = arith.constant 0 : i32
    %c0_i32_0 = arith.constant 0 : i32
    %c0_i32_1 = arith.constant 0 : i32
    return %arg0, %c0_i32, %c0_i32_0 : i32, i32, i32
  }
}

module attributes {stable_mosaic.version = 11 : i64} {
  func.func @mlp_stats_kernel(%arg0: i32, %arg1: memref<64x16xf32, #tpu.memory_space<vmem>>, %arg2: memref<16x32xf32, #tpu.memory_space<vmem>>, %arg3: memref<1x32xf32, #tpu.memory_space<vmem>>, %arg4: memref<1x32xf32, #tpu.memory_space<vmem>>, %arg5: memref<1x32xf32, #tpu.memory_space<vmem>>) attributes {dimension_semantics = [#tpu.dimension_semantics<arbitrary>], iteration_bounds = array<i64: 1>, scalar_prefetch = 0 : i64, scratch_operands = 0 : i64, tpu.core_type = #tpu.core_type<tc>, window_params = [{transform_indices = @transform_0, window_bounds = array<i64: 64, 16>}, {pipeline_mode = #tpu.pipeline_mode<synchronous>, transform_indices = @transform_1, window_bounds = array<i64: 16, 32>}, {pipeline_mode = #tpu.pipeline_mode<synchronous>, transform_indices = @transform_2, window_bounds = array<i64: 1, 32>}, {pipeline_mode = #tpu.pipeline_mode<synchronous>, transform_indices = @transform_3, window_bounds = array<i64: 1, 32>}, {pipeline_mode = #tpu.pipeline_mode<synchronous>, transform_indices = @transform_4, window_bounds = array<i64: 1, 32>}]} {
    %c0 = arith.constant 0 : index
    %c0_0 = arith.constant 0 : index
    %0 = vector.load %arg1[%c0, %c0_0] : memref<64x16xf32, #tpu.memory_space<vmem>>, vector<64x16xf32>
    %c0_1 = arith.constant 0 : index
    %c0_2 = arith.constant 0 : index
    %1 = vector.load %arg2[%c0_1, %c0_2] : memref<16x32xf32, #tpu.memory_space<vmem>>, vector<16x32xf32>
    %cst = arith.constant dense<0.000000e+00> : vector<64x32xf32>
    %2 = tpu.matmul %0, %1, %cst {dimension_numbers = #tpu.dot_dimension_numbers<[1], [0], [0], [1], [0, 0, 1, 1], [], []>} : vector<64x16xf32>, vector<16x32xf32>, vector<64x32xf32> -> vector<64x32xf32>
    %c0_3 = arith.constant 0 : index
    %c0_4 = arith.constant 0 : index
    %3 = vector.load %arg3[%c0_3, %c0_4] : memref<1x32xf32, #tpu.memory_space<vmem>>, vector<1x32xf32>
    %4 = vector.broadcast %3 : vector<1x32xf32> to vector<64x32xf32>
    %5 = arith.addf %2, %4 : vector<64x32xf32>
    %c64_i32 = arith.constant 64 : i32
    %6 = arith.muli %arg0, %c64_i32 : i32
    %7 = tpu.iota {dimensions = array<i32: 0>} : vector<64x32xi32>
    %8 = vector.broadcast %6 : i32 to vector<64x32xi32>
    %9 = arith.addi %8, %7 : vector<64x32xi32>
    %c64_i32_5 = arith.constant 64 : i32
    %10 = vector.broadcast %c64_i32_5 : i32 to vector<64x32xi32>
    %11 = arith.cmpi slt, %9, %10 : vector<64x32xi32>
    %cst_6 = arith.constant 0.000000e+00 : f32
    %12 = vector.broadcast %cst_6 : f32 to vector<64x32xf32>
    %13 = arith.select %11, %5, %12 : vector<64x32xi1>, vector<64x32xf32>
    %c0_i32 = arith.constant 0 : i32
    %14 = arith.cmpi eq, %arg0, %c0_i32 : i32
    %15 = arith.extui %14 : i1 to i32
    %c0_i32_7 = arith.constant 0 : i32
    %16 = arith.cmpi ne, %15, %c0_i32_7 : i32
    scf.if %16 {
      %cst_18 = arith.constant 0.000000e+00 : f32
      %28 = vector.broadcast %cst_18 : f32 to vector<1x32xf32>
      %c0_19 = arith.constant 0 : index
      %c0_20 = arith.constant 0 : index
      %29 = vector.load %arg4[%c0_19, %c0_20] : memref<1x32xf32, #tpu.memory_space<vmem>>, vector<1x32xf32>
      tpu.vector_store %arg4[%c0_19, %c0_20], %28 {strides = array<i32>} : memref<1x32xf32, #tpu.memory_space<vmem>>, vector<1x32xf32>,
      %cst_21 = arith.constant 0.000000e+00 : f32
      %30 = vector.broadcast %cst_21 : f32 to vector<1x32xf32>
      %c0_22 = arith.constant 0 : index
      %c0_23 = arith.constant 0 : index
      %31 = vector.load %arg5[%c0_22, %c0_23] : memref<1x32xf32, #tpu.memory_space<vmem>>, vector<1x32xf32>
      tpu.vector_store %arg5[%c0_22, %c0_23], %30 {strides = array<i32>} : memref<1x32xf32, #tpu.memory_space<vmem>>, vector<1x32xf32>,
    } else {
    }
    %c0_8 = arith.constant 0 : index
    %c0_9 = arith.constant 0 : index
    %17 = vector.load %arg4[%c0_8, %c0_9] : memref<1x32xf32, #tpu.memory_space<vmem>>, vector<1x32xf32>
    %cst_10 = arith.constant dense<0.000000e+00> : vector<32xf32>
    %18 = vector.multi_reduction <add>, %13, %cst_10 [0] : vector<64x32xf32> to vector<32xf32>
    %19 = vector.shape_cast %18 : vector<32xf32> to vector<1x32xf32>
    %20 = arith.addf %17, %19 : vector<1x32xf32>
    %c0_11 = arith.constant 0 : index
    %c0_12 = arith.constant 0 : index
    %21 = vector.load %arg4[%c0_11, %c0_12] : memref<1x32xf32, #tpu.memory_space<vmem>>, vector<1x32xf32>
    tpu.vector_store %arg4[%c0_11, %c0_12], %20 {strides = array<i32>} : memref<1x32xf32, #tpu.memory_space<vmem>>, vector<1x32xf32>,
    %c0_13 = arith.constant 0 : index
    %c0_14 = arith.constant 0 : index
    %22 = vector.load %arg5[%c0_13, %c0_14] : memref<1x32xf32, #tpu.memory_space<vmem>>, vector<1x32xf32>
    %23 = arith.mulf %13, %13 : vector<64x32xf32>
    %cst_15 = arith.constant dense<0.000000e+00> : vector<32xf32>
    %24 = vector.multi_reduction <add>, %23, %cst_15 [0] : vector<64x32xf32> to vector<32xf32>
    %25 = vector.shape_cast %24 : vector<32xf32> to vector<1x32xf32>
    %26 = arith.addf %22, %25 : vector<1x32xf32>
    %c0_16 = arith.constant 0 : index
    %c0_17 = arith.constant 0 : index
    %27 = vector.load %arg5[%c0_16, %c0_17] : memref<1x32xf32, #tpu.memory_space<vmem>>, vector<1x32xf32>
    tpu.vector_store %arg5[%c0_16, %c0_17], %26 {strides = array<i32>} : memref<1x32xf32, #tpu.memory_space<vmem>>, vector<1x32xf32>,
    return
  }
  func.func @transform_0(%arg0: i32) -> (i32, i32) {
    %c0_i32 = arith.constant 0 : i32
    %c0_i32_0 = arith.constant 0 : i32
    return %arg0, %c0_i32 : i32, i32
  }
  func.func @transform_1(%arg0: i32) -> (i32, i32) {
    %c0_i32 = arith.constant 0 : i32
    %c0_i32_0 = arith.constant 0 : i32
    %c0_i32_1 = arith.constant 0 : i32
    return %c0_i32, %c0_i32_0 : i32, i32
  }
  func.func @transform_2(%arg0: i32) -> (i32, i32) {
    %c0_i32 = arith.constant 0 : i32
    %c0_i32_0 = arith.constant 0 : i32
    %c0_i32_1 = arith.constant 0 : i32
    return %c0_i32, %c0_i32_0 : i32, i32
  }
  func.func @transform_3(%arg0: i32) -> (i32, i32) {
    %c0_i32 = arith.constant 0 : i32
    %c0_i32_0 = arith.constant 0 : i32
    %c0_i32_1 = arith.constant 0 : i32
    return %c0_i32, %c0_i32_0 : i32, i32
  }
  func.func @transform_4(%arg0: i32) -> (i32, i32) {
    %c0_i32 = arith.constant 0 : i32
    %c0_i32_0 = arith.constant 0 : i32
    %c0_i32_1 = arith.constant 0 : i32
    return %c0_i32, %c0_i32_0 : i32, i32
  }
}

module attributes {stable_mosaic.version = 11 : i64} {
  func.func @knn_mlp_kernel(%arg0: i32, %arg1: i32, %arg2: memref<1x32x16xf32, #tpu.memory_space<vmem>>, %arg3: memref<16x32xf32, #tpu.memory_space<vmem>>, %arg4: memref<1x32xf32, #tpu.memory_space<vmem>>, %arg5: memref<1x8x32xf32, #tpu.memory_space<vmem>>, %arg6: memref<1x8x8xf32, #tpu.memory_space<vmem>>, %arg7: memref<1x8x32xf32, #tpu.memory_space<vmem>>, %arg8: memref<32x32xf32, #tpu.memory_space<vmem>>) attributes {dimension_semantics = [#tpu.dimension_semantics<parallel>, #tpu.dimension_semantics<arbitrary>], iteration_bounds = array<i64: 2, 1>, scalar_prefetch = 0 : i64, scratch_operands = 1 : i64, tpu.core_type = #tpu.core_type<tc>, window_params = [{transform_indices = @transform_0, window_bounds = array<i64: 1, 32, 16>}, {pipeline_mode = #tpu.pipeline_mode<synchronous>, transform_indices = @transform_1, window_bounds = array<i64: 16, 32>}, {pipeline_mode = #tpu.pipeline_mode<synchronous>, transform_indices = @transform_2, window_bounds = array<i64: 1, 32>}, {transform_indices = @transform_3, window_bounds = array<i64: 1, 8, 32>}, {transform_indices = @transform_4, window_bounds = array<i64: 1, 8, 8>}, {transform_indices = @transform_5, window_bounds = array<i64: 1, 8, 32>}]} {
    %c0_i32 = arith.constant 0 : i32
    %0 = arith.cmpi eq, %arg1, %c0_i32 : i32
    %1 = arith.extui %0 : i1 to i32
    %c0_i32_0 = arith.constant 0 : i32
    %2 = arith.cmpi ne, %1, %c0_i32_0 : i32
    scf.if %2 {
      %c0_91 = arith.constant 0 : index
      %c0_92 = arith.constant 0 : index
      %c0_93 = arith.constant 0 : index
      %272 = vector.load %arg2[%c0_91, %c0_92, %c0_93] : memref<1x32x16xf32, #tpu.memory_space<vmem>>, vector<1x32x16xf32>
      %273 = vector.shape_cast %272 : vector<1x32x16xf32> to vector<32x16xf32>
      %c0_94 = arith.constant 0 : index
      %c0_95 = arith.constant 0 : index
      %274 = vector.load %arg3[%c0_94, %c0_95] : memref<16x32xf32, #tpu.memory_space<vmem>>, vector<16x32xf32>
      %cst_96 = arith.constant dense<0.000000e+00> : vector<32x32xf32>
      %275 = tpu.matmul %273, %274, %cst_96 {dimension_numbers = #tpu.dot_dimension_numbers<[1], [0], [0], [1], [0, 0, 1, 1], [], []>} : vector<32x16xf32>, vector<16x32xf32>, vector<32x32xf32> -> vector<32x32xf32>
      %c0_97 = arith.constant 0 : index
      %c0_98 = arith.constant 0 : index
      %276 = vector.load %arg4[%c0_97, %c0_98] : memref<1x32xf32, #tpu.memory_space<vmem>>, vector<1x32xf32>
      %277 = vector.broadcast %276 : vector<1x32xf32> to vector<32x32xf32>
      %278 = arith.addf %275, %277 : vector<32x32xf32>
      %cst_99 = arith.constant 0.000000e+00 : f32
      %279 = vector.broadcast %cst_99 : f32 to vector<32x32xf32>
      %280 = arith.maximumf %278, %279 : vector<32x32xf32>
      %c0_100 = arith.constant 0 : index
      %c0_101 = arith.constant 0 : index
      %281 = vector.load %arg8[%c0_100, %c0_101] : memref<32x32xf32, #tpu.memory_space<vmem>>, vector<32x32xf32>
      tpu.vector_store %arg8[%c0_100, %c0_101], %280 {strides = array<i32>} : memref<32x32xf32, #tpu.memory_space<vmem>>, vector<32x32xf32>,
    } else {
    }
    %c0 = arith.constant 0 : index
    %c0_1 = arith.constant 0 : index
    %c0_2 = arith.constant 0 : index
    %3 = vector.load %arg5[%c0, %c0_1, %c0_2] : memref<1x8x32xf32, #tpu.memory_space<vmem>>, vector<1x8x32xf32>
    %4 = vector.shape_cast %3 : vector<1x8x32xf32> to vector<8x32xf32>
    %c0_3 = arith.constant 0 : index
    %c0_4 = arith.constant 0 : index
    %c0_5 = arith.constant 0 : index
    %5 = vector.load %arg6[%c0_3, %c0_4, %c0_5] : memref<1x8x8xf32, #tpu.memory_space<vmem>>, vector<1x8x8xf32>
    %6 = vector.shape_cast %5 : vector<1x8x8xf32> to vector<8x8xf32>
    %c0_6 = arith.constant 0 : index
    %c0_7 = arith.constant 0 : index
    %7 = vector.load %arg8[%c0_6, %c0_7] : memref<32x32xf32, #tpu.memory_space<vmem>>, vector<32x32xf32>
    %8 = arith.mulf %4, %4 : vector<8x32xf32>
    %cst = arith.constant dense<0.000000e+00> : vector<32xf32>
    %9 = vector.multi_reduction <add>, %8, %cst [0] : vector<8x32xf32> to vector<32xf32>
    %10 = vector.shape_cast %9 : vector<32xf32> to vector<1x32xf32>
    %cst_8 = arith.constant dense<0.000000e+00> : vector<8x32xf32>
    %11 = tpu.matmul %6, %4, %cst_8 {dimension_numbers = #tpu.dot_dimension_numbers<[1], [0], [0], [1], [0, 0, 1, 1], [], []>} : vector<8x8xf32>, vector<8x32xf32>, vector<8x32xf32> -> vector<8x32xf32>
    %cst_9 = arith.constant 2.000000e+00 : f32
    %12 = vector.broadcast %cst_9 : f32 to vector<8x32xf32>
    %13 = arith.mulf %12, %11 : vector<8x32xf32>
    %14 = vector.broadcast %10 : vector<1x32xf32> to vector<8x32xf32>
    %15 = arith.subf %14, %13 : vector<8x32xf32>
    %16 = tpu.iota {dimensions = array<i32: 1>} : vector<8x32xi32>
    %cst_10 = arith.constant dense<0x7F800000> : vector<8xf32>
    %17 = vector.multi_reduction <minimumf>, %15, %cst_10 [1] : vector<8x32xf32> to vector<8xf32>
    %18 = vector.shape_cast %17 : vector<8xf32> to vector<8x1xf32>
    %19 = vector.broadcast %18 : vector<8x1xf32> to vector<8x32xf32>
    %20 = arith.cmpf ole, %15, %19 : vector<8x32xf32>
    %c32_i32 = arith.constant 32 : i32
    %21 = vector.broadcast %c32_i32 : i32 to vector<8x32xi32>
    %22 = arith.select %20, %16, %21 : vector<8x32xi1>, vector<8x32xi32>
    %cst_11 = arith.constant dense<2147483647> : vector<8xi32>
    %23 = vector.multi_reduction <minsi>, %22, %cst_11 [1] : vector<8x32xi32> to vector<8xi32>
    %24 = vector.shape_cast %23 : vector<8xi32> to vector<8x1xi32>
    %25 = vector.broadcast %24 : vector<8x1xi32> to vector<8x32xi32>
    %26 = arith.cmpi eq, %16, %25 : vector<8x32xi32>
    %27 = arith.extui %26 : vector<8x32xi1> to vector<8x32xi32>
    %28 = arith.sitofp %27 : vector<8x32xi32> to vector<8x32xf32>
    %cst_12 = arith.constant dense<0.000000e+00> : vector<8x32xf32>
    %29 = tpu.matmul %28, %7, %cst_12 {dimension_numbers = #tpu.dot_dimension_numbers<[1], [0], [0], [1], [0, 0, 1, 1], [], []>} : vector<8x32xf32>, vector<32x32xf32>, vector<8x32xf32> -> vector<8x32xf32>
    %cst_13 = arith.constant 3.400000e+38 : f32
    %30 = vector.broadcast %cst_13 : f32 to vector<8x32xf32>
    %31 = arith.select %26, %30, %15 : vector<8x32xi1>, vector<8x32xf32>
    %cst_14 = arith.constant dense<0x7F800000> : vector<8xf32>
    %32 = vector.multi_reduction <minimumf>, %31, %cst_14 [1] : vector<8x32xf32> to vector<8xf32>
    %33 = vector.shape_cast %32 : vector<8xf32> to vector<8x1xf32>
    %34 = vector.broadcast %33 : vector<8x1xf32> to vector<8x32xf32>
    %35 = arith.cmpf ole, %31, %34 : vector<8x32xf32>
    %c32_i32_15 = arith.constant 32 : i32
    %36 = vector.broadcast %c32_i32_15 : i32 to vector<8x32xi32>
    %37 = arith.select %35, %16, %36 : vector<8x32xi1>, vector<8x32xi32>
    %cst_16 = arith.constant dense<2147483647> : vector<8xi32>
    %38 = vector.multi_reduction <minsi>, %37, %cst_16 [1] : vector<8x32xi32> to vector<8xi32>
    %39 = vector.shape_cast %38 : vector<8xi32> to vector<8x1xi32>
    %40 = vector.broadcast %39 : vector<8x1xi32> to vector<8x32xi32>
    %41 = arith.cmpi eq, %16, %40 : vector<8x32xi32>
    %42 = arith.extui %41 : vector<8x32xi1> to vector<8x32xi32>
    %43 = arith.sitofp %42 : vector<8x32xi32> to vector<8x32xf32>
    %cst_17 = arith.constant dense<0.000000e+00> : vector<8x32xf32>
    %44 = tpu.matmul %43, %7, %cst_17 {dimension_numbers = #tpu.dot_dimension_numbers<[1], [0], [0], [1], [0, 0, 1, 1], [], []>} : vector<8x32xf32>, vector<32x32xf32>, vector<8x32xf32> -> vector<8x32xf32>
    %45 = arith.maximumf %29, %44 : vector<8x32xf32>
    %cst_18 = arith.constant 3.400000e+38 : f32
    %46 = vector.broadcast %cst_18 : f32 to vector<8x32xf32>
    %47 = arith.select %41, %46, %31 : vector<8x32xi1>, vector<8x32xf32>
    %cst_19 = arith.constant dense<0x7F800000> : vector<8xf32>
    %48 = vector.multi_reduction <minimumf>, %47, %cst_19 [1] : vector<8x32xf32> to vector<8xf32>
    %49 = vector.shape_cast %48 : vector<8xf32> to vector<8x1xf32>
    %50 = vector.broadcast %49 : vector<8x1xf32> to vector<8x32xf32>
    %51 = arith.cmpf ole, %47, %50 : vector<8x32xf32>
    %c32_i32_20 = arith.constant 32 : i32
    %52 = vector.broadcast %c32_i32_20 : i32 to vector<8x32xi32>
    %53 = arith.select %51, %16, %52 : vector<8x32xi1>, vector<8x32xi32>
    %cst_21 = arith.constant dense<2147483647> : vector<8xi32>
    %54 = vector.multi_reduction <minsi>, %53, %cst_21 [1] : vector<8x32xi32> to vector<8xi32>
    %55 = vector.shape_cast %54 : vector<8xi32> to vector<8x1xi32>
    %56 = vector.broadcast %55 : vector<8x1xi32> to vector<8x32xi32>
    %57 = arith.cmpi eq, %16, %56 : vector<8x32xi32>
    %58 = arith.extui %57 : vector<8x32xi1> to vector<8x32xi32>
    %59 = arith.sitofp %58 : vector<8x32xi32> to vector<8x32xf32>
    %cst_22 = arith.constant dense<0.000000e+00> : vector<8x32xf32>
    %60 = tpu.matmul %59, %7, %cst_22 {dimension_numbers = #tpu.dot_dimension_numbers<[1], [0], [0], [1], [0, 0, 1, 1], [], []>} : vector<8x32xf32>, vector<32x32xf32>, vector<8x32xf32> -> vector<8x32xf32>
    %61 = arith.maximumf %45, %60 : vector<8x32xf32>
    %cst_23 = arith.constant 3.400000e+38 : f32
    %62 = vector.broadcast %cst_23 : f32 to vector<8x32xf32>
    %63 = arith.select %57, %62, %47 : vector<8x32xi1>, vector<8x32xf32>
    %cst_24 = arith.constant dense<0x7F800000> : vector<8xf32>
    %64 = vector.multi_reduction <minimumf>, %63, %cst_24 [1] : vector<8x32xf32> to vector<8xf32>
    %65 = vector.shape_cast %64 : vector<8xf32> to vector<8x1xf32>
    %66 = vector.broadcast %65 : vector<8x1xf32> to vector<8x32xf32>
    %67 = arith.cmpf ole, %63, %66 : vector<8x32xf32>
    %c32_i32_25 = arith.constant 32 : i32
    %68 = vector.broadcast %c32_i32_25 : i32 to vector<8x32xi32>
    %69 = arith.select %67, %16, %68 : vector<8x32xi1>, vector<8x32xi32>
    %cst_26 = arith.constant dense<2147483647> : vector<8xi32>
    %70 = vector.multi_reduction <minsi>, %69, %cst_26 [1] : vector<8x32xi32> to vector<8xi32>
    %71 = vector.shape_cast %70 : vector<8xi32> to vector<8x1xi32>
    %72 = vector.broadcast %71 : vector<8x1xi32> to vector<8x32xi32>
    %73 = arith.cmpi eq, %16, %72 : vector<8x32xi32>
    %74 = arith.extui %73 : vector<8x32xi1> to vector<8x32xi32>
    %75 = arith.sitofp %74 : vector<8x32xi32> to vector<8x32xf32>
    %cst_27 = arith.constant dense<0.000000e+00> : vector<8x32xf32>
    %76 = tpu.matmul %75, %7, %cst_27 {dimension_numbers = #tpu.dot_dimension_numbers<[1], [0], [0], [1], [0, 0, 1, 1], [], []>} : vector<8x32xf32>, vector<32x32xf32>, vector<8x32xf32> -> vector<8x32xf32>
    %77 = arith.maximumf %61, %76 : vector<8x32xf32>
    %cst_28 = arith.constant 3.400000e+38 : f32
    %78 = vector.broadcast %cst_28 : f32 to vector<8x32xf32>
    %79 = arith.select %73, %78, %63 : vector<8x32xi1>, vector<8x32xf32>
    %cst_29 = arith.constant dense<0x7F800000> : vector<8xf32>
    %80 = vector.multi_reduction <minimumf>, %79, %cst_29 [1] : vector<8x32xf32> to vector<8xf32>
    %81 = vector.shape_cast %80 : vector<8xf32> to vector<8x1xf32>
    %82 = vector.broadcast %81 : vector<8x1xf32> to vector<8x32xf32>
    %83 = arith.cmpf ole, %79, %82 : vector<8x32xf32>
    %c32_i32_30 = arith.constant 32 : i32
    %84 = vector.broadcast %c32_i32_30 : i32 to vector<8x32xi32>
    %85 = arith.select %83, %16, %84 : vector<8x32xi1>, vector<8x32xi32>
    %cst_31 = arith.constant dense<2147483647> : vector<8xi32>
    %86 = vector.multi_reduction <minsi>, %85, %cst_31 [1] : vector<8x32xi32> to vector<8xi32>
    %87 = vector.shape_cast %86 : vector<8xi32> to vector<8x1xi32>
    %88 = vector.broadcast %87 : vector<8x1xi32> to vector<8x32xi32>
    %89 = arith.cmpi eq, %16, %88 : vector<8x32xi32>
    %90 = arith.extui %89 : vector<8x32xi1> to vector<8x32xi32>
    %91 = arith.sitofp %90 : vector<8x32xi32> to vector<8x32xf32>
    %cst_32 = arith.constant dense<0.000000e+00> : vector<8x32xf32>
    %92 = tpu.matmul %91, %7, %cst_32 {dimension_numbers = #tpu.dot_dimension_numbers<[1], [0], [0], [1], [0, 0, 1, 1], [], []>} : vector<8x32xf32>, vector<32x32xf32>, vector<8x32xf32> -> vector<8x32xf32>
    %93 = arith.maximumf %77, %92 : vector<8x32xf32>
    %cst_33 = arith.constant 3.400000e+38 : f32
    %94 = vector.broadcast %cst_33 : f32 to vector<8x32xf32>
    %95 = arith.select %89, %94, %79 : vector<8x32xi1>, vector<8x32xf32>
    %cst_34 = arith.constant dense<0x7F800000> : vector<8xf32>
    %96 = vector.multi_reduction <minimumf>, %95, %cst_34 [1] : vector<8x32xf32> to vector<8xf32>
    %97 = vector.shape_cast %96 : vector<8xf32> to vector<8x1xf32>
    %98 = vector.broadcast %97 : vector<8x1xf32> to vector<8x32xf32>
    %99 = arith.cmpf ole, %95, %98 : vector<8x32xf32>
    %c32_i32_35 = arith.constant 32 : i32
    %100 = vector.broadcast %c32_i32_35 : i32 to vector<8x32xi32>
    %101 = arith.select %99, %16, %100 : vector<8x32xi1>, vector<8x32xi32>
    %cst_36 = arith.constant dense<2147483647> : vector<8xi32>
    %102 = vector.multi_reduction <minsi>, %101, %cst_36 [1] : vector<8x32xi32> to vector<8xi32>
    %103 = vector.shape_cast %102 : vector<8xi32> to vector<8x1xi32>
    %104 = vector.broadcast %103 : vector<8x1xi32> to vector<8x32xi32>
    %105 = arith.cmpi eq, %16, %104 : vector<8x32xi32>
    %106 = arith.extui %105 : vector<8x32xi1> to vector<8x32xi32>
    %107 = arith.sitofp %106 : vector<8x32xi32> to vector<8x32xf32>
    %cst_37 = arith.constant dense<0.000000e+00> : vector<8x32xf32>
    %108 = tpu.matmul %107, %7, %cst_37 {dimension_numbers = #tpu.dot_dimension_numbers<[1], [0], [0], [1], [0, 0, 1, 1], [], []>} : vector<8x32xf32>, vector<32x32xf32>, vector<8x32xf32> -> vector<8x32xf32>
    %109 = arith.maximumf %93, %108 : vector<8x32xf32>
    %cst_38 = arith.constant 3.400000e+38 : f32
    %110 = vector.broadcast %cst_38 : f32 to vector<8x32xf32>
    %111 = arith.select %105, %110, %95 : vector<8x32xi1>, vector<8x32xf32>
    %cst_39 = arith.constant dense<0x7F800000> : vector<8xf32>
    %112 = vector.multi_reduction <minimumf>, %111, %cst_39 [1] : vector<8x32xf32> to vector<8xf32>
    %113 = vector.shape_cast %112 : vector<8xf32> to vector<8x1xf32>
    %114 = vector.broadcast %113 : vector<8x1xf32> to vector<8x32xf32>
    %115 = arith.cmpf ole, %111, %114 : vector<8x32xf32>
    %c32_i32_40 = arith.constant 32 : i32
    %116 = vector.broadcast %c32_i32_40 : i32 to vector<8x32xi32>
    %117 = arith.select %115, %16, %116 : vector<8x32xi1>, vector<8x32xi32>
    %cst_41 = arith.constant dense<2147483647> : vector<8xi32>
    %118 = vector.multi_reduction <minsi>, %117, %cst_41 [1] : vector<8x32xi32> to vector<8xi32>
    %119 = vector.shape_cast %118 : vector<8xi32> to vector<8x1xi32>
    %120 = vector.broadcast %119 : vector<8x1xi32> to vector<8x32xi32>
    %121 = arith.cmpi eq, %16, %120 : vector<8x32xi32>
    %122 = arith.extui %121 : vector<8x32xi1> to vector<8x32xi32>
    %123 = arith.sitofp %122 : vector<8x32xi32> to vector<8x32xf32>
    %cst_42 = arith.constant dense<0.000000e+00> : vector<8x32xf32>
    %124 = tpu.matmul %123, %7, %cst_42 {dimension_numbers = #tpu.dot_dimension_numbers<[1], [0], [0], [1], [0, 0, 1, 1], [], []>} : vector<8x32xf32>, vector<32x32xf32>, vector<8x32xf32> -> vector<8x32xf32>
    %125 = arith.maximumf %109, %124 : vector<8x32xf32>
    %cst_43 = arith.constant 3.400000e+38 : f32
    %126 = vector.broadcast %cst_43 : f32 to vector<8x32xf32>
    %127 = arith.select %121, %126, %111 : vector<8x32xi1>, vector<8x32xf32>
    %cst_44 = arith.constant dense<0x7F800000> : vector<8xf32>
    %128 = vector.multi_reduction <minimumf>, %127, %cst_44 [1] : vector<8x32xf32> to vector<8xf32>
    %129 = vector.shape_cast %128 : vector<8xf32> to vector<8x1xf32>
    %130 = vector.broadcast %129 : vector<8x1xf32> to vector<8x32xf32>
    %131 = arith.cmpf ole, %127, %130 : vector<8x32xf32>
    %c32_i32_45 = arith.constant 32 : i32
    %132 = vector.broadcast %c32_i32_45 : i32 to vector<8x32xi32>
    %133 = arith.select %131, %16, %132 : vector<8x32xi1>, vector<8x32xi32>
    %cst_46 = arith.constant dense<2147483647> : vector<8xi32>
    %134 = vector.multi_reduction <minsi>, %133, %cst_46 [1] : vector<8x32xi32> to vector<8xi32>
    %135 = vector.shape_cast %134 : vector<8xi32> to vector<8x1xi32>
    %136 = vector.broadcast %135 : vector<8x1xi32> to vector<8x32xi32>
    %137 = arith.cmpi eq, %16, %136 : vector<8x32xi32>
    %138 = arith.extui %137 : vector<8x32xi1> to vector<8x32xi32>
    %139 = arith.sitofp %138 : vector<8x32xi32> to vector<8x32xf32>
    %cst_47 = arith.constant dense<0.000000e+00> : vector<8x32xf32>
    %140 = tpu.matmul %139, %7, %cst_47 {dimension_numbers = #tpu.dot_dimension_numbers<[1], [0], [0], [1], [0, 0, 1, 1], [], []>} : vector<8x32xf32>, vector<32x32xf32>, vector<8x32xf32> -> vector<8x32xf32>
    %141 = arith.maximumf %125, %140 : vector<8x32xf32>
    %cst_48 = arith.constant 3.400000e+38 : f32
    %142 = vector.broadcast %cst_48 : f32 to vector<8x32xf32>
    %143 = arith.select %137, %142, %127 : vector<8x32xi1>, vector<8x32xf32>
    %cst_49 = arith.constant dense<0x7F800000> : vector<8xf32>
    %144 = vector.multi_reduction <minimumf>, %143, %cst_49 [1] : vector<8x32xf32> to vector<8xf32>
    %145 = vector.shape_cast %144 : vector<8xf32> to vector<8x1xf32>
    %146 = vector.broadcast %145 : vector<8x1xf32> to vector<8x32xf32>
    %147 = arith.cmpf ole, %143, %146 : vector<8x32xf32>
    %c32_i32_50 = arith.constant 32 : i32
    %148 = vector.broadcast %c32_i32_50 : i32 to vector<8x32xi32>
    %149 = arith.select %147, %16, %148 : vector<8x32xi1>, vector<8x32xi32>
    %cst_51 = arith.constant dense<2147483647> : vector<8xi32>
    %150 = vector.multi_reduction <minsi>, %149, %cst_51 [1] : vector<8x32xi32> to vector<8xi32>
    %151 = vector.shape_cast %150 : vector<8xi32> to vector<8x1xi32>
    %152 = vector.broadcast %151 : vector<8x1xi32> to vector<8x32xi32>
    %153 = arith.cmpi eq, %16, %152 : vector<8x32xi32>
    %154 = arith.extui %153 : vector<8x32xi1> to vector<8x32xi32>
    %155 = arith.sitofp %154 : vector<8x32xi32> to vector<8x32xf32>
    %cst_52 = arith.constant dense<0.000000e+00> : vector<8x32xf32>
    %156 = tpu.matmul %155, %7, %cst_52 {dimension_numbers = #tpu.dot_dimension_numbers<[1], [0], [0], [1], [0, 0, 1, 1], [], []>} : vector<8x32xf32>, vector<32x32xf32>, vector<8x32xf32> -> vector<8x32xf32>
    %157 = arith.maximumf %141, %156 : vector<8x32xf32>
    %cst_53 = arith.constant 3.400000e+38 : f32
    %158 = vector.broadcast %cst_53 : f32 to vector<8x32xf32>
    %159 = arith.select %153, %158, %143 : vector<8x32xi1>, vector<8x32xf32>
    %cst_54 = arith.constant dense<0x7F800000> : vector<8xf32>
    %160 = vector.multi_reduction <minimumf>, %159, %cst_54 [1] : vector<8x32xf32> to vector<8xf32>
    %161 = vector.shape_cast %160 : vector<8xf32> to vector<8x1xf32>
    %162 = vector.broadcast %161 : vector<8x1xf32> to vector<8x32xf32>
    %163 = arith.cmpf ole, %159, %162 : vector<8x32xf32>
    %c32_i32_55 = arith.constant 32 : i32
    %164 = vector.broadcast %c32_i32_55 : i32 to vector<8x32xi32>
    %165 = arith.select %163, %16, %164 : vector<8x32xi1>, vector<8x32xi32>
    %cst_56 = arith.constant dense<2147483647> : vector<8xi32>
    %166 = vector.multi_reduction <minsi>, %165, %cst_56 [1] : vector<8x32xi32> to vector<8xi32>
    %167 = vector.shape_cast %166 : vector<8xi32> to vector<8x1xi32>
    %168 = vector.broadcast %167 : vector<8x1xi32> to vector<8x32xi32>
    %169 = arith.cmpi eq, %16, %168 : vector<8x32xi32>
    %170 = arith.extui %169 : vector<8x32xi1> to vector<8x32xi32>
    %171 = arith.sitofp %170 : vector<8x32xi32> to vector<8x32xf32>
    %cst_57 = arith.constant dense<0.000000e+00> : vector<8x32xf32>
    %172 = tpu.matmul %171, %7, %cst_57 {dimension_numbers = #tpu.dot_dimension_numbers<[1], [0], [0], [1], [0, 0, 1, 1], [], []>} : vector<8x32xf32>, vector<32x32xf32>, vector<8x32xf32> -> vector<8x32xf32>
    %173 = arith.maximumf %157, %172 : vector<8x32xf32>
    %cst_58 = arith.constant 3.400000e+38 : f32
    %174 = vector.broadcast %cst_58 : f32 to vector<8x32xf32>
    %175 = arith.select %169, %174, %159 : vector<8x32xi1>, vector<8x32xf32>
    %cst_59 = arith.constant dense<0x7F800000> : vector<8xf32>
    %176 = vector.multi_reduction <minimumf>, %175, %cst_59 [1] : vector<8x32xf32> to vector<8xf32>
    %177 = vector.shape_cast %176 : vector<8xf32> to vector<8x1xf32>
    %178 = vector.broadcast %177 : vector<8x1xf32> to vector<8x32xf32>
    %179 = arith.cmpf ole, %175, %178 : vector<8x32xf32>
    %c32_i32_60 = arith.constant 32 : i32
    %180 = vector.broadcast %c32_i32_60 : i32 to vector<8x32xi32>
    %181 = arith.select %179, %16, %180 : vector<8x32xi1>, vector<8x32xi32>
    %cst_61 = arith.constant dense<2147483647> : vector<8xi32>
    %182 = vector.multi_reduction <minsi>, %181, %cst_61 [1] : vector<8x32xi32> to vector<8xi32>
    %183 = vector.shape_cast %182 : vector<8xi32> to vector<8x1xi32>
    %184 = vector.broadcast %183 : vector<8x1xi32> to vector<8x32xi32>
    %185 = arith.cmpi eq, %16, %184 : vector<8x32xi32>
    %186 = arith.extui %185 : vector<8x32xi1> to vector<8x32xi32>
    %187 = arith.sitofp %186 : vector<8x32xi32> to vector<8x32xf32>
    %cst_62 = arith.constant dense<0.000000e+00> : vector<8x32xf32>
    %188 = tpu.matmul %187, %7, %cst_62 {dimension_numbers = #tpu.dot_dimension_numbers<[1], [0], [0], [1], [0, 0, 1, 1], [], []>} : vector<8x32xf32>, vector<32x32xf32>, vector<8x32xf32> -> vector<8x32xf32>
    %189 = arith.maximumf %173, %188 : vector<8x32xf32>
    %cst_63 = arith.constant 3.400000e+38 : f32
    %190 = vector.broadcast %cst_63 : f32 to vector<8x32xf32>
    %191 = arith.select %185, %190, %175 : vector<8x32xi1>, vector<8x32xf32>
    %cst_64 = arith.constant dense<0x7F800000> : vector<8xf32>
    %192 = vector.multi_reduction <minimumf>, %191, %cst_64 [1] : vector<8x32xf32> to vector<8xf32>
    %193 = vector.shape_cast %192 : vector<8xf32> to vector<8x1xf32>
    %194 = vector.broadcast %193 : vector<8x1xf32> to vector<8x32xf32>
    %195 = arith.cmpf ole, %191, %194 : vector<8x32xf32>
    %c32_i32_65 = arith.constant 32 : i32
    %196 = vector.broadcast %c32_i32_65 : i32 to vector<8x32xi32>
    %197 = arith.select %195, %16, %196 : vector<8x32xi1>, vector<8x32xi32>
    %cst_66 = arith.constant dense<2147483647> : vector<8xi32>
    %198 = vector.multi_reduction <minsi>, %197, %cst_66 [1] : vector<8x32xi32> to vector<8xi32>
    %199 = vector.shape_cast %198 : vector<8xi32> to vector<8x1xi32>
    %200 = vector.broadcast %199 : vector<8x1xi32> to vector<8x32xi32>
    %201 = arith.cmpi eq, %16, %200 : vector<8x32xi32>
    %202 = arith.extui %201 : vector<8x32xi1> to vector<8x32xi32>
    %203 = arith.sitofp %202 : vector<8x32xi32> to vector<8x32xf32>
    %cst_67 = arith.constant dense<0.000000e+00> : vector<8x32xf32>
    %204 = tpu.matmul %203, %7, %cst_67 {dimension_numbers = #tpu.dot_dimension_numbers<[1], [0], [0], [1], [0, 0, 1, 1], [], []>} : vector<8x32xf32>, vector<32x32xf32>, vector<8x32xf32> -> vector<8x32xf32>
    %205 = arith.maximumf %189, %204 : vector<8x32xf32>
    %cst_68 = arith.constant 3.400000e+38 : f32
    %206 = vector.broadcast %cst_68 : f32 to vector<8x32xf32>
    %207 = arith.select %201, %206, %191 : vector<8x32xi1>, vector<8x32xf32>
    %cst_69 = arith.constant dense<0x7F800000> : vector<8xf32>
    %208 = vector.multi_reduction <minimumf>, %207, %cst_69 [1] : vector<8x32xf32> to vector<8xf32>
    %209 = vector.shape_cast %208 : vector<8xf32> to vector<8x1xf32>
    %210 = vector.broadcast %209 : vector<8x1xf32> to vector<8x32xf32>
    %211 = arith.cmpf ole, %207, %210 : vector<8x32xf32>
    %c32_i32_70 = arith.constant 32 : i32
    %212 = vector.broadcast %c32_i32_70 : i32 to vector<8x32xi32>
    %213 = arith.select %211, %16, %212 : vector<8x32xi1>, vector<8x32xi32>
    %cst_71 = arith.constant dense<2147483647> : vector<8xi32>
    %214 = vector.multi_reduction <minsi>, %213, %cst_71 [1] : vector<8x32xi32> to vector<8xi32>
    %215 = vector.shape_cast %214 : vector<8xi32> to vector<8x1xi32>
    %216 = vector.broadcast %215 : vector<8x1xi32> to vector<8x32xi32>
    %217 = arith.cmpi eq, %16, %216 : vector<8x32xi32>
    %218 = arith.extui %217 : vector<8x32xi1> to vector<8x32xi32>
    %219 = arith.sitofp %218 : vector<8x32xi32> to vector<8x32xf32>
    %cst_72 = arith.constant dense<0.000000e+00> : vector<8x32xf32>
    %220 = tpu.matmul %219, %7, %cst_72 {dimension_numbers = #tpu.dot_dimension_numbers<[1], [0], [0], [1], [0, 0, 1, 1], [], []>} : vector<8x32xf32>, vector<32x32xf32>, vector<8x32xf32> -> vector<8x32xf32>
    %221 = arith.maximumf %205, %220 : vector<8x32xf32>
    %cst_73 = arith.constant 3.400000e+38 : f32
    %222 = vector.broadcast %cst_73 : f32 to vector<8x32xf32>
    %223 = arith.select %217, %222, %207 : vector<8x32xi1>, vector<8x32xf32>
    %cst_74 = arith.constant dense<0x7F800000> : vector<8xf32>
    %224 = vector.multi_reduction <minimumf>, %223, %cst_74 [1] : vector<8x32xf32> to vector<8xf32>
    %225 = vector.shape_cast %224 : vector<8xf32> to vector<8x1xf32>
    %226 = vector.broadcast %225 : vector<8x1xf32> to vector<8x32xf32>
    %227 = arith.cmpf ole, %223, %226 : vector<8x32xf32>
    %c32_i32_75 = arith.constant 32 : i32
    %228 = vector.broadcast %c32_i32_75 : i32 to vector<8x32xi32>
    %229 = arith.select %227, %16, %228 : vector<8x32xi1>, vector<8x32xi32>
    %cst_76 = arith.constant dense<2147483647> : vector<8xi32>
    %230 = vector.multi_reduction <minsi>, %229, %cst_76 [1] : vector<8x32xi32> to vector<8xi32>
    %231 = vector.shape_cast %230 : vector<8xi32> to vector<8x1xi32>
    %232 = vector.broadcast %231 : vector<8x1xi32> to vector<8x32xi32>
    %233 = arith.cmpi eq, %16, %232 : vector<8x32xi32>
    %234 = arith.extui %233 : vector<8x32xi1> to vector<8x32xi32>
    %235 = arith.sitofp %234 : vector<8x32xi32> to vector<8x32xf32>
    %cst_77 = arith.constant dense<0.000000e+00> : vector<8x32xf32>
    %236 = tpu.matmul %235, %7, %cst_77 {dimension_numbers = #tpu.dot_dimension_numbers<[1], [0], [0], [1], [0, 0, 1, 1], [], []>} : vector<8x32xf32>, vector<32x32xf32>, vector<8x32xf32> -> vector<8x32xf32>
    %237 = arith.maximumf %221, %236 : vector<8x32xf32>
    %cst_78 = arith.constant 3.400000e+38 : f32
    %238 = vector.broadcast %cst_78 : f32 to vector<8x32xf32>
    %239 = arith.select %233, %238, %223 : vector<8x32xi1>, vector<8x32xf32>
    %cst_79 = arith.constant dense<0x7F800000> : vector<8xf32>
    %240 = vector.multi_reduction <minimumf>, %239, %cst_79 [1] : vector<8x32xf32> to vector<8xf32>
    %241 = vector.shape_cast %240 : vector<8xf32> to vector<8x1xf32>
    %242 = vector.broadcast %241 : vector<8x1xf32> to vector<8x32xf32>
    %243 = arith.cmpf ole, %239, %242 : vector<8x32xf32>
    %c32_i32_80 = arith.constant 32 : i32
    %244 = vector.broadcast %c32_i32_80 : i32 to vector<8x32xi32>
    %245 = arith.select %243, %16, %244 : vector<8x32xi1>, vector<8x32xi32>
    %cst_81 = arith.constant dense<2147483647> : vector<8xi32>
    %246 = vector.multi_reduction <minsi>, %245, %cst_81 [1] : vector<8x32xi32> to vector<8xi32>
    %247 = vector.shape_cast %246 : vector<8xi32> to vector<8x1xi32>
    %248 = vector.broadcast %247 : vector<8x1xi32> to vector<8x32xi32>
    %249 = arith.cmpi eq, %16, %248 : vector<8x32xi32>
    %250 = arith.extui %249 : vector<8x32xi1> to vector<8x32xi32>
    %251 = arith.sitofp %250 : vector<8x32xi32> to vector<8x32xf32>
    %cst_82 = arith.constant dense<0.000000e+00> : vector<8x32xf32>
    %252 = tpu.matmul %251, %7, %cst_82 {dimension_numbers = #tpu.dot_dimension_numbers<[1], [0], [0], [1], [0, 0, 1, 1], [], []>} : vector<8x32xf32>, vector<32x32xf32>, vector<8x32xf32> -> vector<8x32xf32>
    %253 = arith.maximumf %237, %252 : vector<8x32xf32>
    %cst_83 = arith.constant 3.400000e+38 : f32
    %254 = vector.broadcast %cst_83 : f32 to vector<8x32xf32>
    %255 = arith.select %249, %254, %239 : vector<8x32xi1>, vector<8x32xf32>
    %cst_84 = arith.constant dense<0x7F800000> : vector<8xf32>
    %256 = vector.multi_reduction <minimumf>, %255, %cst_84 [1] : vector<8x32xf32> to vector<8xf32>
    %257 = vector.shape_cast %256 : vector<8xf32> to vector<8x1xf32>
    %258 = vector.broadcast %257 : vector<8x1xf32> to vector<8x32xf32>
    %259 = arith.cmpf ole, %255, %258 : vector<8x32xf32>
    %c32_i32_85 = arith.constant 32 : i32
    %260 = vector.broadcast %c32_i32_85 : i32 to vector<8x32xi32>
    %261 = arith.select %259, %16, %260 : vector<8x32xi1>, vector<8x32xi32>
    %cst_86 = arith.constant dense<2147483647> : vector<8xi32>
    %262 = vector.multi_reduction <minsi>, %261, %cst_86 [1] : vector<8x32xi32> to vector<8xi32>
    %263 = vector.shape_cast %262 : vector<8xi32> to vector<8x1xi32>
    %264 = vector.broadcast %263 : vector<8x1xi32> to vector<8x32xi32>
    %265 = arith.cmpi eq, %16, %264 : vector<8x32xi32>
    %266 = arith.extui %265 : vector<8x32xi1> to vector<8x32xi32>
    %267 = arith.sitofp %266 : vector<8x32xi32> to vector<8x32xf32>
    %cst_87 = arith.constant dense<0.000000e+00> : vector<8x32xf32>
    %268 = tpu.matmul %267, %7, %cst_87 {dimension_numbers = #tpu.dot_dimension_numbers<[1], [0], [0], [1], [0, 0, 1, 1], [], []>} : vector<8x32xf32>, vector<32x32xf32>, vector<8x32xf32> -> vector<8x32xf32>
    %269 = arith.maximumf %253, %268 : vector<8x32xf32>
    %270 = vector.shape_cast %269 : vector<8x32xf32> to vector<1x8x32xf32>
    %c0_88 = arith.constant 0 : index
    %c0_89 = arith.constant 0 : index
    %c0_90 = arith.constant 0 : index
    %271 = vector.load %arg7[%c0_88, %c0_89, %c0_90] : memref<1x8x32xf32, #tpu.memory_space<vmem>>, vector<1x8x32xf32>
    tpu.vector_store %arg7[%c0_88, %c0_89, %c0_90], %270 {strides = array<i32>} : memref<1x8x32xf32, #tpu.memory_space<vmem>>, vector<1x8x32xf32>,
    return
  }
  func.func @transform_0(%arg0: i32, %arg1: i32) -> (i32, i32, i32) {
    %c0_i32 = arith.constant 0 : i32
    %c0_i32_0 = arith.constant 0 : i32
    %c0_i32_1 = arith.constant 0 : i32
    return %arg0, %c0_i32, %c0_i32_0 : i32, i32, i32
  }
  func.func @transform_1(%arg0: i32, %arg1: i32) -> (i32, i32) {
    %c0_i32 = arith.constant 0 : i32
    %c0_i32_0 = arith.constant 0 : i32
    %c0_i32_1 = arith.constant 0 : i32
    return %c0_i32, %c0_i32_0 : i32, i32
  }
  func.func @transform_2(%arg0: i32, %arg1: i32) -> (i32, i32) {
    %c0_i32 = arith.constant 0 : i32
    %c0_i32_0 = arith.constant 0 : i32
    %c0_i32_1 = arith.constant 0 : i32
    return %c0_i32, %c0_i32_0 : i32, i32
  }
  func.func @transform_3(%arg0: i32, %arg1: i32) -> (i32, i32, i32) {
    %c0_i32 = arith.constant 0 : i32
    %c0_i32_0 = arith.constant 0 : i32
    %c0_i32_1 = arith.constant 0 : i32
    return %arg0, %c0_i32, %c0_i32_0 : i32, i32, i32
  }
  func.func @transform_4(%arg0: i32, %arg1: i32) -> (i32, i32, i32) {
    %c0_i32 = arith.constant 0 : i32
    %c0_i32_0 = arith.constant 0 : i32
    return %arg0, %arg1, %c0_i32 : i32, i32, i32
  }
  func.func @transform_5(%arg0: i32, %arg1: i32) -> (i32, i32, i32) {
    %c0_i32 = arith.constant 0 : i32
    %c0_i32_0 = arith.constant 0 : i32
    return %arg0, %arg1, %c0_i32 : i32, i32, i32
  }
}

</mosaic_0001>

<llo_original>
// kernel: transition_down.4
$region0: #{transition_down.4}
  #allocation0 [shape = 'u32[]', space=smem, size = 0x4, offset = 0x4, fixed_abs, tag = 'smem constant byte address 0x4 - core index']
  #allocation1 [shape = 'u32[144,128]{1,0:T(1,128)}', space=vmem, size = 0x12000, scoped, tag = 'internal scratch']
  #allocation2 [shape = 's32[8,1]{1,0:T(8,128)}', space=vmem, size = 0x1000, scoped, tag = 'scratch operand']
  %s0 = inlined_call_operand.vmem [shape: f32[2,8,32], index: 0, kind: input, shape index: {}]
  %s1 = inlined_call_operand.vmem [shape: f32[2,32,8], index: 1, kind: input, shape index: {}]
  %s2 = inlined_call_operand.vmem [shape: f32[2,8,8], index: 2, kind: output, shape index: {}]
  %s3 = sld [smem:[#allocation0]]
  $region48: #{transition_down.4} parent=0
    _
  %s5 = ssub.s32 1, %s3
  %s6 = scalar_select 0, %s5, %s3
  loop: start=0, step=1, limit=4
  $region2: #{transition_down.4} parent=0 // loop_pre_header
    _
  $region3: #{transition_down.4} parent=0 // loop_header
    %s8 = sphi 0, %s12
    %p9 = scmp.ge.s32.totalorder %s8, 4
    %s18 = sphi 0, %s20
    %s21 = sphi 0, %s18
    %s22 = sphi 0, %s21
    %s38 = sphi 0, %s22
    %s44 = sphi 0, %s46
    %s47 = sphi 0, %s44
    %s48 = sphi 0, %s47
    %s64 = sphi 0, %s48
    %s70 = sphi 0, %s72
    %s73 = sphi 0, %s70
    %s74 = sphi 0, %s73
    %s90 = sphi 0, %s74
  $region4: #{transition_down.4} parent=0 // loop_header_branch
    %11 = sbr.rel (%p9) target = $region8
  $region5: #{transition_down.4} parent=0 // loop_body
    %s13 = ssub.s32 %s8, 1
    %s14 = ssub.s32 %s8, 2
    %s15 = sadd.s32 %s8, 1
    %s16 = ssub.s32 %s8, %s15
    %p17 = scmp.eq.s32.totalorder %s16, 0
    %s19 = sadd.s32 %s18, 1
    %s20 = scalar_select %p17, %s18, %s19
    %p23 = pneg %p17
    %p24 = scmp.eq.s32.totalorder %s8, 1
    %p25 = por %p23, %p24
    %p26 = scmp.ne.s32.totalorder %s18, %s21
    %p27 = scmp.eq.s32.totalorder %s8, 0
    %p28 = por %p26, %p27
    %p29 = scmp.ne.s32.totalorder %s18, %s21
    %p30 = scmp.eq.s32.totalorder %s13, 1
    %p31 = por %p29, %p30
    %p32 = scmp.ne.s32.totalorder %s21, %s22
    %p33 = scmp.eq.s32.totalorder %s13, 0
    %p34 = por %p32, %p33
    %p35 = scmp.ne.s32.totalorder %s21, %s22
    %p36 = scmp.eq.s32.totalorder %s14, 1
    %p37 = por %p35, %p36
    %p39 = scmp.ne.s32.totalorder %s22, %s38
    %p40 = scmp.eq.s32.totalorder %s14, 0
    %p41 = por %p39, %p40
    %s42 = ssub.s32 %s8, %s15
    %p43 = scmp.eq.s32.totalorder %s42, 0
    %s45 = sadd.s32 %s44, 1
    %s46 = scalar_select %p43, %s44, %s45
    %p49 = pneg %p43
    %p50 = scmp.eq.s32.totalorder %s8, 1
    %p51 = por %p49, %p50
    %p52 = scmp.ne.s32.totalorder %s44, %s47
    %p53 = scmp.eq.s32.totalorder %s8, 0
    %p54 = por %p52, %p53
    %p55 = scmp.ne.s32.totalorder %s44, %s47
    %p56 = scmp.eq.s32.totalorder %s13, 1
    %p57 = por %p55, %p56
    %p58 = scmp.ne.s32.totalorder %s47, %s48
    %p59 = scmp.eq.s32.totalorder %s13, 0
    %p60 = por %p58, %p59
    %p61 = scmp.ne.s32.totalorder %s47, %s48
    %p62 = scmp.eq.s32.totalorder %s14, 1
    %p63 = por %p61, %p62
    %p65 = scmp.ne.s32.totalorder %s48, %s64
    %p66 = scmp.eq.s32.totalorder %s14, 0
    %p67 = por %p65, %p66
    %s68 = ssub.s32 %s8, %s15
    %p69 = scmp.eq.s32.totalorder %s68, 0
    %s71 = sadd.s32 %s70, 1
    %s72 = scalar_select %p69, %s70, %s71
    %p75 = pneg %p69
    %p76 = scmp.eq.s32.totalorder %s8, 1
    %p77 = por %p75, %p76
    %p78 = scmp.ne.s32.totalorder %s70, %s73
    %p79 = scmp.eq.s32.totalorder %s8, 0
    %p80 = por %p78, %p79
    %p81 = scmp.ne.s32.totalorder %s70, %s73
    %p82 = scmp.eq.s32.totalorder %s13, 1
    %p83 = por %p81, %p82
    %p84 = scmp.ne.s32.totalorder %s73, %s74
    %p85 = scmp.eq.s32.totalorder %s13, 0
    %p86 = por %p84, %p85
    %p87 = scmp.ne.s32.totalorder %s73, %s74
    %p88 = scmp.eq.s32.totalorder %s14, 1
    %p89 = por %p87, %p88
    %p91 = scmp.ne.s32.totalorder %s74, %s90
    %p92 = scmp.eq.s32.totalorder %s14, 0
    %p93 = por %p91, %p92
    %p94 = scmp.le.s32.totalorder 1, %s8
    %p95 = scmp.lt.s32.totalorder %s8, 3
    %p96 = pnand %p94, %p95
    %p97 = pneg %p96
    // Predicated region
    $region9: #{transition_down.4} parent=5 // pred_check
      _
    $region10: #{transition_down.4} parent=5 // pred_check_branch
      %99 = sbr.rel (%p96) target = $region12
    $region11: #{transition_down.4} parent=5 // pred_region
      %s100 = ssub.s32 %s8, 1
    $region12: #{transition_down.4} parent=5 // pred_fallthru
      _
    %p101 = scmp.lt.s32.totalorder %s8, 2
    // Predicated region
    $region13: #{transition_down.4} parent=5 // pred_check
      %p102 = pneg %p101
    $region14: #{transition_down.4} parent=5 // pred_check_branch
      %104 = sbr.rel (%p102) target = $region16
    $region15: #{transition_down.4} parent=5 // pred_region
      // Predicated region
      $region17: #{transition_down.4} parent=15 // pred_check
        %p105 = pneg %p28
      $region18: #{transition_down.4} parent=15 // pred_check_branch
        %107 = sbr.rel (%p105) target = $region20
      $region19: #{transition_down.4} parent=15 // pred_region
        %p108 = scmp.lt.s32.totalorder %s8, 1
        %s109 = scalar_select %p108, %s8, 1
        %s110 = smul.addr %s109, 8
        %s111 = scalar_lea.vmem %s0, %s110
      $region20: #{transition_down.4} parent=15 // pred_fallthru
        _
      // Predicated region
      $region21: #{transition_down.4} parent=15 // pred_check
        %p112 = pneg %p54
      $region22: #{transition_down.4} parent=15 // pred_check_branch
        %114 = sbr.rel (%p112) target = $region24
      $region23: #{transition_down.4} parent=15 // pred_region
        %p115 = scmp.lt.s32.totalorder %s8, 1
        %s116 = scalar_select %p115, %s8, 1
        %s117 = smul.addr %s116, 4
        %s118 = smul.addr %s117, 8
        %s119 = scalar_lea.vmem %s1, %s118
      $region24: #{transition_down.4} parent=15 // pred_fallthru
        _
    $region16: #{transition_down.4} parent=5 // pred_fallthru
      _
    %p120 = scmp.le.s32.totalorder 1, %s8
    %p121 = scmp.lt.s32.totalorder %s8, 3
    %p122 = pnand %p120, %p121
    %p123 = pneg %p122
    // Predicated region
    $region25: #{transition_down.4} parent=5 // pred_check
      _
    $region26: #{transition_down.4} parent=5 // pred_check_branch
      %125 = sbr.rel (%p122) target = $region28
    $region27: #{transition_down.4} parent=5 // pred_region
      %s126 = ssub.s32 %s8, 1
      %p127 = scmp.lt.s32.totalorder %s13, 1
      %s128 = scalar_select %p127, %s13, 1
      %s129 = smul.addr %s128, 8
      %s130 = scalar_lea.vmem %s0, %s129
      %p131 = pneg %p34
      %p132 = pneg %p31
      %p133 = scmp.lt.s32.totalorder %s13, 1
      %s134 = scalar_select %p133, %s13, 1
      %s135 = smul.addr %s134, 4
      %s136 = smul.addr %s135, 8
      %s137 = scalar_lea.vmem %s1, %s136
      %p138 = pneg %p60
      %p139 = pneg %p57
      %p140 = pneg %p86
      %p141 = pneg %p83
      %p142 = scmp.lt.s32.totalorder %s13, 1
      %s143 = scalar_select %p142, %s13, 1
      %s144 = smul.addr %s143, 8
      %s145 = scalar_lea.vmem %s2, %s144
      %p146 = scmp.lt.s32.totalorder %s13, 1
      %s147 = scalar_select %p146, %s13, 1
      %s148 = smul.addr %s147, 8
      %s149 = scalar_lea.vmem %s0, %s148
      %p150 = scmp.lt.s32.totalorder %s13, 1
      %s151 = scalar_select %p150, %s13, 1
      %s152 = smul.addr %s151, 4
      %s153 = smul.addr %s152, 8
      %s154 = scalar_lea.vmem %s1, %s153
      %p155 = scmp.lt.s32.totalorder %s13, 1
      %s156 = scalar_select %p155, %s13, 1
      %s157 = smul.addr %s156, 8
      %s158 = scalar_lea.vmem %s2, %s157
      %v159 = vld [vmem:[%s149] sm:$0xff]
      %v160 = vlaneseq
      %v161 = vand.u32 %v160, 127
      %vm162 = vcmask 0
      %163 = vst.msk [vmem:[#allocation2] sm:$0x1] %vm162, 0
      loop: start=1, step=1, limit=8
      $region29: #{transition_down.4} parent=27 // loop_pre_header
        _
      $region30: #{transition_down.4} parent=27 // loop_header
        %s165 = sphi 1, %s169
        %p166 = scmp.ge.s32.totalorder %s165, 8
        %v170 = vphi inf, %v187
        %v171 = vphi %v159, %v218
      $region31: #{transition_down.4} parent=27 // loop_header_branch
        %168 = sbr.rel (%p166) target = $region35
      $region32: #{transition_down.4} parent=27 // loop_body
        %173 = vset.pattern.permute.xlu0 0
        %174 = vperm.xlu0 %173, %v171
        %v175 = vpop.permute.xlu0 %174
        %v177 = vsub.f32 %v159, %v175
        %v178 = vmul.f32 %v177, %v177
        %vm179 = vcmask 261120
        %v180 = vsel %vm179, %v178, 0.0
        %v181 = vrot.slane %v180, 4
        %v182 = vadd.f32 %v180, %v181
        %v183 = vrot.slane %v182, 2
        %v184 = vadd.f32 %v182, %v183
        %v185 = vrot.slane %v184, 1
        %v186 = vadd.f32 %v184, %v185
        %v187 = vmin.f32 %v170, %v186
        %v188 = vsel %vm179, %v187, -inf
        %189 = vmax.xlane.f32.xlu0 %v188
        %v190 = vpop.xlane.xlu0 %189
        %s191 = vtos %v190
        %v192 = vstv %s191
        %vm193 = vcmp.eq.f32.partialorder %v187, %v192
        %v194 = vsel %vm193, %v161, 32
        %v195 = vsel %vm179, %v194, 2147483647
        %v196 = vand.u32 %v195, 65535
        %v197 = vshra.s32 %v195, 16
        %v198 = vcvt.s32.f32 %v196
        %v199 = vcvt.s32.f32 %v197
        %200 = vmin.xlane.f32.xlu0 %v199
        %v201 = vpop.xlane.xlu0 %200
        %vm202 = vcmp.eq.f32.partialorder %v199, %v201
        %v203 = vsel %vm202, %v198, inf
        %204 = vmin.xlane.f32.xlu0 %v203
        %v205 = vpop.xlane.xlu0 %204
        %v206 = vcvt.f32.s32 %v205
        %v207 = vcvt.f32.s32 %v201
        %v208 = vshll.u32 %v207, 16
        %v209 = vadd.s32 %v208, %v206
        %s210 = vtos %v209
        %v211 = vstv %s210
        %vm212 = vcmp.eq.s32.totalorder %v161, %v211
        %v213 = vsel %vm212, 1, 0
        %v214 = vcvt.s32.f32 %v213
        %v215 = vmul.f32 %v159, %v214
        %v216 = vsel %vm179, %v215, 0.0
        %217 = vadd.xlane.f32.xlu0 %v216
        %v218 = vpop.xlane.xlu0 %217
        %s219 = scalar_lea.vmem [#allocation2], %s165
        %220 = vst.msk [vmem:[%s219] sm:$0x1] %vm162, %v211
      $region33: #{transition_down.4} parent=27 // loop_footer
        %s169 = sadd.s32 1, %s165
      $region34: #{transition_down.4} parent=27 // loop_footer_branch
        %164 = sbr.rel target = $region30
      $region35: #{transition_down.4} parent=27 // loop_exit
        _
      %v221 = vld [vmem:[%s154] sm:$0xff]
      %v222 = vld [vmem:[%s154 + $0x8] sm:$0xff]
      %v223 = vld [vmem:[%s154 + $0x10] sm:$0xff]
      %v224 = vld [vmem:[%s154 + $0x18] sm:$0xff]
      %v225 = vld [vmem:[#allocation2] sm:$0xff]
      %226 = vset.pattern.permute.xlu0 0
      %227 = vperm.xlu0 %226, %v225
      %v228 = vpop.permute.xlu0 %227
      %vm229 = vcmp.eq.s32.totalorder %v161, %v228
      %v230 = vsel %vm229, 1, 0
      %v231 = vcvt.s32.f32 %v230
      %vm232 = vcmask 261120
      %v234 = vsel %vm232, %v231, 0
      %236 = vmatprep.subr.mxu0 0.0
      %237 = vmatpush1.msra.mxu0 0.0
      %238 = vmatprep.subr.mxu0 0.0
      %239 = vmatpush1.msra.mxu0 0.0
      %240 = vmatprep.subr.mxu0 0.0
      %241 = vmatpush1.msra.mxu0 0.0
      %242 = vmatprep.subr.mxu0 0.0
      %243 = vmatpush1.msra.mxu0 0.0
      %244 = vmatprep.subr.mxu0 0.0
      %245 = vmatpush1.msra.mxu0 0.0
      %246 = vmatprep.subr.mxu0 0.0
      %247 = vmatpush1.msra.mxu0 0.0
      %248 = vmatprep.subr.mxu0 0.0
      %249 = vmatpush1.msra.mxu0 0.0
      %250 = vmatprep.subr.mxu0 0.0
      %251 = vmatpush1.msra.mxu0 0.0
      %252 = vmatprep.subr.mxu0 0.0
      %253 = vmatpush1.msra.mxu0 0.0
      %254 = vmatprep.subr.mxu0 0.0
      %255 = vmatpush1.msra.mxu0 0.0
      %256 = vmatprep.subr.mxu0 0.0
      %257 = vmatpush1.msra.mxu0 0.0
      %258 = vmatprep.subr.mxu0 0.0
      %259 = vmatpush1.msra.mxu0 0.0
      %260 = vmatprep.subr.mxu0 0.0
      %261 = vmatpush1.msra.mxu0 %v224
      %262 = vmatprep.subr.mxu0 0.0
      %263 = vmatpush1.msra.mxu0 %v223
      %264 = vmatprep.subr.mxu0 0.0
      %265 = vmatpush1.msra.mxu0 %v222
      %266 = vmatprep.subr.mxu0 0.0
      %267 = vmatpush1.msra.mxu0 %v221
      %268 = vmatprep.subr.mxu0 0.0
      %269 = vmatpush2.msra.mxu0 0.0
      %270 = vmatprep.subr.mxu0 0.0
      %271 = vmatpush2.msra.mxu0 0.0
      %272 = vmatprep.subr.mxu0 0.0
      %273 = vmatpush2.msra.mxu0 0.0
      %274 = vmatprep.subr.mxu0 0.0
      %275 = vmatpush2.msra.mxu0 0.0
      %276 = vmatprep.subr.mxu0 0.0
      %277 = vmatpush2.msra.mxu0 0.0
      %278 = vmatprep.subr.mxu0 0.0
      %279 = vmatpush2.msra.mxu0 0.0
      %280 = vmatprep.subr.mxu0 0.0
      %281 = vmatpush2.msra.mxu0 0.0
      %282 = vmatprep.subr.mxu0 0.0
      %283 = vmatpush2.msra.mxu0 0.0
      %284 = vmatprep.subr.mxu0 0.0
      %285 = vmatpush2.msra.mxu0 0.0
      %286 = vmatprep.subr.mxu0 0.0
      %287 = vmatpush2.msra.mxu0 0.0
      %288 = vmatprep.subr.mxu0 0.0
      %289 = vmatpush2.msra.mxu0 0.0
      %290 = vmatprep.subr.mxu0 0.0
      %291 = vmatpush2.msra.mxu0 0.0
      %292 = vmatprep.subr.mxu0 0.0
      %293 = vmatpush2.msra.mxu0 0.0
      %294 = vmatprep.subr.mxu0 0.0
      %295 = vmatpush2.msra.mxu0 0.0
      %296 = vmatprep.subr.mxu0 0.0
      %297 = vmatpush2.msra.mxu0 0.0
      %298 = vmatprep.subr.mxu0 0.0
      %299 = vmatpush2.msra.mxu0 0.0
      %300 = vmatprep.mubr.f32.mxu0 0.0
      %301 = vmatmul.mubr.f32.gmra.mxu0 %v234
      %v302 = vpop.f32.mrf.mxu0
      %v303 = vadd.f32 0.0, %v302
      %v304 = vpop.f32.mrf.mxu0
      %305 = vdwg.mxu0
      %vm306 = vcmask 64512
      %307 = vst.msk [vmem:[%s158] sm:$0xff] %vm306, %v303
      %p308 = scmp.lt.s32.totalorder %s13, 1
      %s309 = scalar_select %p308, %s13, 1
      %s310 = smul.addr %s309, 8
      %s311 = scalar_lea.vmem %s2, %s310
      // Predicated region
      $region36: #{transition_down.4} parent=27 // pred_check
        %p312 = pneg %p83
      $region37: #{transition_down.4} parent=27 // pred_check_branch
        %314 = sbr.rel (%p312) target = $region39
      $region38: #{transition_down.4} parent=27 // pred_region
        _
      $region39: #{transition_down.4} parent=27 // pred_fallthru
        _
    $region28: #{transition_down.4} parent=5 // pred_fallthru
      _
    %p315 = scmp.le.s32.totalorder 2, %s8
    // Predicated region
    $region40: #{transition_down.4} parent=5 // pred_check
      %p316 = pneg %p315
    $region41: #{transition_down.4} parent=5 // pred_check_branch
      %318 = sbr.rel (%p316) target = $region43
    $region42: #{transition_down.4} parent=5 // pred_region
      %s319 = ssub.s32 %s8, 2
      // Predicated region
      $region44: #{transition_down.4} parent=42 // pred_check
        %p320 = pneg %p89
      $region45: #{transition_down.4} parent=42 // pred_check_branch
        %322 = sbr.rel (%p320) target = $region47
      $region46: #{transition_down.4} parent=42 // pred_region
        %p323 = scmp.lt.s32.totalorder %s14, 1
        %s324 = scalar_select %p323, %s14, 1
        %s325 = smul.addr %s324, 8
        %s326 = scalar_lea.vmem %s2, %s325
      $region47: #{transition_down.4} parent=42 // pred_fallthru
        _
    $region43: #{transition_down.4} parent=5 // pred_fallthru
      _
  $region6: #{transition_down.4} parent=0 // loop_footer
    %s12 = sadd.s32 1, %s8
  $region7: #{transition_down.4} parent=0 // loop_footer_branch
    %7 = sbr.rel target = $region3
  $region8: #{transition_down.4} parent=0 // loop_exit
    _

// kernel: transition_down.3
$region0: #{transition_down.3}
  #allocation0 [shape = 'u32[]', space=smem, size = 0x4, offset = 0x4, fixed_abs, tag = 'smem constant byte address 0x4 - core index']
  #allocation1 [shape = 'u32[144,128]{1,0:T(1,128)}', space=vmem, size = 0x12000, scoped, tag = 'internal scratch']
  %s0 = inlined_call_operand.vmem [shape: f32[64,16], index: 0, kind: input, shape index: {}]
  %s1 = inlined_call_operand.vmem [shape: f32[16,32], index: 1, kind: input, shape index: {}]
  %s2 = inlined_call_operand.vmem [shape: f32[1,32], index: 2, kind: input, shape index: {}]
  %s3 = inlined_call_operand.vmem [shape: f32[1,32], index: 3, kind: output, shape index: {0}]
  %s4 = inlined_call_operand.vmem [shape: f32[1,32], index: 4, kind: output, shape index: {1}]
  %5 = xla_tuple %s3, %s4
  %s6 = sld [smem:[#allocation0]]
  $region34: #{transition_down.3} parent=0
    _
  %s8 = ssub.s32 1, %s6
  %s9 = scalar_select 0, %s8, %s6
  // Predicated region
  $region2: #{transition_down.3} parent=0 // pred_check
    _
  $region3: #{transition_down.3} parent=0 // pred_check_branch
    %11 = sbr.rel (0) target = $region5
  $region4: #{transition_down.3} parent=0 // pred_region
    _
  $region5: #{transition_down.3} parent=0 // pred_fallthru
    _
  // Predicated region
  $region6: #{transition_down.3} parent=0 // pred_check
    _
  $region7: #{transition_down.3} parent=0 // pred_check_branch
    %13 = sbr.rel (0) target = $region9
  $region8: #{transition_down.3} parent=0 // pred_region
    _
  $region9: #{transition_down.3} parent=0 // pred_fallthru
    _
  // Predicated region
  $region10: #{transition_down.3} parent=0 // pred_check
    _
  $region11: #{transition_down.3} parent=0 // pred_check_branch
    %15 = sbr.rel (0) target = $region13
  $region12: #{transition_down.3} parent=0 // pred_region
    _
  $region13: #{transition_down.3} parent=0 // pred_fallthru
    _
  %v16 = vld [vmem:[%s0] sm:$0xff]
  %v17 = vld [vmem:[%s0 + $0x8] sm:$0xff]
  %v18 = vld [vmem:[%s0 + $0x10] sm:$0xff]
  %v19 = vld [vmem:[%s0 + $0x18] sm:$0xff]
  %v20 = vld [vmem:[%s0 + $0x20] sm:$0xff]
  %v21 = vld [vmem:[%s0 + $0x28] sm:$0xff]
  %v22 = vld [vmem:[%s0 + $0x30] sm:$0xff]
  %v23 = vld [vmem:[%s0 + $0x38] sm:$0xff]
  %v24 = vld [vmem:[%s1] sm:$0xff]
  %v25 = vld [vmem:[%s1 + $0x8] sm:$0xff]
  %v26 = vld [vmem:[%s2] sm:$0x1]
  %v28 = vlaneseq
  %v29 = vshrl.u32 %v28, 7
  %v30 = vsub.s32 0, %v29
  %v31 = vrot.slane %v26, %v30
  %vm33 = vcmask 130048
  %v35 = vsel %vm33, %v16, 0
  %v38 = vsel %vm33, %v17, 0
  %v41 = vsel %vm33, %v18, 0
  %v44 = vsel %vm33, %v19, 0
  %v47 = vsel %vm33, %v20, 0
  %v50 = vsel %vm33, %v21, 0
  %v53 = vsel %vm33, %v22, 0
  %v56 = vsel %vm33, %v23, 0
  %58 = vmatprep.subr.mxu0 0.0
  %59 = vmatpush1.msra.mxu0 0.0
  %60 = vmatprep.subr.mxu0 0.0
  %61 = vmatpush1.msra.mxu0 0.0
  %62 = vmatprep.subr.mxu0 0.0
  %63 = vmatpush1.msra.mxu0 0.0
  %64 = vmatprep.subr.mxu0 0.0
  %65 = vmatpush1.msra.mxu0 0.0
  %66 = vmatprep.subr.mxu0 0.0
  %67 = vmatpush1.msra.mxu0 0.0
  %68 = vmatprep.subr.mxu0 0.0
  %69 = vmatpush1.msra.mxu0 0.0
  %70 = vmatprep.subr.mxu0 0.0
  %71 = vmatpush1.msra.mxu0 0.0
  %72 = vmatprep.subr.mxu0 0.0
  %73 = vmatpush1.msra.mxu0 0.0
  %74 = vmatprep.subr.mxu0 0.0
  %75 = vmatpush1.msra.mxu0 0.0
  %76 = vmatprep.subr.mxu0 0.0
  %77 = vmatpush1.msra.mxu0 0.0
  %78 = vmatprep.subr.mxu0 0.0
  %79 = vmatpush1.msra.mxu0 0.0
  %80 = vmatprep.subr.mxu0 0.0
  %81 = vmatpush1.msra.mxu0 0.0
  %82 = vmatprep.subr.mxu0 0.0
  %83 = vmatpush1.msra.mxu0 0.0
  %84 = vmatprep.subr.mxu0 0.0
  %85 = vmatpush1.msra.mxu0 0.0
  %86 = vmatprep.subr.mxu0 0.0
  %87 = vmatpush1.msra.mxu0 %v25
  %88 = vmatprep.subr.mxu0 0.0
  %89 = vmatpush1.msra.mxu0 %v24
  %90 = vmatprep.subr.mxu0 0.0
  %91 = vmatpush2.msra.mxu0 0.0
  %92 = vmatprep.subr.mxu0 0.0
  %93 = vmatpush2.msra.mxu0 0.0
  %94 = vmatprep.subr.mxu0 0.0
  %95 = vmatpush2.msra.mxu0 0.0
  %96 = vmatprep.subr.mxu0 0.0
  %97 = vmatpush2.msra.mxu0 0.0
  %98 = vmatprep.subr.mxu0 0.0
  %99 = vmatpush2.msra.mxu0 0.0
  %100 = vmatprep.subr.mxu0 0.0
  %101 = vmatpush2.msra.mxu0 0.0
  %102 = vmatprep.subr.mxu0 0.0
  %103 = vmatpush2.msra.mxu0 0.0
  %104 = vmatprep.subr.mxu0 0.0
  %105 = vmatpush2.msra.mxu0 0.0
  %106 = vmatprep.subr.mxu0 0.0
  %107 = vmatpush2.msra.mxu0 0.0
  %108 = vmatprep.subr.mxu0 0.0
  %109 = vmatpush2.msra.mxu0 0.0
  %110 = vmatprep.subr.mxu0 0.0
  %111 = vmatpush2.msra.mxu0 0.0
  %112 = vmatprep.subr.mxu0 0.0
  %113 = vmatpush2.msra.mxu0 0.0
  %114 = vmatprep.subr.mxu0 0.0
  %115 = vmatpush2.msra.mxu0 0.0
  %116 = vmatprep.subr.mxu0 0.0
  %117 = vmatpush2.msra.mxu0 0.0
  %118 = vmatprep.subr.mxu0 0.0
  %119 = vmatpush2.msra.mxu0 0.0
  %120 = vmatprep.subr.mxu0 0.0
  %121 = vmatpush2.msra.mxu0 0.0
  %122 = vmatprep.mubr.f32.mxu0 0.0
  %123 = vmatmul.mubr.f32.gmra.mxu0 %v35
  %v124 = vpop.f32.mrf.mxu0
  %v125 = vadd.f32 %v31, %v124
  %v126 = vpop.f32.mrf.mxu0
  %127 = vmatprep.mubr.f32.mxu0 0.0
  %128 = vmatmul.mubr.f32.gmra.mxu0 %v38
  %v129 = vpop.f32.mrf.mxu0
  %v130 = vadd.f32 %v31, %v129
  %v131 = vpop.f32.mrf.mxu0
  %132 = vmatprep.mubr.f32.mxu0 0.0
  %133 = vmatmul.mubr.f32.gmra.mxu0 %v41
  %v134 = vpop.f32.mrf.mxu0
  %v135 = vadd.f32 %v31, %v134
  %v136 = vpop.f32.mrf.mxu0
  %137 = vmatprep.mubr.f32.mxu0 0.0
  %138 = vmatmul.mubr.f32.gmra.mxu0 %v44
  %v139 = vpop.f32.mrf.mxu0
  %v140 = vadd.f32 %v31, %v139
  %v141 = vpop.f32.mrf.mxu0
  %142 = vmatprep.mubr.f32.mxu0 0.0
  %143 = vmatmul.mubr.f32.gmra.mxu0 %v47
  %v144 = vpop.f32.mrf.mxu0
  %v145 = vadd.f32 %v31, %v144
  %v146 = vpop.f32.mrf.mxu0
  %147 = vmatprep.mubr.f32.mxu0 0.0
  %148 = vmatmul.mubr.f32.gmra.mxu0 %v50
  %v149 = vpop.f32.mrf.mxu0
  %v150 = vadd.f32 %v31, %v149
  %v151 = vpop.f32.mrf.mxu0
  %152 = vmatprep.mubr.f32.mxu0 0.0
  %153 = vmatmul.mubr.f32.gmra.mxu0 %v53
  %v154 = vpop.f32.mrf.mxu0
  %v155 = vadd.f32 %v31, %v154
  %v156 = vpop.f32.mrf.mxu0
  %157 = vmatprep.mubr.f32.mxu0 0.0
  %158 = vmatmul.mubr.f32.gmra.mxu0 %v56
  %v159 = vpop.f32.mrf.mxu0
  %v160 = vadd.f32 %v31, %v159
  %v161 = vpop.f32.mrf.mxu0
  %162 = vdwg.mxu0
  %s163 = smul.u32 0, 64
  %v164 = vlaneseq
  %v165 = vshrl.u32 %v164, 7
  %v166 = vadd.s32 %v165, 8
  %v167 = vadd.s32 %v165, 16
  %v168 = vadd.s32 %v165, 24
  %v169 = vadd.s32 %v165, 32
  %v170 = vadd.s32 %v165, 40
  %v171 = vadd.s32 %v165, 48
  %v172 = vadd.s32 %v165, 56
  %v173 = vstv %s163
  %v174 = vadd.s32 %v173, %v165
  %v175 = vadd.s32 %v173, %v166
  %v176 = vadd.s32 %v173, %v167
  %v177 = vadd.s32 %v173, %v168
  %v178 = vadd.s32 %v173, %v169
  %v179 = vadd.s32 %v173, %v170
  %v180 = vadd.s32 %v173, %v171
  %v181 = vadd.s32 %v173, %v172
  %vm182 = vcmp.lt.s32.totalorder %v174, 64
  %vm183 = vcmp.lt.s32.totalorder %v175, 64
  %vm184 = vcmp.lt.s32.totalorder %v176, 64
  %vm185 = vcmp.lt.s32.totalorder %v177, 64
  %vm186 = vcmp.lt.s32.totalorder %v178, 64
  %vm187 = vcmp.lt.s32.totalorder %v179, 64
  %vm188 = vcmp.lt.s32.totalorder %v180, 64
  %vm189 = vcmp.lt.s32.totalorder %v181, 64
  %v190 = vsel %vm182, %v125, 0.0
  %v191 = vsel %vm183, %v130, 0.0
  %v192 = vsel %vm184, %v135, 0.0
  %v193 = vsel %vm185, %v140, 0.0
  %v194 = vsel %vm186, %v145, 0.0
  %v195 = vsel %vm187, %v150, 0.0
  %v196 = vsel %vm188, %v155, 0.0
  %v197 = vsel %vm189, %v160, 0.0
  %p198 = scmp.eq.s32.totalorder 0, 0
  // Predicated region
  $region14: #{transition_down.3} parent=0 // pred_check
    %p199 = pneg %p198
  $region15: #{transition_down.3} parent=0 // pred_check_branch
    %201 = sbr.rel (%p199) target = $region17
  $region16: #{transition_down.3} parent=0 // pred_region
    %vm202 = vcmask 253952
    %203 = vst.msk [vmem:[%s3] sm:$0x1] %vm202, 0.0
    %204 = vst.msk [vmem:[%s4] sm:$0x1] %vm202, 0.0
  $region17: #{transition_down.3} parent=0 // pred_fallthru
    _
  %v205 = vld [vmem:[%s3] sm:$0x1]
  %vm206 = vcmask 261120
  %v207 = vsel %vm206, %v190, 0.0
  %v208 = vsel %vm206, %v191, 0.0
  %v209 = vadd.f32 %v207, %v208
  %v210 = vsel %vm206, %v192, 0.0
  %v211 = vadd.f32 %v209, %v210
  %v212 = vsel %vm206, %v193, 0.0
  %v213 = vadd.f32 %v211, %v212
  %v214 = vsel %vm206, %v194, 0.0
  %v215 = vadd.f32 %v213, %v214
  %v216 = vsel %vm206, %v195, 0.0
  %v217 = vadd.f32 %v215, %v216
  %v218 = vsel %vm206, %v196, 0.0
  %v219 = vadd.f32 %v217, %v218
  %v220 = vsel %vm206, %v197, 0.0
  %v221 = vadd.f32 %v219, %v220
  %v222 = vrot.slane %v221, 4
  %v223 = vadd.f32 %v221, %v222
  %v224 = vrot.slane %v223, 2
  %v225 = vadd.f32 %v223, %v224
  %v226 = vrot.slane %v225, 1
  %v227 = vadd.f32 %v225, %v226
  %v228 = vadd.f32 %v205, %v227
  %vm229 = vcmask 253952
  %230 = vst.msk [vmem:[%s3] sm:$0x1] %vm229, %v228
  %v231 = vld [vmem:[%s4] sm:$0x1]
  %v232 = vmul.f32 %v190, %v190
  %v233 = vmul.f32 %v191, %v191
  %v234 = vmul.f32 %v192, %v192
  %v235 = vmul.f32 %v193, %v193
  %v236 = vmul.f32 %v194, %v194
  %v237 = vmul.f32 %v195, %v195
  %v238 = vmul.f32 %v196, %v196
  %v239 = vmul.f32 %v197, %v197
  %v240 = vsel %vm206, %v232, 0.0
  %v241 = vsel %vm206, %v233, 0.0
  %v242 = vadd.f32 %v240, %v241
  %v243 = vsel %vm206, %v234, 0.0
  %v244 = vadd.f32 %v242, %v243
  %v245 = vsel %vm206, %v235, 0.0
  %v246 = vadd.f32 %v244, %v245
  %v247 = vsel %vm206, %v236, 0.0
  %v248 = vadd.f32 %v246, %v247
  %v249 = vsel %vm206, %v237, 0.0
  %v250 = vadd.f32 %v248, %v249
  %v251 = vsel %vm206, %v238, 0.0
  %v252 = vadd.f32 %v250, %v251
  %v253 = vsel %vm206, %v239, 0.0
  %v254 = vadd.f32 %v252, %v253
  %v255 = vrot.slane %v254, 4
  %v256 = vadd.f32 %v254, %v255
  %v257 = vrot.slane %v256, 2
  %v258 = vadd.f32 %v256, %v257
  %v259 = vrot.slane %v258, 1
  %v260 = vadd.f32 %v258, %v259
  %v261 = vadd.f32 %v231, %v260
  %262 = vst.msk [vmem:[%s4] sm:$0x1] %vm229, %v261
  // Predicated region
  $region18: #{transition_down.3} parent=0 // pred_check
    _
  $region19: #{transition_down.3} parent=0 // pred_check_branch
    %264 = sbr.rel (0) target = $region21
  $region20: #{transition_down.3} parent=0 // pred_region
    _
  $region21: #{transition_down.3} parent=0 // pred_fallthru
    _
  // Predicated region
  $region22: #{transition_down.3} parent=0 // pred_check
    _
  $region23: #{transition_down.3} parent=0 // pred_check_branch
    %266 = sbr.rel (0) target = $region25
  $region24: #{transition_down.3} parent=0 // pred_region
    _
  $region25: #{transition_down.3} parent=0 // pred_fallthru
    _
  // Predicated region
  $region26: #{transition_down.3} parent=0 // pred_check
    _
  $region27: #{transition_down.3} parent=0 // pred_check_branch
    %268 = sbr.rel (0) target = $region29
  $region28: #{transition_down.3} parent=0 // pred_region
    _
  $region29: #{transition_down.3} parent=0 // pred_fallthru
    _
  // Predicated region
  $region30: #{transition_down.3} parent=0 // pred_check
    _
  $region31: #{transition_down.3} parent=0 // pred_check_branch
    %270 = sbr.rel (0) target = $region33
  $region32: #{transition_down.3} parent=0 // pred_region
    _
  $region33: #{transition_down.3} parent=0 // pred_fallthru
    _

// kernel: transition_down.5
$region0: #{transition_down.5}
  #allocation0 [shape = 'u32[]', space=smem, size = 0x4, offset = 0x4, fixed_abs, tag = 'smem constant byte address 0x4 - core index']
  #allocation1 [shape = 'u32[144,128]{1,0:T(1,128)}', space=vmem, size = 0x12000, scoped, tag = 'internal scratch']
  #allocation2 [shape = 'f32[32,32]{1,0:T(8,128)}', space=vmem, size = 0x4000, scoped, tag = 'scratch operand']
  %s0 = inlined_call_operand.vmem [shape: f32[2,32,16], index: 0, kind: input, shape index: {}]
  %s1 = inlined_call_operand.vmem [shape: f32[16,32], index: 1, kind: input, shape index: {}]
  %s2 = inlined_call_operand.vmem [shape: f32[1,32], index: 2, kind: input, shape index: {}]
  %s3 = inlined_call_operand.vmem [shape: f32[2,8,32], index: 3, kind: input, shape index: {}]
  %s4 = inlined_call_operand.vmem [shape: f32[2,8,8], index: 4, kind: input, shape index: {}]
  %s5 = inlined_call_operand.hbm [shape: f32[2,8,32], index: 5, kind: output, shape index: {}]
  %s6 = sld [smem:[#allocation0]]
  $region57: #{transition_down.5} parent=0
    _
  %s8 = ssub.s32 1, %s6
  %s9 = scalar_select 0, %s8, %s6
  $region1: #{transition_down.5} parent=0
    #allocation3 [shape = 'u8[8192]{0}', space=vmem, size = 0x2000, scoped, tag = 'output window, operand 0']
    #allocation4 [shape = 's32[2]{0}', space=sflag, size = 0x8, scoped, tag = 'scoped memory for transition_down.5']
    %10 = vsyncpa [#allocation4], 0
    %s11 = scalar_lea.sflag [#allocation4], 1
    %12 = vsyncpa %s11, 0
    loop: start=0, step=1, limit=4
    $region2: #{transition_down.5} parent=1 // loop_pre_header
      _
    $region3: #{transition_down.5} parent=1 // loop_header
      %s14 = sphi 0, %s18
      %p15 = scmp.ge.s32.totalorder %s14, 4
      %s21 = sphi 0, %s33
      %s22 = sphi 0, %s29
      %s23 = sphi 0, %s21
      %s24 = sphi 0, %s22
      %s25 = sphi 0, %s23
      %s26 = sphi 0, %s24
      %s36 = sphi 0, %s38
      %s39 = sphi 0, %s36
      %s40 = sphi 0, %s39
      %s56 = sphi 0, %s40
      %s60 = sphi 0, %s60
      %s62 = sphi 0, %s60
      %s63 = sphi 0, %s62
      %s77 = sphi 0, %s63
      %s81 = sphi 0, %s81
      %s83 = sphi 0, %s81
      %s84 = sphi 0, %s83
      %s98 = sphi 0, %s84
      %s104 = sphi 0, %s106
      %s107 = sphi 0, %s104
      %s108 = sphi 0, %s107
      %s124 = sphi 0, %s108
      %s132 = sphi 0, %s134
      %s135 = sphi 0, %s132
      %s136 = sphi 0, %s135
      %s152 = sphi 0, %s136
      %s160 = sphi 0, %s162
      %s163 = sphi 0, %s160
      %s164 = sphi 0, %s163
      %s180 = sphi 0, %s164
    $region4: #{transition_down.5} parent=1 // loop_header_branch
      %17 = sbr.rel (%p15) target = $region8
    $region5: #{transition_down.5} parent=1 // loop_body
      %s19 = ssub.s32 %s14, 1
      %s20 = ssub.s32 %s14, 2
      %s27 = sadd.s32 1, %s22
      %p28 = scmp.ge.s32.totalorder %s27, 1
      %s29 = scalar_select %p28, 0, %s27
      %s30 = sadd.s32 1, %s21
      %s31 = scalar_select %p28, %s30, %s21
      %p32 = scmp.ge.s32.totalorder %s31, 2
      %s33 = scalar_select %p32, 0, %s31
      %s34 = ssub.s32 %s21, %s33
      %p35 = scmp.eq.s32.totalorder %s34, 0
      %s37 = sadd.s32 %s36, 1
      %s38 = scalar_select %p35, %s36, %s37
      %p41 = pneg %p35
      %p42 = scmp.eq.s32.totalorder %s14, 1
      %p43 = por %p41, %p42
      %p44 = scmp.ne.s32.totalorder %s36, %s39
      %p45 = scmp.eq.s32.totalorder %s14, 0
      %p46 = por %p44, %p45
      %p47 = scmp.ne.s32.totalorder %s36, %s39
      %p48 = scmp.eq.s32.totalorder %s19, 1
      %p49 = por %p47, %p48
      %p50 = scmp.ne.s32.totalorder %s39, %s40
      %p51 = scmp.eq.s32.totalorder %s19, 0
      %p52 = por %p50, %p51
      %p53 = scmp.ne.s32.totalorder %s39, %s40
      %p54 = scmp.eq.s32.totalorder %s20, 1
      %p55 = por %p53, %p54
      %p57 = scmp.ne.s32.totalorder %s40, %s56
      %p58 = scmp.eq.s32.totalorder %s20, 0
      %p59 = por %p57, %p58
      %s61 = sadd.s32 %s60, 1
      %p64 = scmp.eq.s32.totalorder %s14, 1
      %p65 = scmp.ne.s32.totalorder %s60, %s62
      %p66 = scmp.eq.s32.totalorder %s14, 0
      %p67 = por %p65, %p66
      %p68 = scmp.ne.s32.totalorder %s60, %s62
      %p69 = scmp.eq.s32.totalorder %s19, 1
      %p70 = por %p68, %p69
      %p71 = scmp.ne.s32.totalorder %s62, %s63
      %p72 = scmp.eq.s32.totalorder %s19, 0
      %p73 = por %p71, %p72
      %p74 = scmp.ne.s32.totalorder %s62, %s63
      %p75 = scmp.eq.s32.totalorder %s20, 1
      %p76 = por %p74, %p75
      %p78 = scmp.ne.s32.totalorder %s63, %s77
      %p79 = scmp.eq.s32.totalorder %s20, 0
      %p80 = por %p78, %p79
      %s82 = sadd.s32 %s81, 1
      %p85 = scmp.eq.s32.totalorder %s14, 1
      %p86 = scmp.ne.s32.totalorder %s81, %s83
      %p87 = scmp.eq.s32.totalorder %s14, 0
      %p88 = por %p86, %p87
      %p89 = scmp.ne.s32.totalorder %s81, %s83
      %p90 = scmp.eq.s32.totalorder %s19, 1
      %p91 = por %p89, %p90
      %p92 = scmp.ne.s32.totalorder %s83, %s84
      %p93 = scmp.eq.s32.totalorder %s19, 0
      %p94 = por %p92, %p93
      %p95 = scmp.ne.s32.totalorder %s83, %s84
      %p96 = scmp.eq.s32.totalorder %s20, 1
      %p97 = por %p95, %p96
      %p99 = scmp.ne.s32.totalorder %s84, %s98
      %p100 = scmp.eq.s32.totalorder %s20, 0
      %p101 = por %p99, %p100
      %s102 = ssub.s32 %s21, %s33
      %p103 = scmp.eq.s32.totalorder %s102, 0
      %s105 = sadd.s32 %s104, 1
      %s106 = scalar_select %p103, %s104, %s105
      %p109 = pneg %p103
      %p110 = scmp.eq.s32.totalorder %s14, 1
      %p111 = por %p109, %p110
      %p112 = scmp.ne.s32.totalorder %s104, %s107
      %p113 = scmp.eq.s32.totalorder %s14, 0
      %p114 = por %p112, %p113
      %p115 = scmp.ne.s32.totalorder %s104, %s107
      %p116 = scmp.eq.s32.totalorder %s19, 1
      %p117 = por %p115, %p116
      %p118 = scmp.ne.s32.totalorder %s107, %s108
      %p119 = scmp.eq.s32.totalorder %s19, 0
      %p120 = por %p118, %p119
      %p121 = scmp.ne.s32.totalorder %s107, %s108
      %p122 = scmp.eq.s32.totalorder %s20, 1
      %p123 = por %p121, %p122
      %p125 = scmp.ne.s32.totalorder %s108, %s124
      %p126 = scmp.eq.s32.totalorder %s20, 0
      %p127 = por %p125, %p126
      %s128 = ssub.s32 %s21, %s33
      %s129 = ssub.s32 %s22, %s29
      %s130 = sor.u32 %s128, %s129
      %p131 = scmp.eq.s32.totalorder %s130, 0
      %s133 = sadd.s32 %s132, 1
      %s134 = scalar_select %p131, %s132, %s133
      %p137 = pneg %p131
      %p138 = scmp.eq.s32.totalorder %s14, 1
      %p139 = por %p137, %p138
      %p140 = scmp.ne.s32.totalorder %s132, %s135
      %p141 = scmp.eq.s32.totalorder %s14, 0
      %p142 = por %p140, %p141
      %p143 = scmp.ne.s32.totalorder %s132, %s135
      %p144 = scmp.eq.s32.totalorder %s19, 1
      %p145 = por %p143, %p144
      %p146 = scmp.ne.s32.totalorder %s135, %s136
      %p147 = scmp.eq.s32.totalorder %s19, 0
      %p148 = por %p146, %p147
      %p149 = scmp.ne.s32.totalorder %s135, %s136
      %p150 = scmp.eq.s32.totalorder %s20, 1
      %p151 = por %p149, %p150
      %p153 = scmp.ne.s32.totalorder %s136, %s152
      %p154 = scmp.eq.s32.totalorder %s20, 0
      %p155 = por %p153, %p154
      %s156 = ssub.s32 %s21, %s33
      %s157 = ssub.s32 %s22, %s29
      %s158 = sor.u32 %s156, %s157
      %p159 = scmp.eq.s32.totalorder %s158, 0
      %s161 = sadd.s32 %s160, 1
      %s162 = scalar_select %p159, %s160, %s161
      %p165 = pneg %p159
      %p166 = scmp.eq.s32.totalorder %s14, 1
      %p167 = por %p165, %p166
      %p168 = scmp.ne.s32.totalorder %s160, %s163
      %p169 = scmp.eq.s32.totalorder %s14, 0
      %p170 = por %p168, %p169
      %p171 = scmp.ne.s32.totalorder %s160, %s163
      %p172 = scmp.eq.s32.totalorder %s19, 1
      %p173 = por %p171, %p172
      %p174 = scmp.ne.s32.totalorder %s163, %s164
      %p175 = scmp.eq.s32.totalorder %s19, 0
      %p176 = por %p174, %p175
      %p177 = scmp.ne.s32.totalorder %s163, %s164
      %p178 = scmp.eq.s32.totalorder %s20, 1
      %p179 = por %p177, %p178
      %p181 = scmp.ne.s32.totalorder %s164, %s180
      %p182 = scmp.eq.s32.totalorder %s20, 0
      %p183 = por %p181, %p182
      %p184 = scmp.le.s32.totalorder 1, %s14
      %p185 = scmp.lt.s32.totalorder %s14, 3
      %p186 = pnand %p184, %p185
      %p187 = pneg %p186
      // Predicated region
      $region9: #{transition_down.5} parent=5 // pred_check
        _
      $region10: #{transition_down.5} parent=5 // pred_check_branch
        %189 = sbr.rel (%p186) target = $region12
      $region11: #{transition_down.5} parent=5 // pred_region
        %s190 = ssub.s32 %s14, 1
        // Predicated region
        $region13: #{transition_down.5} parent=11 // pred_check
          %p191 = pneg %p73
        $region14: #{transition_down.5} parent=11 // pred_check_branch
          %193 = sbr.rel (%p191) target = $region16
        $region15: #{transition_down.5} parent=11 // pred_region
          _
        $region16: #{transition_down.5} parent=11 // pred_fallthru
          _
        // Predicated region
        $region17: #{transition_down.5} parent=11 // pred_check
          %p194 = pneg %p94
        $region18: #{transition_down.5} parent=11 // pred_check_branch
          %196 = sbr.rel (%p194) target = $region20
        $region19: #{transition_down.5} parent=11 // pred_region
          _
        $region20: #{transition_down.5} parent=11 // pred_fallthru
          _
      $region12: #{transition_down.5} parent=5 // pred_fallthru
        _
      %p197 = scmp.lt.s32.totalorder %s14, 2
      // Predicated region
      $region21: #{transition_down.5} parent=5 // pred_check
        %p198 = pneg %p197
      $region22: #{transition_down.5} parent=5 // pred_check_branch
        %200 = sbr.rel (%p198) target = $region24
      $region23: #{transition_down.5} parent=5 // pred_region
        // Predicated region
        $region25: #{transition_down.5} parent=23 // pred_check
          %p201 = pneg %p46
        $region26: #{transition_down.5} parent=23 // pred_check_branch
          %203 = sbr.rel (%p201) target = $region28
        $region27: #{transition_down.5} parent=23 // pred_region
          %p204 = scmp.lt.s32.totalorder %s21, 1
          %s205 = scalar_select %p204, %s21, 1
          %s206 = smul.addr %s205, 4
          %s207 = smul.addr %s206, 8
          %s208 = scalar_lea.vmem %s0, %s207
        $region28: #{transition_down.5} parent=23 // pred_fallthru
          _
        // Predicated region
        $region29: #{transition_down.5} parent=23 // pred_check
          %p209 = pneg %p114
        $region30: #{transition_down.5} parent=23 // pred_check_branch
          %211 = sbr.rel (%p209) target = $region32
        $region31: #{transition_down.5} parent=23 // pred_region
          %p212 = scmp.lt.s32.totalorder %s21, 1
          %s213 = scalar_select %p212, %s21, 1
          %s214 = smul.addr %s213, 8
          %s215 = scalar_lea.vmem %s3, %s214
        $region32: #{transition_down.5} parent=23 // pred_fallthru
          _
        // Predicated region
        $region33: #{transition_down.5} parent=23 // pred_check
          %p216 = pneg %p142
        $region34: #{transition_down.5} parent=23 // pred_check_branch
          %218 = sbr.rel (%p216) target = $region36
        $region35: #{transition_down.5} parent=23 // pred_region
          %p219 = scmp.lt.s32.totalorder %s21, 1
          %s220 = scalar_select %p219, %s21, 1
          %p221 = scmp.lt.s32.totalorder %s22, 0
          %s222 = scalar_select %p221, %s22, 0
          %s223 = sadd.s32 %s222, %s220
          %s224 = smul.addr %s223, 8
          %s225 = scalar_lea.vmem %s4, %s224
        $region36: #{transition_down.5} parent=23 // pred_fallthru
          _
      $region24: #{transition_down.5} parent=5 // pred_fallthru
        _
      %p226 = scmp.le.s32.totalorder 1, %s14
      %p227 = scmp.lt.s32.totalorder %s14, 3
      %p228 = pnand %p226, %p227
      %p229 = pneg %p228
      // Predicated region
      $region37: #{transition_down.5} parent=5 // pred_check
        _
      $region38: #{transition_down.5} parent=5 // pred_check_branch
        %231 = sbr.rel (%p228) target = $region40
      $region39: #{transition_down.5} parent=5 // pred_region
        %s232 = ssub.s32 %s14, 1
        %p233 = scmp.lt.s32.totalorder %s23, 1
        %s234 = scalar_select %p233, %s23, 1
        %s235 = smul.addr %s234, 4
        %s236 = smul.addr %s235, 8
        %s237 = scalar_lea.vmem %s0, %s236
        %p238 = pneg %p52
        %p239 = pneg %p49
        %p240 = pneg %p73
        %p241 = pneg %p70
        %p242 = pneg %p94
        %p243 = pneg %p91
        %p244 = scmp.lt.s32.totalorder %s23, 1
        %s245 = scalar_select %p244, %s23, 1
        %s246 = smul.addr %s245, 8
        %s247 = scalar_lea.vmem %s3, %s246
        %p248 = pneg %p120
        %p249 = pneg %p117
        %p250 = scmp.lt.s32.totalorder %s23, 1
        %s251 = scalar_select %p250, %s23, 1
        %p252 = scmp.lt.s32.totalorder %s24, 0
        %s253 = scalar_select %p252, %s24, 0
        %s254 = sadd.s32 %s253, %s251
        %s255 = smul.addr %s254, 8
        %s256 = scalar_lea.vmem %s4, %s255
        %p257 = pneg %p148
        %p258 = pneg %p145
        %p259 = pneg %p176
        %p260 = pneg %p173
        %s261 = sand.u32 %s163, 1
        %s262 = scalar_lea.sflag [#allocation4], %s261
        %s263 = sand.u32 %s163, 1
        %s264 = smul.addr %s263, 8
        %s265 = scalar_lea.vmem [#allocation3], %s264
        %p266 = scmp.lt.s32.totalorder %s23, 1
        %s267 = scalar_select %p266, %s23, 1
        %s268 = smul.addr %s267, 4
        %s269 = smul.addr %s268, 8
        %s270 = scalar_lea.vmem %s0, %s269
        %p271 = scmp.lt.s32.totalorder %s23, 1
        %s272 = scalar_select %p271, %s23, 1
        %s273 = smul.addr %s272, 8
        %s274 = scalar_lea.vmem %s3, %s273
        %p275 = scmp.lt.s32.totalorder %s23, 1
        %s276 = scalar_select %p275, %s23, 1
        %p277 = scmp.lt.s32.totalorder %s24, 0
        %s278 = scalar_select %p277, %s24, 0
        %s279 = sadd.s32 %s278, %s276
        %s280 = smul.addr %s279, 8
        %s281 = scalar_lea.vmem %s4, %s280
        %p282 = scmp.eq.s32.totalorder %s24, 0
        // Predicated region
        $region41: #{transition_down.5} parent=39 // pred_check
          %p283 = pneg %p282
        $region42: #{transition_down.5} parent=39 // pred_check_branch
          %285 = sbr.rel (%p283) target = $region44
        $region43: #{transition_down.5} parent=39 // pred_region
          %v286 = vld [vmem:[%s270] sm:$0xff]
          %v287 = vld [vmem:[%s270 + $0x8] sm:$0xff]
          %v288 = vld [vmem:[%s270 + $0x10] sm:$0xff]
          %v289 = vld [vmem:[%s270 + $0x18] sm:$0xff]
          %v290 = vld [vmem:[%s1] sm:$0xff]
          %v291 = vld [vmem:[%s1 + $0x8] sm:$0xff]
          %v292 = vld [vmem:[%s2] sm:$0x1]
          %v294 = vlaneseq
          %v295 = vshrl.u32 %v294, 7
          %v296 = vsub.s32 0, %v295
          %v297 = vrot.slane %v292, %v296
          %vm299 = vcmask 130048
          %v301 = vsel %vm299, %v286, 0
          %v304 = vsel %vm299, %v287, 0
          %v307 = vsel %vm299, %v288, 0
          %v310 = vsel %vm299, %v289, 0
          %312 = vmatprep.subr.mxu0 0.0
          %313 = vmatpush1.msra.mxu0 0.0
          %314 = vmatprep.subr.mxu0 0.0
          %315 = vmatpush1.msra.mxu0 0.0
          %316 = vmatprep.subr.mxu0 0.0
          %317 = vmatpush1.msra.mxu0 0.0
          %318 = vmatprep.subr.mxu0 0.0
          %319 = vmatpush1.msra.mxu0 0.0
          %320 = vmatprep.subr.mxu0 0.0
          %321 = vmatpush1.msra.mxu0 0.0
          %322 = vmatprep.subr.mxu0 0.0
          %323 = vmatpush1.msra.mxu0 0.0
          %324 = vmatprep.subr.mxu0 0.0
          %325 = vmatpush1.msra.mxu0 0.0
          %326 = vmatprep.subr.mxu0 0.0
          %327 = vmatpush1.msra.mxu0 0.0
          %328 = vmatprep.subr.mxu0 0.0
          %329 = vmatpush1.msra.mxu0 0.0
          %330 = vmatprep.subr.mxu0 0.0
          %331 = vmatpush1.msra.mxu0 0.0
          %332 = vmatprep.subr.mxu0 0.0
          %333 = vmatpush1.msra.mxu0 0.0
          %334 = vmatprep.subr.mxu0 0.0
          %335 = vmatpush1.msra.mxu0 0.0
          %336 = vmatprep.subr.mxu0 0.0
          %337 = vmatpush1.msra.mxu0 0.0
          %338 = vmatprep.subr.mxu0 0.0
          %339 = vmatpush1.msra.mxu0 0.0
          %340 = vmatprep.subr.mxu0 0.0
          %341 = vmatpush1.msra.mxu0 %v291
          %342 = vmatprep.subr.mxu0 0.0
          %343 = vmatpush1.msra.mxu0 %v290
          %344 = vmatprep.subr.mxu0 0.0
          %345 = vmatpush2.msra.mxu0 0.0
          %346 = vmatprep.subr.mxu0 0.0
          %347 = vmatpush2.msra.mxu0 0.0
          %348 = vmatprep.subr.mxu0 0.0
          %349 = vmatpush2.msra.mxu0 0.0
          %350 = vmatprep.subr.mxu0 0.0
          %351 = vmatpush2.msra.mxu0 0.0
          %352 = vmatprep.subr.mxu0 0.0
          %353 = vmatpush2.msra.mxu0 0.0
          %354 = vmatprep.subr.mxu0 0.0
          %355 = vmatpush2.msra.mxu0 0.0
          %356 = vmatprep.subr.mxu0 0.0
          %357 = vmatpush2.msra.mxu0 0.0
          %358 = vmatprep.subr.mxu0 0.0
          %359 = vmatpush2.msra.mxu0 0.0
          %360 = vmatprep.subr.mxu0 0.0
          %361 = vmatpush2.msra.mxu0 0.0
          %362 = vmatprep.subr.mxu0 0.0
          %363 = vmatpush2.msra.mxu0 0.0
          %364 = vmatprep.subr.mxu0 0.0
          %365 = vmatpush2.msra.mxu0 0.0
          %366 = vmatprep.subr.mxu0 0.0
          %367 = vmatpush2.msra.mxu0 0.0
          %368 = vmatprep.subr.mxu0 0.0
          %369 = vmatpush2.msra.mxu0 0.0
          %370 = vmatprep.subr.mxu0 0.0
          %371 = vmatpush2.msra.mxu0 0.0
          %372 = vmatprep.subr.mxu0 0.0
          %373 = vmatpush2.msra.mxu0 0.0
          %374 = vmatprep.subr.mxu0 0.0
          %375 = vmatpush2.msra.mxu0 0.0
          %376 = vmatprep.mubr.f32.mxu0 0.0
          %377 = vmatmul.mubr.f32.gmra.mxu0 %v301
          %v378 = vpop.f32.mrf.mxu0
          %v379 = vadd.f32 %v297, %v378
          %v380 = vpop.f32.mrf.mxu0
          %381 = vmatprep.mubr.f32.mxu0 0.0
          %382 = vmatmul.mubr.f32.gmra.mxu0 %v304
          %v383 = vpop.f32.mrf.mxu0
          %v384 = vadd.f32 %v297, %v383
          %v385 = vpop.f32.mrf.mxu0
          %386 = vmatprep.mubr.f32.mxu0 0.0
          %387 = vmatmul.mubr.f32.gmra.mxu0 %v307
          %v388 = vpop.f32.mrf.mxu0
          %v389 = vadd.f32 %v297, %v388
          %v390 = vpop.f32.mrf.mxu0
          %391 = vmatprep.mubr.f32.mxu0 0.0
          %392 = vmatmul.mubr.f32.gmra.mxu0 %v310
          %v393 = vpop.f32.mrf.mxu0
          %v394 = vadd.f32 %v297, %v393
          %v395 = vpop.f32.mrf.mxu0
          %396 = vdwg.mxu0
          %v397 = vmax.f32 %v379, 0.0
          %v398 = vmax.f32 %v384, 0.0
          %v399 = vmax.f32 %v389, 0.0
          %v400 = vmax.f32 %v394, 0.0
          %vm401 = vcmask 261120
          %402 = vst.msk [vmem:[#allocation2] sm:$0xff] %vm401, %v397
          %403 = vst.msk [vmem:[#allocation2 + $0x8] sm:$0xff] %vm401, %v398
          %404 = vst.msk [vmem:[#allocation2 + $0x10] sm:$0xff] %vm401, %v399
          %405 = vst.msk [vmem:[#allocation2 + $0x18] sm:$0xff] %vm401, %v400
        $region44: #{transition_down.5} parent=39 // pred_fallthru
          _
        %v406 = vld [vmem:[%s274] sm:$0xff]
        %v407 = vld [vmem:[%s281] sm:$0xff]
        %v408 = vld [vmem:[#allocation2] sm:$0xff]
        %v409 = vld [vmem:[#allocation2 + $0x8] sm:$0xff]
        %v410 = vld [vmem:[#allocation2 + $0x10] sm:$0xff]
        %v411 = vld [vmem:[#allocation2 + $0x18] sm:$0xff]
        %v412 = vmul.f32 %v406, %v406
        %vm413 = vcmask 261120
        %v414 = vsel %vm413, %v412, 0.0
        %v415 = vrot.slane %v414, 4
        %v416 = vadd.f32 %v414, %v415
        %v417 = vrot.slane %v416, 2
        %v418 = vadd.f32 %v416, %v417
        %v419 = vrot.slane %v418, 1
        %v420 = vadd.f32 %v418, %v419
        %vm421 = vcmask 64512
        %v423 = vsel %vm421, %v407, 0
        %425 = vmatprep.subr.mxu0 0.0
        %426 = vmatpush1.msra.mxu0 0.0
        %427 = vmatprep.subr.mxu0 0.0
        %428 = vmatpush1.msra.mxu0 0.0
        %429 = vmatprep.subr.mxu0 0.0
        %430 = vmatpush1.msra.mxu0 0.0
        %431 = vmatprep.subr.mxu0 0.0
        %432 = vmatpush1.msra.mxu0 0.0
        %433 = vmatprep.subr.mxu0 0.0
        %434 = vmatpush1.msra.mxu0 0.0
        %435 = vmatprep.subr.mxu0 0.0
        %436 = vmatpush1.msra.mxu0 0.0
        %437 = vmatprep.subr.mxu0 0.0
        %438 = vmatpush1.msra.mxu0 0.0
        %439 = vmatprep.subr.mxu0 0.0
        %440 = vmatpush1.msra.mxu0 0.0
        %441 = vmatprep.subr.mxu0 0.0
        %442 = vmatpush1.msra.mxu0 0.0
        %443 = vmatprep.subr.mxu0 0.0
        %444 = vmatpush1.msra.mxu0 0.0
        %445 = vmatprep.subr.mxu0 0.0
        %446 = vmatpush1.msra.mxu0 0.0
        %447 = vmatprep.subr.mxu0 0.0
        %448 = vmatpush1.msra.mxu0 0.0
        %449 = vmatprep.subr.mxu0 0.0
        %450 = vmatpush1.msra.mxu0 0.0
        %451 = vmatprep.subr.mxu0 0.0
        %452 = vmatpush1.msra.mxu0 0.0
        %453 = vmatprep.subr.mxu0 0.0
        %454 = vmatpush1.msra.mxu0 0.0
        %455 = vmatprep.subr.mxu0 0.0
        %456 = vmatpush1.msra.mxu0 %v406
        %457 = vmatprep.subr.mxu0 0.0
        %458 = vmatpush2.msra.mxu0 0.0
        %459 = vmatprep.subr.mxu0 0.0
        %460 = vmatpush2.msra.mxu0 0.0
        %461 = vmatprep.subr.mxu0 0.0
        %462 = vmatpush2.msra.mxu0 0.0
        %463 = vmatprep.subr.mxu0 0.0
        %464 = vmatpush2.msra.mxu0 0.0
        %465 = vmatprep.subr.mxu0 0.0
        %466 = vmatpush2.msra.mxu0 0.0
        %467 = vmatprep.subr.mxu0 0.0
        %468 = vmatpush2.msra.mxu0 0.0
        %469 = vmatprep.subr.mxu0 0.0
        %470 = vmatpush2.msra.mxu0 0.0
        %471 = vmatprep.subr.mxu0 0.0
        %472 = vmatpush2.msra.mxu0 0.0
        %473 = vmatprep.subr.mxu0 0.0
        %474 = vmatpush2.msra.mxu0 0.0
        %475 = vmatprep.subr.mxu0 0.0
        %476 = vmatpush2.msra.mxu0 0.0
        %477 = vmatprep.subr.mxu0 0.0
        %478 = vmatpush2.msra.mxu0 0.0
        %479 = vmatprep.subr.mxu0 0.0
        %480 = vmatpush2.msra.mxu0 0.0
        %481 = vmatprep.subr.mxu0 0.0
        %482 = vmatpush2.msra.mxu0 0.0
        %483 = vmatprep.subr.mxu0 0.0
        %484 = vmatpush2.msra.mxu0 0.0
        %485 = vmatprep.subr.mxu0 0.0
        %486 = vmatpush2.msra.mxu0 0.0
        %487 = vmatprep.subr.mxu0 0.0
        %488 = vmatpush2.msra.mxu0 0.0
        %489 = vmatprep.mubr.f32.mxu0 0.0
        %490 = vmatmul.mubr.f32.gmra.mxu0 %v423
        %v491 = vpop.f32.mrf.mxu0
        %v492 = vadd.f32 0.0, %v491
        %v493 = vpop.f32.mrf.mxu0
        %494 = vdwg.mxu0
        %v495 = vmul.f32 %v492, 2.0
        %v496 = vsub.f32 %v420, %v495
        %v497 = vlaneseq
        %v498 = vand.u32 %v497, 127
        %v499 = vsel %vm413, %v496, inf
        %500 = vmin.xlane.f32.xlu0 %v499
        %v501 = vpop.xlane.xlu0 %500
        %vm502 = vcmp.le.f32.partialorder %v496, %v501
        %v503 = vsel %vm502, %v498, 32
        %v504 = vsel %vm413, %v503, 2147483647
        %v505 = vand.u32 %v504, 65535
        %v506 = vshra.s32 %v504, 16
        %v507 = vcvt.s32.f32 %v505
        %v508 = vcvt.s32.f32 %v506
        %509 = vmin.xlane.f32.xlu0 %v508
        %v510 = vpop.xlane.xlu0 %509
        %vm511 = vcmp.eq.f32.partialorder %v508, %v510
        %v512 = vsel %vm511, %v507, inf
        %513 = vmin.xlane.f32.xlu0 %v512
        %v514 = vpop.xlane.xlu0 %513
        %v515 = vcvt.f32.s32 %v514
        %v516 = vcvt.f32.s32 %v510
        %v517 = vshll.u32 %v516, 16
        %v518 = vadd.s32 %v517, %v515
        %vm519 = vcmp.eq.s32.totalorder %v498, %v518
        %v520 = vsel %vm519, 1, 0
        %v521 = vcvt.s32.f32 %v520
        %v523 = vsel %vm413, %v521, 0
        %525 = vmatprep.subr.mxu0 0.0
        %526 = vmatpush1.msra.mxu0 0.0
        %527 = vmatprep.subr.mxu0 0.0
        %528 = vmatpush1.msra.mxu0 0.0
        %529 = vmatprep.subr.mxu0 0.0
        %530 = vmatpush1.msra.mxu0 0.0
        %531 = vmatprep.subr.mxu0 0.0
        %532 = vmatpush1.msra.mxu0 0.0
        %533 = vmatprep.subr.mxu0 0.0
        %534 = vmatpush1.msra.mxu0 0.0
        %535 = vmatprep.subr.mxu0 0.0
        %536 = vmatpush1.msra.mxu0 0.0
        %537 = vmatprep.subr.mxu0 0.0
        %538 = vmatpush1.msra.mxu0 0.0
        %539 = vmatprep.subr.mxu0 0.0
        %540 = vmatpush1.msra.mxu0 0.0
        %541 = vmatprep.subr.mxu0 0.0
        %542 = vmatpush1.msra.mxu0 0.0
        %543 = vmatprep.subr.mxu0 0.0
        %544 = vmatpush1.msra.mxu0 0.0
        %545 = vmatprep.subr.mxu0 0.0
        %546 = vmatpush1.msra.mxu0 0.0
        %547 = vmatprep.subr.mxu0 0.0
        %548 = vmatpush1.msra.mxu0 0.0
        %549 = vmatprep.subr.mxu0 0.0
        %550 = vmatpush1.msra.mxu0 %v411
        %551 = vmatprep.subr.mxu0 0.0
        %552 = vmatpush1.msra.mxu0 %v410
        %553 = vmatprep.subr.mxu0 0.0
        %554 = vmatpush1.msra.mxu0 %v409
        %555 = vmatprep.subr.mxu0 0.0
        %556 = vmatpush1.msra.mxu0 %v408
        %557 = vmatprep.subr.mxu0 0.0
        %558 = vmatpush2.msra.mxu0 0.0
        %559 = vmatprep.subr.mxu0 0.0
        %560 = vmatpush2.msra.mxu0 0.0
        %561 = vmatprep.subr.mxu0 0.0
        %562 = vmatpush2.msra.mxu0 0.0
        %563 = vmatprep.subr.mxu0 0.0
        %564 = vmatpush2.msra.mxu0 0.0
        %565 = vmatprep.subr.mxu0 0.0
        %566 = vmatpush2.msra.mxu0 0.0
        %567 = vmatprep.subr.mxu0 0.0
        %568 = vmatpush2.msra.mxu0 0.0
        %569 = vmatprep.subr.mxu0 0.0
        %570 = vmatpush2.msra.mxu0 0.0
        %571 = vmatprep.subr.mxu0 0.0
        %572 = vmatpush2.msra.mxu0 0.0
        %573 = vmatprep.subr.mxu0 0.0
        %574 = vmatpush2.msra.mxu0 0.0
        %575 = vmatprep.subr.mxu0 0.0
        %576 = vmatpush2.msra.mxu0 0.0
        %577 = vmatprep.subr.mxu0 0.0
        %578 = vmatpush2.msra.mxu0 0.0
        %579 = vmatprep.subr.mxu0 0.0
        %580 = vmatpush2.msra.mxu0 0.0
        %581 = vmatprep.subr.mxu0 0.0
        %582 = vmatpush2.msra.mxu0 0.0
        %583 = vmatprep.subr.mxu0 0.0
        %584 = vmatpush2.msra.mxu0 0.0
        %585 = vmatprep.subr.mxu0 0.0
        %586 = vmatpush2.msra.mxu0 0.0
        %587 = vmatprep.subr.mxu0 0.0
        %588 = vmatpush2.msra.mxu0 0.0
        %589 = vmatprep.mubr.f32.mxu0 0.0
        %590 = vmatmul.mubr.f32.gmra.mxu0 %v523
        %v591 = vpop.f32.mrf.mxu0
        %v592 = vadd.f32 0.0, %v591
        %v593 = vpop.f32.mrf.mxu0
        %594 = vdwg.mxu0
        %v595 = vsel %vm519, 3.4e+38, %v496
        %v596 = vsel %vm413, %v595, inf
        %597 = vmin.xlane.f32.xlu0 %v596
        %v598 = vpop.xlane.xlu0 %597
        %vm599 = vcmp.le.f32.partialorder %v595, %v598
        %v600 = vsel %vm599, %v498, 32
        %v601 = vsel %vm413, %v600, 2147483647
        %v602 = vand.u32 %v601, 65535
        %v603 = vshra.s32 %v601, 16
        %v604 = vcvt.s32.f32 %v602
        %v605 = vcvt.s32.f32 %v603
        %606 = vmin.xlane.f32.xlu0 %v605
        %v607 = vpop.xlane.xlu0 %606
        %vm608 = vcmp.eq.f32.partialorder %v605, %v607
        %v609 = vsel %vm608, %v604, inf
        %610 = vmin.xlane.f32.xlu0 %v609
        %v611 = vpop.xlane.xlu0 %610
        %v612 = vcvt.f32.s32 %v611
        %v613 = vcvt.f32.s32 %v607
        %v614 = vshll.u32 %v613, 16
        %v615 = vadd.s32 %v614, %v612
        %vm616 = vcmp.eq.s32.totalorder %v498, %v615
        %v617 = vsel %vm616, 1, 0
        %v618 = vcvt.s32.f32 %v617
        %v620 = vsel %vm413, %v618, 0
        %622 = vmatprep.subr.mxu0 0.0
        %623 = vmatpush1.msra.mxu0 0.0
        %624 = vmatprep.subr.mxu0 0.0
        %625 = vmatpush1.msra.mxu0 0.0
        %626 = vmatprep.subr.mxu0 0.0
        %627 = vmatpush1.msra.mxu0 0.0
        %628 = vmatprep.subr.mxu0 0.0
        %629 = vmatpush1.msra.mxu0 0.0
        %630 = vmatprep.subr.mxu0 0.0
        %631 = vmatpush1.msra.mxu0 0.0
        %632 = vmatprep.subr.mxu0 0.0
        %633 = vmatpush1.msra.mxu0 0.0
        %634 = vmatprep.subr.mxu0 0.0
        %635 = vmatpush1.msra.mxu0 0.0
        %636 = vmatprep.subr.mxu0 0.0
        %637 = vmatpush1.msra.mxu0 0.0
        %638 = vmatprep.subr.mxu0 0.0
        %639 = vmatpush1.msra.mxu0 0.0
        %640 = vmatprep.subr.mxu0 0.0
        %641 = vmatpush1.msra.mxu0 0.0
        %642 = vmatprep.subr.mxu0 0.0
        %643 = vmatpush1.msra.mxu0 0.0
        %644 = vmatprep.subr.mxu0 0.0
        %645 = vmatpush1.msra.mxu0 0.0
        %646 = vmatprep.subr.mxu0 0.0
        %647 = vmatpush1.msra.mxu0 %v411
        %648 = vmatprep.subr.mxu0 0.0
        %649 = vmatpush1.msra.mxu0 %v410
        %650 = vmatprep.subr.mxu0 0.0
        %651 = vmatpush1.msra.mxu0 %v409
        %652 = vmatprep.subr.mxu0 0.0
        %653 = vmatpush1.msra.mxu0 %v408
        %654 = vmatprep.subr.mxu0 0.0
        %655 = vmatpush2.msra.mxu0 0.0
        %656 = vmatprep.subr.mxu0 0.0
        %657 = vmatpush2.msra.mxu0 0.0
        %658 = vmatprep.subr.mxu0 0.0
        %659 = vmatpush2.msra.mxu0 0.0
        %660 = vmatprep.subr.mxu0 0.0
        %661 = vmatpush2.msra.mxu0 0.0
        %662 = vmatprep.subr.mxu0 0.0
        %663 = vmatpush2.msra.mxu0 0.0
        %664 = vmatprep.subr.mxu0 0.0
        %665 = vmatpush2.msra.mxu0 0.0
        %666 = vmatprep.subr.mxu0 0.0
        %667 = vmatpush2.msra.mxu0 0.0
        %668 = vmatprep.subr.mxu0 0.0
        %669 = vmatpush2.msra.mxu0 0.0
        %670 = vmatprep.subr.mxu0 0.0
        %671 = vmatpush2.msra.mxu0 0.0
        %672 = vmatprep.subr.mxu0 0.0
        %673 = vmatpush2.msra.mxu0 0.0
        %674 = vmatprep.subr.mxu0 0.0
        %675 = vmatpush2.msra.mxu0 0.0
        %676 = vmatprep.subr.mxu0 0.0
        %677 = vmatpush2.msra.mxu0 0.0
        %678 = vmatprep.subr.mxu0 0.0
        %679 = vmatpush2.msra.mxu0 0.0
        %680 = vmatprep.subr.mxu0 0.0
        %681 = vmatpush2.msra.mxu0 0.0
        %682 = vmatprep.subr.mxu0 0.0
        %683 = vmatpush2.msra.mxu0 0.0
        %684 = vmatprep.subr.mxu0 0.0
        %685 = vmatpush2.msra.mxu0 0.0
        %686 = vmatprep.mubr.f32.mxu0 0.0
        %687 = vmatmul.mubr.f32.gmra.mxu0 %v620
        %v688 = vpop.f32.mrf.mxu0
        %v689 = vadd.f32 0.0, %v688
        %v690 = vpop.f32.mrf.mxu0
        %691 = vdwg.mxu0
        %v692 = vmax.f32 %v592, %v689
        %v693 = vsel %vm616, 3.4e+38, %v595
        %v694 = vsel %vm413, %v693, inf
        %695 = vmin.xlane.f32.xlu0 %v694
        %v696 = vpop.xlane.xlu0 %695
        %vm697 = vcmp.le.f32.partialorder %v693, %v696
        %v698 = vsel %vm697, %v498, 32
        %v699 = vsel %vm413, %v698, 2147483647
        %v700 = vand.u32 %v699, 65535
        %v701 = vshra.s32 %v699, 16
        %v702 = vcvt.s32.f32 %v700
        %v703 = vcvt.s32.f32 %v701
        %704 = vmin.xlane.f32.xlu0 %v703
        %v705 = vpop.xlane.xlu0 %704
        %vm706 = vcmp.eq.f32.partialorder %v703, %v705
        %v707 = vsel %vm706, %v702, inf
        %708 = vmin.xlane.f32.xlu0 %v707
        %v709 = vpop.xlane.xlu0 %708
        %v710 = vcvt.f32.s32 %v709
        %v711 = vcvt.f32.s32 %v705
        %v712 = vshll.u32 %v711, 16
        %v713 = vadd.s32 %v712, %v710
        %vm714 = vcmp.eq.s32.totalorder %v498, %v713
        %v715 = vsel %vm714, 1, 0
        %v716 = vcvt.s32.f32 %v715
        %v718 = vsel %vm413, %v716, 0
        %720 = vmatprep.subr.mxu0 0.0
        %721 = vmatpush1.msra.mxu0 0.0
        %722 = vmatprep.subr.mxu0 0.0
        %723 = vmatpush1.msra.mxu0 0.0
        %724 = vmatprep.subr.mxu0 0.0
        %725 = vmatpush1.msra.mxu0 0.0
        %726 = vmatprep.subr.mxu0 0.0
        %727 = vmatpush1.msra.mxu0 0.0
        %728 = vmatprep.subr.mxu0 0.0
        %729 = vmatpush1.msra.mxu0 0.0
        %730 = vmatprep.subr.mxu0 0.0
        %731 = vmatpush1.msra.mxu0 0.0
        %732 = vmatprep.subr.mxu0 0.0
        %733 = vmatpush1.msra.mxu0 0.0
        %734 = vmatprep.subr.mxu0 0.0
        %735 = vmatpush1.msra.mxu0 0.0
        %736 = vmatprep.subr.mxu0 0.0
        %737 = vmatpush1.msra.mxu0 0.0
        %738 = vmatprep.subr.mxu0 0.0
        %739 = vmatpush1.msra.mxu0 0.0
        %740 = vmatprep.subr.mxu0 0.0
        %741 = vmatpush1.msra.mxu0 0.0
        %742 = vmatprep.subr.mxu0 0.0
        %743 = vmatpush1.msra.mxu0 0.0
        %744 = vmatprep.subr.mxu0 0.0
        %745 = vmatpush1.msra.mxu0 %v411
        %746 = vmatprep.subr.mxu0 0.0
        %747 = vmatpush1.msra.mxu0 %v410
        %748 = vmatprep.subr.mxu0 0.0
        %749 = vmatpush1.msra.mxu0 %v409
        %750 = vmatprep.subr.mxu0 0.0
        %751 = vmatpush1.msra.mxu0 %v408
        %752 = vmatprep.subr.mxu0 0.0
        %753 = vmatpush2.msra.mxu0 0.0
        %754 = vmatprep.subr.mxu0 0.0
        %755 = vmatpush2.msra.mxu0 0.0
        %756 = vmatprep.subr.mxu0 0.0
        %757 = vmatpush2.msra.mxu0 0.0
        %758 = vmatprep.subr.mxu0 0.0
        %759 = vmatpush2.msra.mxu0 0.0
        %760 = vmatprep.subr.mxu0 0.0
        %761 = vmatpush2.msra.mxu0 0.0
        %762 = vmatprep.subr.mxu0 0.0
        %763 = vmatpush2.msra.mxu0 0.0
        %764 = vmatprep.subr.mxu0 0.0
        %765 = vmatpush2.msra.mxu0 0.0
        %766 = vmatprep.subr.mxu0 0.0
        %767 = vmatpush2.msra.mxu0 0.0
        %768 = vmatprep.subr.mxu0 0.0
        %769 = vmatpush2.msra.mxu0 0.0
        %770 = vmatprep.subr.mxu0 0.0
        %771 = vmatpush2.msra.mxu0 0.0
        %772 = vmatprep.subr.mxu0 0.0
        %773 = vmatpush2.msra.mxu0 0.0
        %774 = vmatprep.subr.mxu0 0.0
        %775 = vmatpush2.msra.mxu0 0.0
        %776 = vmatprep.subr.mxu0 0.0
        %777 = vmatpush2.msra.mxu0 0.0
        %778 = vmatprep.subr.mxu0 0.0
        %779 = vmatpush2.msra.mxu0 0.0
        %780 = vmatprep.subr.mxu0 0.0
        %781 = vmatpush2.msra.mxu0 0.0
        %782 = vmatprep.subr.mxu0 0.0
        %783 = vmatpush2.msra.mxu0 0.0
        %784 = vmatprep.mubr.f32.mxu0 0.0
        %785 = vmatmul.mubr.f32.gmra.mxu0 %v718
        %v786 = vpop.f32.mrf.mxu0
        %v787 = vadd.f32 0.0, %v786
        %v788 = vpop.f32.mrf.mxu0
        %789 = vdwg.mxu0
        %v790 = vmax.f32 %v692, %v787
        %v791 = vsel %vm714, 3.4e+38, %v693
        %v792 = vsel %vm413, %v791, inf
        %793 = vmin.xlane.f32.xlu0 %v792
        %v794 = vpop.xlane.xlu0 %793
        %vm795 = vcmp.le.f32.partialorder %v791, %v794
        %v796 = vsel %vm795, %v498, 32
        %v797 = vsel %vm413, %v796, 2147483647
        %v798 = vand.u32 %v797, 65535
        %v799 = vshra.s32 %v797, 16
        %v800 = vcvt.s32.f32 %v798
        %v801 = vcvt.s32.f32 %v799
        %802 = vmin.xlane.f32.xlu0 %v801
        %v803 = vpop.xlane.xlu0 %802
        %vm804 = vcmp.eq.f32.partialorder %v801, %v803
        %v805 = vsel %vm804, %v800, inf
        %806 = vmin.xlane.f32.xlu0 %v805
        %v807 = vpop.xlane.xlu0 %806
        %v808 = vcvt.f32.s32 %v807
        %v809 = vcvt.f32.s32 %v803
        %v810 = vshll.u32 %v809, 16
        %v811 = vadd.s32 %v810, %v808
        %vm812 = vcmp.eq.s32.totalorder %v498, %v811
        %v813 = vsel %vm812, 1, 0
        %v814 = vcvt.s32.f32 %v813
        %v816 = vsel %vm413, %v814, 0
        %818 = vmatprep.subr.mxu0 0.0
        %819 = vmatpush1.msra.mxu0 0.0
        %820 = vmatprep.subr.mxu0 0.0
        %821 = vmatpush1.msra.mxu0 0.0
        %822 = vmatprep.subr.mxu0 0.0
        %823 = vmatpush1.msra.mxu0 0.0
        %824 = vmatprep.subr.mxu0 0.0
        %825 = vmatpush1.msra.mxu0 0.0
        %826 = vmatprep.subr.mxu0 0.0
        %827 = vmatpush1.msra.mxu0 0.0
        %828 = vmatprep.subr.mxu0 0.0
        %829 = vmatpush1.msra.mxu0 0.0
        %830 = vmatprep.subr.mxu0 0.0
        %831 = vmatpush1.msra.mxu0 0.0
        %832 = vmatprep.subr.mxu0 0.0
        %833 = vmatpush1.msra.mxu0 0.0
        %834 = vmatprep.subr.mxu0 0.0
        %835 = vmatpush1.msra.mxu0 0.0
        %836 = vmatprep.subr.mxu0 0.0
        %837 = vmatpush1.msra.mxu0 0.0
        %838 = vmatprep.subr.mxu0 0.0
        %839 = vmatpush1.msra.mxu0 0.0
        %840 = vmatprep.subr.mxu0 0.0
        %841 = vmatpush1.msra.mxu0 0.0
        %842 = vmatprep.subr.mxu0 0.0
        %843 = vmatpush1.msra.mxu0 %v411
        %844 = vmatprep.subr.mxu0 0.0
        %845 = vmatpush1.msra.mxu0 %v410
        %846 = vmatprep.subr.mxu0 0.0
        %847 = vmatpush1.msra.mxu0 %v409
        %848 = vmatprep.subr.mxu0 0.0
        %849 = vmatpush1.msra.mxu0 %v408
        %850 = vmatprep.subr.mxu0 0.0
        %851 = vmatpush2.msra.mxu0 0.0
        %852 = vmatprep.subr.mxu0 0.0
        %853 = vmatpush2.msra.mxu0 0.0
        %854 = vmatprep.subr.mxu0 0.0
        %855 = vmatpush2.msra.mxu0 0.0
        %856 = vmatprep.subr.mxu0 0.0
        %857 = vmatpush2.msra.mxu0 0.0
        %858 = vmatprep.subr.mxu0 0.0
        %859 = vmatpush2.msra.mxu0 0.0
        %860 = vmatprep.subr.mxu0 0.0
        %861 = vmatpush2.msra.mxu0 0.0
        %862 = vmatprep.subr.mxu0 0.0
        %863 = vmatpush2.msra.mxu0 0.0
        %864 = vmatprep.subr.mxu0 0.0
        %865 = vmatpush2.msra.mxu0 0.0
        %866 = vmatprep.subr.mxu0 0.0
        %867 = vmatpush2.msra.mxu0 0.0
        %868 = vmatprep.subr.mxu0 0.0
        %869 = vmatpush2.msra.mxu0 0.0
        %870 = vmatprep.subr.mxu0 0.0
        %871 = vmatpush2.msra.mxu0 0.0
        %872 = vmatprep.subr.mxu0 0.0
        %873 = vmatpush2.msra.mxu0 0.0
        %874 = vmatprep.subr.mxu0 0.0
        %875 = vmatpush2.msra.mxu0 0.0
        %876 = vmatprep.subr.mxu0 0.0
        %877 = vmatpush2.msra.mxu0 0.0
        %878 = vmatprep.subr.mxu0 0.0
        %879 = vmatpush2.msra.mxu0 0.0
        %880 = vmatprep.subr.mxu0 0.0
        %881 = vmatpush2.msra.mxu0 0.0
        %882 = vmatprep.mubr.f32.mxu0 0.0
        %883 = vmatmul.mubr.f32.gmra.mxu0 %v816
        %v884 = vpop.f32.mrf.mxu0
        %v885 = vadd.f32 0.0, %v884
        %v886 = vpop.f32.mrf.mxu0
        %887 = vdwg.mxu0
        %v888 = vmax.f32 %v790, %v885
        %v889 = vsel %vm812, 3.4e+38, %v791
        %v890 = vsel %vm413, %v889, inf
        %891 = vmin.xlane.f32.xlu0 %v890
        %v892 = vpop.xlane.xlu0 %891
        %vm893 = vcmp.le.f32.partialorder %v889, %v892
        %v894 = vsel %vm893, %v498, 32
        %v895 = vsel %vm413, %v894, 2147483647
        %v896 = vand.u32 %v895, 65535
        %v897 = vshra.s32 %v895, 16
        %v898 = vcvt.s32.f32 %v896
        %v899 = vcvt.s32.f32 %v897
        %900 = vmin.xlane.f32.xlu0 %v899
        %v901 = vpop.xlane.xlu0 %900
        %vm902 = vcmp.eq.f32.partialorder %v899, %v901
        %v903 = vsel %vm902, %v898, inf
        %904 = vmin.xlane.f32.xlu0 %v903
        %v905 = vpop.xlane.xlu0 %904
        %v906 = vcvt.f32.s32 %v905
        %v907 = vcvt.f32.s32 %v901
        %v908 = vshll.u32 %v907, 16
        %v909 = vadd.s32 %v908, %v906
        %vm910 = vcmp.eq.s32.totalorder %v498, %v909
        %v911 = vsel %vm910, 1, 0
        %v912 = vcvt.s32.f32 %v911
        %v914 = vsel %vm413, %v912, 0
        %916 = vmatprep.subr.mxu0 0.0
        %917 = vmatpush1.msra.mxu0 0.0
        %918 = vmatprep.subr.mxu0 0.0
        %919 = vmatpush1.msra.mxu0 0.0
        %920 = vmatprep.subr.mxu0 0.0
        %921 = vmatpush1.msra.mxu0 0.0
        %922 = vmatprep.subr.mxu0 0.0
        %923 = vmatpush1.msra.mxu0 0.0
        %924 = vmatprep.subr.mxu0 0.0
        %925 = vmatpush1.msra.mxu0 0.0
        %926 = vmatprep.subr.mxu0 0.0
        %927 = vmatpush1.msra.mxu0 0.0
        %928 = vmatprep.subr.mxu0 0.0
        %929 = vmatpush1.msra.mxu0 0.0
        %930 = vmatprep.subr.mxu0 0.0
        %931 = vmatpush1.msra.mxu0 0.0
        %932 = vmatprep.subr.mxu0 0.0
        %933 = vmatpush1.msra.mxu0 0.0
        %934 = vmatprep.subr.mxu0 0.0
        %935 = vmatpush1.msra.mxu0 0.0
        %936 = vmatprep.subr.mxu0 0.0
        %937 = vmatpush1.msra.mxu0 0.0
        %938 = vmatprep.subr.mxu0 0.0
        %939 = vmatpush1.msra.mxu0 0.0
        %940 = vmatprep.subr.mxu0 0.0
        %941 = vmatpush1.msra.mxu0 %v411
        %942 = vmatprep.subr.mxu0 0.0
        %943 = vmatpush1.msra.mxu0 %v410
        %944 = vmatprep.subr.mxu0 0.0
        %945 = vmatpush1.msra.mxu0 %v409
        %946 = vmatprep.subr.mxu0 0.0
        %947 = vmatpush1.msra.mxu0 %v408
        %948 = vmatprep.subr.mxu0 0.0
        %949 = vmatpush2.msra.mxu0 0.0
        %950 = vmatprep.subr.mxu0 0.0
        %951 = vmatpush2.msra.mxu0 0.0
        %952 = vmatprep.subr.mxu0 0.0
        %953 = vmatpush2.msra.mxu0 0.0
        %954 = vmatprep.subr.mxu0 0.0
        %955 = vmatpush2.msra.mxu0 0.0
        %956 = vmatprep.subr.mxu0 0.0
        %957 = vmatpush2.msra.mxu0 0.0
        %958 = vmatprep.subr.mxu0 0.0
        %959 = vmatpush2.msra.mxu0 0.0
        %960 = vmatprep.subr.mxu0 0.0
        %961 = vmatpush2.msra.mxu0 0.0
        %962 = vmatprep.subr.mxu0 0.0
        %963 = vmatpush2.msra.mxu0 0.0
        %964 = vmatprep.subr.mxu0 0.0
        %965 = vmatpush2.msra.mxu0 0.0
        %966 = vmatprep.subr.mxu0 0.0
        %967 = vmatpush2.msra.mxu0 0.0
        %968 = vmatprep.subr.mxu0 0.0
        %969 = vmatpush2.msra.mxu0 0.0
        %970 = vmatprep.subr.mxu0 0.0
        %971 = vmatpush2.msra.mxu0 0.0
        %972 = vmatprep.subr.mxu0 0.0
        %973 = vmatpush2.msra.mxu0 0.0
        %974 = vmatprep.subr.mxu0 0.0
        %975 = vmatpush2.msra.mxu0 0.0
        %976 = vmatprep.subr.mxu0 0.0
        %977 = vmatpush2.msra.mxu0 0.0
        %978 = vmatprep.subr.mxu0 0.0
        %979 = vmatpush2.msra.mxu0 0.0
        %980 = vmatprep.mubr.f32.mxu0 0.0
        %981 = vmatmul.mubr.f32.gmra.mxu0 %v914
        %v982 = vpop.f32.mrf.mxu0
        %v983 = vadd.f32 0.0, %v982
        %v984 = vpop.f32.mrf.mxu0
        %985 = vdwg.mxu0
        %v986 = vmax.f32 %v888, %v983
        %v987 = vsel %vm910, 3.4e+38, %v889
        %v988 = vsel %vm413, %v987, inf
        %989 = vmin.xlane.f32.xlu0 %v988
        %v990 = vpop.xlane.xlu0 %989
        %vm991 = vcmp.le.f32.partialorder %v987, %v990
        %v992 = vsel %vm991, %v498, 32
        %v993 = vsel %vm413, %v992, 2147483647
        %v994 = vand.u32 %v993, 65535
        %v995 = vshra.s32 %v993, 16
        %v996 = vcvt.s32.f32 %v994
        %v997 = vcvt.s32.f32 %v995
        %998 = vmin.xlane.f32.xlu0 %v997
        %v999 = vpop.xlane.xlu0 %998
        %vm1000 = vcmp.eq.f32.partialorder %v997, %v999
        %v1001 = vsel %vm1000, %v996, inf
        %1002 = vmin.xlane.f32.xlu0 %v1001
        %v1003 = vpop.xlane.xlu0 %1002
        %v1004 = vcvt.f32.s32 %v1003
        %v1005 = vcvt.f32.s32 %v999
        %v1006 = vshll.u32 %v1005, 16
        %v1007 = vadd.s32 %v1006, %v1004
        %vm1008 = vcmp.eq.s32.totalorder %v498, %v1007
        %v1009 = vsel %vm1008, 1, 0
        %v1010 = vcvt.s32.f32 %v1009
        %v1012 = vsel %vm413, %v1010, 0
        %1014 = vmatprep.subr.mxu0 0.0
        %1015 = vmatpush1.msra.mxu0 0.0
        %1016 = vmatprep.subr.mxu0 0.0
        %1017 = vmatpush1.msra.mxu0 0.0
        %1018 = vmatprep.subr.mxu0 0.0
        %1019 = vmatpush1.msra.mxu0 0.0
        %1020 = vmatprep.subr.mxu0 0.0
        %1021 = vmatpush1.msra.mxu0 0.0
        %1022 = vmatprep.subr.mxu0 0.0
        %1023 = vmatpush1.msra.mxu0 0.0
        %1024 = vmatprep.subr.mxu0 0.0
        %1025 = vmatpush1.msra.mxu0 0.0
        %1026 = vmatprep.subr.mxu0 0.0
        %1027 = vmatpush1.msra.mxu0 0.0
        %1028 = vmatprep.subr.mxu0 0.0
        %1029 = vmatpush1.msra.mxu0 0.0
        %1030 = vmatprep.subr.mxu0 0.0
        %1031 = vmatpush1.msra.mxu0 0.0
        %1032 = vmatprep.subr.mxu0 0.0
        %1033 = vmatpush1.msra.mxu0 0.0
        %1034 = vmatprep.subr.mxu0 0.0
        %1035 = vmatpush1.msra.mxu0 0.0
        %1036 = vmatprep.subr.mxu0 0.0
        %1037 = vmatpush1.msra.mxu0 0.0
        %1038 = vmatprep.subr.mxu0 0.0
        %1039 = vmatpush1.msra.mxu0 %v411
        %1040 = vmatprep.subr.mxu0 0.0
        %1041 = vmatpush1.msra.mxu0 %v410
        %1042 = vmatprep.subr.mxu0 0.0
        %1043 = vmatpush1.msra.mxu0 %v409
        %1044 = vmatprep.subr.mxu0 0.0
        %1045 = vmatpush1.msra.mxu0 %v408
        %1046 = vmatprep.subr.mxu0 0.0
        %1047 = vmatpush2.msra.mxu0 0.0
        %1048 = vmatprep.subr.mxu0 0.0
        %1049 = vmatpush2.msra.mxu0 0.0
        %1050 = vmatprep.subr.mxu0 0.0
        %1051 = vmatpush2.msra.mxu0 0.0
        %1052 = vmatprep.subr.mxu0 0.0
        %1053 = vmatpush2.msra.mxu0 0.0
        %1054 = vmatprep.subr.mxu0 0.0
        %1055 = vmatpush2.msra.mxu0 0.0
        %1056 = vmatprep.subr.mxu0 0.0
        %1057 = vmatpush2.msra.mxu0 0.0
        %1058 = vmatprep.subr.mxu0 0.0
        %1059 = vmatpush2.msra.mxu0 0.0
        %1060 = vmatprep.subr.mxu0 0.0
        %1061 = vmatpush2.msra.mxu0 0.0
        %1062 = vmatprep.subr.mxu0 0.0
        %1063 = vmatpush2.msra.mxu0 0.0
        %1064 = vmatprep.subr.mxu0 0.0
        %1065 = vmatpush2.msra.mxu0 0.0
        %1066 = vmatprep.subr.mxu0 0.0
        %1067 = vmatpush2.msra.mxu0 0.0
        %1068 = vmatprep.subr.mxu0 0.0
        %1069 = vmatpush2.msra.mxu0 0.0
        %1070 = vmatprep.subr.mxu0 0.0
        %1071 = vmatpush2.msra.mxu0 0.0
        %1072 = vmatprep.subr.mxu0 0.0
        %1073 = vmatpush2.msra.mxu0 0.0
        %1074 = vmatprep.subr.mxu0 0.0
        %1075 = vmatpush2.msra.mxu0 0.0
        %1076 = vmatprep.subr.mxu0 0.0
        %1077 = vmatpush2.msra.mxu0 0.0
        %1078 = vmatprep.mubr.f32.mxu0 0.0
        %1079 = vmatmul.mubr.f32.gmra.mxu0 %v1012
        %v1080 = vpop.f32.mrf.mxu0
        %v1081 = vadd.f32 0.0, %v1080
        %v1082 = vpop.f32.mrf.mxu0
        %1083 = vdwg.mxu0
        %v1084 = vmax.f32 %v986, %v1081
        %v1085 = vsel %vm1008, 3.4e+38, %v987
        %v1086 = vsel %vm413, %v1085, inf
        %1087 = vmin.xlane.f32.xlu0 %v1086
        %v1088 = vpop.xlane.xlu0 %1087
        %vm1089 = vcmp.le.f32.partialorder %v1085, %v1088
        %v1090 = vsel %vm1089, %v498, 32
        %v1091 = vsel %vm413, %v1090, 2147483647
        %v1092 = vand.u32 %v1091, 65535
        %v1093 = vshra.s32 %v1091, 16
        %v1094 = vcvt.s32.f32 %v1092
        %v1095 = vcvt.s32.f32 %v1093
        %1096 = vmin.xlane.f32.xlu0 %v1095
        %v1097 = vpop.xlane.xlu0 %1096
        %vm1098 = vcmp.eq.f32.partialorder %v1095, %v1097
        %v1099 = vsel %vm1098, %v1094, inf
        %1100 = vmin.xlane.f32.xlu0 %v1099
        %v1101 = vpop.xlane.xlu0 %1100
        %v1102 = vcvt.f32.s32 %v1101
        %v1103 = vcvt.f32.s32 %v1097
        %v1104 = vshll.u32 %v1103, 16
        %v1105 = vadd.s32 %v1104, %v1102
        %vm1106 = vcmp.eq.s32.totalorder %v498, %v1105
        %v1107 = vsel %vm1106, 1, 0
        %v1108 = vcvt.s32.f32 %v1107
        %v1110 = vsel %vm413, %v1108, 0
        %1112 = vmatprep.subr.mxu0 0.0
        %1113 = vmatpush1.msra.mxu0 0.0
        %1114 = vmatprep.subr.mxu0 0.0
        %1115 = vmatpush1.msra.mxu0 0.0
        %1116 = vmatprep.subr.mxu0 0.0
        %1117 = vmatpush1.msra.mxu0 0.0
        %1118 = vmatprep.subr.mxu0 0.0
        %1119 = vmatpush1.msra.mxu0 0.0
        %1120 = vmatprep.subr.mxu0 0.0
        %1121 = vmatpush1.msra.mxu0 0.0
        %1122 = vmatprep.subr.mxu0 0.0
        %1123 = vmatpush1.msra.mxu0 0.0
        %1124 = vmatprep.subr.mxu0 0.0
        %1125 = vmatpush1.msra.mxu0 0.0
        %1126 = vmatprep.subr.mxu0 0.0
        %1127 = vmatpush1.msra.mxu0 0.0
        %1128 = vmatprep.subr.mxu0 0.0
        %1129 = vmatpush1.msra.mxu0 0.0
        %1130 = vmatprep.subr.mxu0 0.0
        %1131 = vmatpush1.msra.mxu0 0.0
        %1132 = vmatprep.subr.mxu0 0.0
        %1133 = vmatpush1.msra.mxu0 0.0
        %1134 = vmatprep.subr.mxu0 0.0
        %1135 = vmatpush1.msra.mxu0 0.0
        %1136 = vmatprep.subr.mxu0 0.0
        %1137 = vmatpush1.msra.mxu0 %v411
        %1138 = vmatprep.subr.mxu0 0.0
        %1139 = vmatpush1.msra.mxu0 %v410
        %1140 = vmatprep.subr.mxu0 0.0
        %1141 = vmatpush1.msra.mxu0 %v409
        %1142 = vmatprep.subr.mxu0 0.0
        %1143 = vmatpush1.msra.mxu0 %v408
        %1144 = vmatprep.subr.mxu0 0.0
        %1145 = vmatpush2.msra.mxu0 0.0
        %1146 = vmatprep.subr.mxu0 0.0
        %1147 = vmatpush2.msra.mxu0 0.0
        %1148 = vmatprep.subr.mxu0 0.0
        %1149 = vmatpush2.msra.mxu0 0.0
        %1150 = vmatprep.subr.mxu0 0.0
        %1151 = vmatpush2.msra.mxu0 0.0
        %1152 = vmatprep.subr.mxu0 0.0
        %1153 = vmatpush2.msra.mxu0 0.0
        %1154 = vmatprep.subr.mxu0 0.0
        %1155 = vmatpush2.msra.mxu0 0.0
        %1156 = vmatprep.subr.mxu0 0.0
        %1157 = vmatpush2.msra.mxu0 0.0
        %1158 = vmatprep.subr.mxu0 0.0
        %1159 = vmatpush2.msra.mxu0 0.0
        %1160 = vmatprep.subr.mxu0 0.0
        %1161 = vmatpush2.msra.mxu0 0.0
        %1162 = vmatprep.subr.mxu0 0.0
        %1163 = vmatpush2.msra.mxu0 0.0
        %1164 = vmatprep.subr.mxu0 0.0
        %1165 = vmatpush2.msra.mxu0 0.0
        %1166 = vmatprep.subr.mxu0 0.0
        %1167 = vmatpush2.msra.mxu0 0.0
        %1168 = vmatprep.subr.mxu0 0.0
        %1169 = vmatpush2.msra.mxu0 0.0
        %1170 = vmatprep.subr.mxu0 0.0
        %1171 = vmatpush2.msra.mxu0 0.0
        %1172 = vmatprep.subr.mxu0 0.0
        %1173 = vmatpush2.msra.mxu0 0.0
        %1174 = vmatprep.subr.mxu0 0.0
        %1175 = vmatpush2.msra.mxu0 0.0
        %1176 = vmatprep.mubr.f32.mxu0 0.0
        %1177 = vmatmul.mubr.f32.gmra.mxu0 %v1110
        %v1178 = vpop.f32.mrf.mxu0
        %v1179 = vadd.f32 0.0, %v1178
        %v1180 = vpop.f32.mrf.mxu0
        %1181 = vdwg.mxu0
        %v1182 = vmax.f32 %v1084, %v1179
        %v1183 = vsel %vm1106, 3.4e+38, %v1085
        %v1184 = vsel %vm413, %v1183, inf
        %1185 = vmin.xlane.f32.xlu0 %v1184
        %v1186 = vpop.xlane.xlu0 %1185
        %vm1187 = vcmp.le.f32.partialorder %v1183, %v1186
        %v1188 = vsel %vm1187, %v498, 32
        %v1189 = vsel %vm413, %v1188, 2147483647
        %v1190 = vand.u32 %v1189, 65535
        %v1191 = vshra.s32 %v1189, 16
        %v1192 = vcvt.s32.f32 %v1190
        %v1193 = vcvt.s32.f32 %v1191
        %1194 = vmin.xlane.f32.xlu0 %v1193
        %v1195 = vpop.xlane.xlu0 %1194
        %vm1196 = vcmp.eq.f32.partialorder %v1193, %v1195
        %v1197 = vsel %vm1196, %v1192, inf
        %1198 = vmin.xlane.f32.xlu0 %v1197
        %v1199 = vpop.xlane.xlu0 %1198
        %v1200 = vcvt.f32.s32 %v1199
        %v1201 = vcvt.f32.s32 %v1195
        %v1202 = vshll.u32 %v1201, 16
        %v1203 = vadd.s32 %v1202, %v1200
        %vm1204 = vcmp.eq.s32.totalorder %v498, %v1203
        %v1205 = vsel %vm1204, 1, 0
        %v1206 = vcvt.s32.f32 %v1205
        %v1208 = vsel %vm413, %v1206, 0
        %1210 = vmatprep.subr.mxu0 0.0
        %1211 = vmatpush1.msra.mxu0 0.0
        %1212 = vmatprep.subr.mxu0 0.0
        %1213 = vmatpush1.msra.mxu0 0.0
        %1214 = vmatprep.subr.mxu0 0.0
        %1215 = vmatpush1.msra.mxu0 0.0
        %1216 = vmatprep.subr.mxu0 0.0
        %1217 = vmatpush1.msra.mxu0 0.0
        %1218 = vmatprep.subr.mxu0 0.0
        %1219 = vmatpush1.msra.mxu0 0.0
        %1220 = vmatprep.subr.mxu0 0.0
        %1221 = vmatpush1.msra.mxu0 0.0
        %1222 = vmatprep.subr.mxu0 0.0
        %1223 = vmatpush1.msra.mxu0 0.0
        %1224 = vmatprep.subr.mxu0 0.0
        %1225 = vmatpush1.msra.mxu0 0.0
        %1226 = vmatprep.subr.mxu0 0.0
        %1227 = vmatpush1.msra.mxu0 0.0
        %1228 = vmatprep.subr.mxu0 0.0
        %1229 = vmatpush1.msra.mxu0 0.0
        %1230 = vmatprep.subr.mxu0 0.0
        %1231 = vmatpush1.msra.mxu0 0.0
        %1232 = vmatprep.subr.mxu0 0.0
        %1233 = vmatpush1.msra.mxu0 0.0
        %1234 = vmatprep.subr.mxu0 0.0
        %1235 = vmatpush1.msra.mxu0 %v411
        %1236 = vmatprep.subr.mxu0 0.0
        %1237 = vmatpush1.msra.mxu0 %v410
        %1238 = vmatprep.subr.mxu0 0.0
        %1239 = vmatpush1.msra.mxu0 %v409
        %1240 = vmatprep.subr.mxu0 0.0
        %1241 = vmatpush1.msra.mxu0 %v408
        %1242 = vmatprep.subr.mxu0 0.0
        %1243 = vmatpush2.msra.mxu0 0.0
        %1244 = vmatprep.subr.mxu0 0.0
        %1245 = vmatpush2.msra.mxu0 0.0
        %1246 = vmatprep.subr.mxu0 0.0
        %1247 = vmatpush2.msra.mxu0 0.0
        %1248 = vmatprep.subr.mxu0 0.0
        %1249 = vmatpush2.msra.mxu0 0.0
        %1250 = vmatprep.subr.mxu0 0.0
        %1251 = vmatpush2.msra.mxu0 0.0
        %1252 = vmatprep.subr.mxu0 0.0
        %1253 = vmatpush2.msra.mxu0 0.0
        %1254 = vmatprep.subr.mxu0 0.0
        %1255 = vmatpush2.msra.mxu0 0.0
        %1256 = vmatprep.subr.mxu0 0.0
        %1257 = vmatpush2.msra.mxu0 0.0
        %1258 = vmatprep.subr.mxu0 0.0
        %1259 = vmatpush2.msra.mxu0 0.0
        %1260 = vmatprep.subr.mxu0 0.0
        %1261 = vmatpush2.msra.mxu0 0.0
        %1262 = vmatprep.subr.mxu0 0.0
        %1263 = vmatpush2.msra.mxu0 0.0
        %1264 = vmatprep.subr.mxu0 0.0
        %1265 = vmatpush2.msra.mxu0 0.0
        %1266 = vmatprep.subr.mxu0 0.0
        %1267 = vmatpush2.msra.mxu0 0.0
        %1268 = vmatprep.subr.mxu0 0.0
        %1269 = vmatpush2.msra.mxu0 0.0
        %1270 = vmatprep.subr.mxu0 0.0
        %1271 = vmatpush2.msra.mxu0 0.0
        %1272 = vmatprep.subr.mxu0 0.0
        %1273 = vmatpush2.msra.mxu0 0.0
        %1274 = vmatprep.mubr.f32.mxu0 0.0
        %1275 = vmatmul.mubr.f32.gmra.mxu0 %v1208
        %v1276 = vpop.f32.mrf.mxu0
        %v1277 = vadd.f32 0.0, %v1276
        %v1278 = vpop.f32.mrf.mxu0
        %1279 = vdwg.mxu0
        %v1280 = vmax.f32 %v1182, %v1277
        %v1281 = vsel %vm1204, 3.4e+38, %v1183
        %v1282 = vsel %vm413, %v1281, inf
        %1283 = vmin.xlane.f32.xlu0 %v1282
        %v1284 = vpop.xlane.xlu0 %1283
        %vm1285 = vcmp.le.f32.partialorder %v1281, %v1284
        %v1286 = vsel %vm1285, %v498, 32
        %v1287 = vsel %vm413, %v1286, 2147483647
        %v1288 = vand.u32 %v1287, 65535
        %v1289 = vshra.s32 %v1287, 16
        %v1290 = vcvt.s32.f32 %v1288
        %v1291 = vcvt.s32.f32 %v1289
        %1292 = vmin.xlane.f32.xlu0 %v1291
        %v1293 = vpop.xlane.xlu0 %1292
        %vm1294 = vcmp.eq.f32.partialorder %v1291, %v1293
        %v1295 = vsel %vm1294, %v1290, inf
        %1296 = vmin.xlane.f32.xlu0 %v1295
        %v1297 = vpop.xlane.xlu0 %1296
        %v1298 = vcvt.f32.s32 %v1297
        %v1299 = vcvt.f32.s32 %v1293
        %v1300 = vshll.u32 %v1299, 16
        %v1301 = vadd.s32 %v1300, %v1298
        %vm1302 = vcmp.eq.s32.totalorder %v498, %v1301
        %v1303 = vsel %vm1302, 1, 0
        %v1304 = vcvt.s32.f32 %v1303
        %v1306 = vsel %vm413, %v1304, 0
        %1308 = vmatprep.subr.mxu0 0.0
        %1309 = vmatpush1.msra.mxu0 0.0
        %1310 = vmatprep.subr.mxu0 0.0
        %1311 = vmatpush1.msra.mxu0 0.0
        %1312 = vmatprep.subr.mxu0 0.0
        %1313 = vmatpush1.msra.mxu0 0.0
        %1314 = vmatprep.subr.mxu0 0.0
        %1315 = vmatpush1.msra.mxu0 0.0
        %1316 = vmatprep.subr.mxu0 0.0
        %1317 = vmatpush1.msra.mxu0 0.0
        %1318 = vmatprep.subr.mxu0 0.0
        %1319 = vmatpush1.msra.mxu0 0.0
        %1320 = vmatprep.subr.mxu0 0.0
        %1321 = vmatpush1.msra.mxu0 0.0
        %1322 = vmatprep.subr.mxu0 0.0
        %1323 = vmatpush1.msra.mxu0 0.0
        %1324 = vmatprep.subr.mxu0 0.0
        %1325 = vmatpush1.msra.mxu0 0.0
        %1326 = vmatprep.subr.mxu0 0.0
        %1327 = vmatpush1.msra.mxu0 0.0
        %1328 = vmatprep.subr.mxu0 0.0
        %1329 = vmatpush1.msra.mxu0 0.0
        %1330 = vmatprep.subr.mxu0 0.0
        %1331 = vmatpush1.msra.mxu0 0.0
        %1332 = vmatprep.subr.mxu0 0.0
        %1333 = vmatpush1.msra.mxu0 %v411
        %1334 = vmatprep.subr.mxu0 0.0
        %1335 = vmatpush1.msra.mxu0 %v410
        %1336 = vmatprep.subr.mxu0 0.0
        %1337 = vmatpush1.msra.mxu0 %v409
        %1338 = vmatprep.subr.mxu0 0.0
        %1339 = vmatpush1.msra.mxu0 %v408
        %1340 = vmatprep.subr.mxu0 0.0
        %1341 = vmatpush2.msra.mxu0 0.0
        %1342 = vmatprep.subr.mxu0 0.0
        %1343 = vmatpush2.msra.mxu0 0.0
        %1344 = vmatprep.subr.mxu0 0.0
        %1345 = vmatpush2.msra.mxu0 0.0
        %1346 = vmatprep.subr.mxu0 0.0
        %1347 = vmatpush2.msra.mxu0 0.0
        %1348 = vmatprep.subr.mxu0 0.0
        %1349 = vmatpush2.msra.mxu0 0.0
        %1350 = vmatprep.subr.mxu0 0.0
        %1351 = vmatpush2.msra.mxu0 0.0
        %1352 = vmatprep.subr.mxu0 0.0
        %1353 = vmatpush2.msra.mxu0 0.0
        %1354 = vmatprep.subr.mxu0 0.0
        %1355 = vmatpush2.msra.mxu0 0.0
        %1356 = vmatprep.subr.mxu0 0.0
        %1357 = vmatpush2.msra.mxu0 0.0
        %1358 = vmatprep.subr.mxu0 0.0
        %1359 = vmatpush2.msra.mxu0 0.0
        %1360 = vmatprep.subr.mxu0 0.0
        %1361 = vmatpush2.msra.mxu0 0.0
        %1362 = vmatprep.subr.mxu0 0.0
        %1363 = vmatpush2.msra.mxu0 0.0
        %1364 = vmatprep.subr.mxu0 0.0
        %1365 = vmatpush2.msra.mxu0 0.0
        %1366 = vmatprep.subr.mxu0 0.0
        %1367 = vmatpush2.msra.mxu0 0.0
        %1368 = vmatprep.subr.mxu0 0.0
        %1369 = vmatpush2.msra.mxu0 0.0
        %1370 = vmatprep.subr.mxu0 0.0
        %1371 = vmatpush2.msra.mxu0 0.0
        %1372 = vmatprep.mubr.f32.mxu0 0.0
        %1373 = vmatmul.mubr.f32.gmra.mxu0 %v1306
        %v1374 = vpop.f32.mrf.mxu0
        %v1375 = vadd.f32 0.0, %v1374
        %v1376 = vpop.f32.mrf.mxu0
        %1377 = vdwg.mxu0
        %v1378 = vmax.f32 %v1280, %v1375
        %v1379 = vsel %vm1302, 3.4e+38, %v1281
        %v1380 = vsel %vm413, %v1379, inf
        %1381 = vmin.xlane.f32.xlu0 %v1380
        %v1382 = vpop.xlane.xlu0 %1381
        %vm1383 = vcmp.le.f32.partialorder %v1379, %v1382
        %v1384 = vsel %vm1383, %v498, 32
        %v1385 = vsel %vm413, %v1384, 2147483647
        %v1386 = vand.u32 %v1385, 65535
        %v1387 = vshra.s32 %v1385, 16
        %v1388 = vcvt.s32.f32 %v1386
        %v1389 = vcvt.s32.f32 %v1387
        %1390 = vmin.xlane.f32.xlu0 %v1389
        %v1391 = vpop.xlane.xlu0 %1390
        %vm1392 = vcmp.eq.f32.partialorder %v1389, %v1391
        %v1393 = vsel %vm1392, %v1388, inf
        %1394 = vmin.xlane.f32.xlu0 %v1393
        %v1395 = vpop.xlane.xlu0 %1394
        %v1396 = vcvt.f32.s32 %v1395
        %v1397 = vcvt.f32.s32 %v1391
        %v1398 = vshll.u32 %v1397, 16
        %v1399 = vadd.s32 %v1398, %v1396
        %vm1400 = vcmp.eq.s32.totalorder %v498, %v1399
        %v1401 = vsel %vm1400, 1, 0
        %v1402 = vcvt.s32.f32 %v1401
        %v1404 = vsel %vm413, %v1402, 0
        %1406 = vmatprep.subr.mxu0 0.0
        %1407 = vmatpush1.msra.mxu0 0.0
        %1408 = vmatprep.subr.mxu0 0.0
        %1409 = vmatpush1.msra.mxu0 0.0
        %1410 = vmatprep.subr.mxu0 0.0
        %1411 = vmatpush1.msra.mxu0 0.0
        %1412 = vmatprep.subr.mxu0 0.0
        %1413 = vmatpush1.msra.mxu0 0.0
        %1414 = vmatprep.subr.mxu0 0.0
        %1415 = vmatpush1.msra.mxu0 0.0
        %1416 = vmatprep.subr.mxu0 0.0
        %1417 = vmatpush1.msra.mxu0 0.0
        %1418 = vmatprep.subr.mxu0 0.0
        %1419 = vmatpush1.msra.mxu0 0.0
        %1420 = vmatprep.subr.mxu0 0.0
        %1421 = vmatpush1.msra.mxu0 0.0
        %1422 = vmatprep.subr.mxu0 0.0
        %1423 = vmatpush1.msra.mxu0 0.0
        %1424 = vmatprep.subr.mxu0 0.0
        %1425 = vmatpush1.msra.mxu0 0.0
        %1426 = vmatprep.subr.mxu0 0.0
        %1427 = vmatpush1.msra.mxu0 0.0
        %1428 = vmatprep.subr.mxu0 0.0
        %1429 = vmatpush1.msra.mxu0 0.0
        %1430 = vmatprep.subr.mxu0 0.0
        %1431 = vmatpush1.msra.mxu0 %v411
        %1432 = vmatprep.subr.mxu0 0.0
        %1433 = vmatpush1.msra.mxu0 %v410
        %1434 = vmatprep.subr.mxu0 0.0
        %1435 = vmatpush1.msra.mxu0 %v409
        %1436 = vmatprep.subr.mxu0 0.0
        %1437 = vmatpush1.msra.mxu0 %v408
        %1438 = vmatprep.subr.mxu0 0.0
        %1439 = vmatpush2.msra.mxu0 0.0
        %1440 = vmatprep.subr.mxu0 0.0
        %1441 = vmatpush2.msra.mxu0 0.0
        %1442 = vmatprep.subr.mxu0 0.0
        %1443 = vmatpush2.msra.mxu0 0.0
        %1444 = vmatprep.subr.mxu0 0.0
        %1445 = vmatpush2.msra.mxu0 0.0
        %1446 = vmatprep.subr.mxu0 0.0
        %1447 = vmatpush2.msra.mxu0 0.0
        %1448 = vmatprep.subr.mxu0 0.0
        %1449 = vmatpush2.msra.mxu0 0.0
        %1450 = vmatprep.subr.mxu0 0.0
        %1451 = vmatpush2.msra.mxu0 0.0
        %1452 = vmatprep.subr.mxu0 0.0
        %1453 = vmatpush2.msra.mxu0 0.0
        %1454 = vmatprep.subr.mxu0 0.0
        %1455 = vmatpush2.msra.mxu0 0.0
        %1456 = vmatprep.subr.mxu0 0.0
        %1457 = vmatpush2.msra.mxu0 0.0
        %1458 = vmatprep.subr.mxu0 0.0
        %1459 = vmatpush2.msra.mxu0 0.0
        %1460 = vmatprep.subr.mxu0 0.0
        %1461 = vmatpush2.msra.mxu0 0.0
        %1462 = vmatprep.subr.mxu0 0.0
        %1463 = vmatpush2.msra.mxu0 0.0
        %1464 = vmatprep.subr.mxu0 0.0
        %1465 = vmatpush2.msra.mxu0 0.0
        %1466 = vmatprep.subr.mxu0 0.0
        %1467 = vmatpush2.msra.mxu0 0.0
        %1468 = vmatprep.subr.mxu0 0.0
        %1469 = vmatpush2.msra.mxu0 0.0
        %1470 = vmatprep.mubr.f32.mxu0 0.0
        %1471 = vmatmul.mubr.f32.gmra.mxu0 %v1404
        %v1472 = vpop.f32.mrf.mxu0
        %v1473 = vadd.f32 0.0, %v1472
        %v1474 = vpop.f32.mrf.mxu0
        %1475 = vdwg.mxu0
        %v1476 = vmax.f32 %v1378, %v1473
        %v1477 = vsel %vm1400, 3.4e+38, %v1379
        %v1478 = vsel %vm413, %v1477, inf
        %1479 = vmin.xlane.f32.xlu0 %v1478
        %v1480 = vpop.xlane.xlu0 %1479
        %vm1481 = vcmp.le.f32.partialorder %v1477, %v1480
        %v1482 = vsel %vm1481, %v498, 32
        %v1483 = vsel %vm413, %v1482, 2147483647
        %v1484 = vand.u32 %v1483, 65535
        %v1485 = vshra.s32 %v1483, 16
        %v1486 = vcvt.s32.f32 %v1484
        %v1487 = vcvt.s32.f32 %v1485
        %1488 = vmin.xlane.f32.xlu0 %v1487
        %v1489 = vpop.xlane.xlu0 %1488
        %vm1490 = vcmp.eq.f32.partialorder %v1487, %v1489
        %v1491 = vsel %vm1490, %v1486, inf
        %1492 = vmin.xlane.f32.xlu0 %v1491
        %v1493 = vpop.xlane.xlu0 %1492
        %v1494 = vcvt.f32.s32 %v1493
        %v1495 = vcvt.f32.s32 %v1489
        %v1496 = vshll.u32 %v1495, 16
        %v1497 = vadd.s32 %v1496, %v1494
        %vm1498 = vcmp.eq.s32.totalorder %v498, %v1497
        %v1499 = vsel %vm1498, 1, 0
        %v1500 = vcvt.s32.f32 %v1499
        %v1502 = vsel %vm413, %v1500, 0
        %1504 = vmatprep.subr.mxu0 0.0
        %1505 = vmatpush1.msra.mxu0 0.0
        %1506 = vmatprep.subr.mxu0 0.0
        %1507 = vmatpush1.msra.mxu0 0.0
        %1508 = vmatprep.subr.mxu0 0.0
        %1509 = vmatpush1.msra.mxu0 0.0
        %1510 = vmatprep.subr.mxu0 0.0
        %1511 = vmatpush1.msra.mxu0 0.0
        %1512 = vmatprep.subr.mxu0 0.0
        %1513 = vmatpush1.msra.mxu0 0.0
        %1514 = vmatprep.subr.mxu0 0.0
        %1515 = vmatpush1.msra.mxu0 0.0
        %1516 = vmatprep.subr.mxu0 0.0
        %1517 = vmatpush1.msra.mxu0 0.0
        %1518 = vmatprep.subr.mxu0 0.0
        %1519 = vmatpush1.msra.mxu0 0.0
        %1520 = vmatprep.subr.mxu0 0.0
        %1521 = vmatpush1.msra.mxu0 0.0
        %1522 = vmatprep.subr.mxu0 0.0
        %1523 = vmatpush1.msra.mxu0 0.0
        %1524 = vmatprep.subr.mxu0 0.0
        %1525 = vmatpush1.msra.mxu0 0.0
        %1526 = vmatprep.subr.mxu0 0.0
        %1527 = vmatpush1.msra.mxu0 0.0
        %1528 = vmatprep.subr.mxu0 0.0
        %1529 = vmatpush1.msra.mxu0 %v411
        %1530 = vmatprep.subr.mxu0 0.0
        %1531 = vmatpush1.msra.mxu0 %v410
        %1532 = vmatprep.subr.mxu0 0.0
        %1533 = vmatpush1.msra.mxu0 %v409
        %1534 = vmatprep.subr.mxu0 0.0
        %1535 = vmatpush1.msra.mxu0 %v408
        %1536 = vmatprep.subr.mxu0 0.0
        %1537 = vmatpush2.msra.mxu0 0.0
        %1538 = vmatprep.subr.mxu0 0.0
        %1539 = vmatpush2.msra.mxu0 0.0
        %1540 = vmatprep.subr.mxu0 0.0
        %1541 = vmatpush2.msra.mxu0 0.0
        %1542 = vmatprep.subr.mxu0 0.0
        %1543 = vmatpush2.msra.mxu0 0.0
        %1544 = vmatprep.subr.mxu0 0.0
        %1545 = vmatpush2.msra.mxu0 0.0
        %1546 = vmatprep.subr.mxu0 0.0
        %1547 = vmatpush2.msra.mxu0 0.0
        %1548 = vmatprep.subr.mxu0 0.0
        %1549 = vmatpush2.msra.mxu0 0.0
        %1550 = vmatprep.subr.mxu0 0.0
        %1551 = vmatpush2.msra.mxu0 0.0
        %1552 = vmatprep.subr.mxu0 0.0
        %1553 = vmatpush2.msra.mxu0 0.0
        %1554 = vmatprep.subr.mxu0 0.0
        %1555 = vmatpush2.msra.mxu0 0.0
        %1556 = vmatprep.subr.mxu0 0.0
        %1557 = vmatpush2.msra.mxu0 0.0
        %1558 = vmatprep.subr.mxu0 0.0
        %1559 = vmatpush2.msra.mxu0 0.0
        %1560 = vmatprep.subr.mxu0 0.0
        %1561 = vmatpush2.msra.mxu0 0.0
        %1562 = vmatprep.subr.mxu0 0.0
        %1563 = vmatpush2.msra.mxu0 0.0
        %1564 = vmatprep.subr.mxu0 0.0
        %1565 = vmatpush2.msra.mxu0 0.0
        %1566 = vmatprep.subr.mxu0 0.0
        %1567 = vmatpush2.msra.mxu0 0.0
        %1568 = vmatprep.mubr.f32.mxu0 0.0
        %1569 = vmatmul.mubr.f32.gmra.mxu0 %v1502
        %v1570 = vpop.f32.mrf.mxu0
        %v1571 = vadd.f32 0.0, %v1570
        %v1572 = vpop.f32.mrf.mxu0
        %1573 = vdwg.mxu0
        %v1574 = vmax.f32 %v1476, %v1571
        %v1575 = vsel %vm1498, 3.4e+38, %v1477
        %v1576 = vsel %vm413, %v1575, inf
        %1577 = vmin.xlane.f32.xlu0 %v1576
        %v1578 = vpop.xlane.xlu0 %1577
        %vm1579 = vcmp.le.f32.partialorder %v1575, %v1578
        %v1580 = vsel %vm1579, %v498, 32
        %v1581 = vsel %vm413, %v1580, 2147483647
        %v1582 = vand.u32 %v1581, 65535
        %v1583 = vshra.s32 %v1581, 16
        %v1584 = vcvt.s32.f32 %v1582
        %v1585 = vcvt.s32.f32 %v1583
        %1586 = vmin.xlane.f32.xlu0 %v1585
        %v1587 = vpop.xlane.xlu0 %1586
        %vm1588 = vcmp.eq.f32.partialorder %v1585, %v1587
        %v1589 = vsel %vm1588, %v1584, inf
        %1590 = vmin.xlane.f32.xlu0 %v1589
        %v1591 = vpop.xlane.xlu0 %1590
        %v1592 = vcvt.f32.s32 %v1591
        %v1593 = vcvt.f32.s32 %v1587
        %v1594 = vshll.u32 %v1593, 16
        %v1595 = vadd.s32 %v1594, %v1592
        %vm1596 = vcmp.eq.s32.totalorder %v498, %v1595
        %v1597 = vsel %vm1596, 1, 0
        %v1598 = vcvt.s32.f32 %v1597
        %v1600 = vsel %vm413, %v1598, 0
        %1602 = vmatprep.subr.mxu0 0.0
        %1603 = vmatpush1.msra.mxu0 0.0
        %1604 = vmatprep.subr.mxu0 0.0
        %1605 = vmatpush1.msra.mxu0 0.0
        %1606 = vmatprep.subr.mxu0 0.0
        %1607 = vmatpush1.msra.mxu0 0.0
        %1608 = vmatprep.subr.mxu0 0.0
        %1609 = vmatpush1.msra.mxu0 0.0
        %1610 = vmatprep.subr.mxu0 0.0
        %1611 = vmatpush1.msra.mxu0 0.0
        %1612 = vmatprep.subr.mxu0 0.0
        %1613 = vmatpush1.msra.mxu0 0.0
        %1614 = vmatprep.subr.mxu0 0.0
        %1615 = vmatpush1.msra.mxu0 0.0
        %1616 = vmatprep.subr.mxu0 0.0
        %1617 = vmatpush1.msra.mxu0 0.0
        %1618 = vmatprep.subr.mxu0 0.0
        %1619 = vmatpush1.msra.mxu0 0.0
        %1620 = vmatprep.subr.mxu0 0.0
        %1621 = vmatpush1.msra.mxu0 0.0
        %1622 = vmatprep.subr.mxu0 0.0
        %1623 = vmatpush1.msra.mxu0 0.0
        %1624 = vmatprep.subr.mxu0 0.0
        %1625 = vmatpush1.msra.mxu0 0.0
        %1626 = vmatprep.subr.mxu0 0.0
        %1627 = vmatpush1.msra.mxu0 %v411
        %1628 = vmatprep.subr.mxu0 0.0
        %1629 = vmatpush1.msra.mxu0 %v410
        %1630 = vmatprep.subr.mxu0 0.0
        %1631 = vmatpush1.msra.mxu0 %v409
        %1632 = vmatprep.subr.mxu0 0.0
        %1633 = vmatpush1.msra.mxu0 %v408
        %1634 = vmatprep.subr.mxu0 0.0
        %1635 = vmatpush2.msra.mxu0 0.0
        %1636 = vmatprep.subr.mxu0 0.0
        %1637 = vmatpush2.msra.mxu0 0.0
        %1638 = vmatprep.subr.mxu0 0.0
        %1639 = vmatpush2.msra.mxu0 0.0
        %1640 = vmatprep.subr.mxu0 0.0
        %1641 = vmatpush2.msra.mxu0 0.0
        %1642 = vmatprep.subr.mxu0 0.0
        %1643 = vmatpush2.msra.mxu0 0.0
        %1644 = vmatprep.subr.mxu0 0.0
        %1645 = vmatpush2.msra.mxu0 0.0
        %1646 = vmatprep.subr.mxu0 0.0
        %1647 = vmatpush2.msra.mxu0 0.0
        %1648 = vmatprep.subr.mxu0 0.0
        %1649 = vmatpush2.msra.mxu0 0.0
        %1650 = vmatprep.subr.mxu0 0.0
        %1651 = vmatpush2.msra.mxu0 0.0
        %1652 = vmatprep.subr.mxu0 0.0
        %1653 = vmatpush2.msra.mxu0 0.0
        %1654 = vmatprep.subr.mxu0 0.0
        %1655 = vmatpush2.msra.mxu0 0.0
        %1656 = vmatprep.subr.mxu0 0.0
        %1657 = vmatpush2.msra.mxu0 0.0
        %1658 = vmatprep.subr.mxu0 0.0
        %1659 = vmatpush2.msra.mxu0 0.0
        %1660 = vmatprep.subr.mxu0 0.0
        %1661 = vmatpush2.msra.mxu0 0.0
        %1662 = vmatprep.subr.mxu0 0.0
        %1663 = vmatpush2.msra.mxu0 0.0
        %1664 = vmatprep.subr.mxu0 0.0
        %1665 = vmatpush2.msra.mxu0 0.0
        %1666 = vmatprep.mubr.f32.mxu0 0.0
        %1667 = vmatmul.mubr.f32.gmra.mxu0 %v1600
        %v1668 = vpop.f32.mrf.mxu0
        %v1669 = vadd.f32 0.0, %v1668
        %v1670 = vpop.f32.mrf.mxu0
        %1671 = vdwg.mxu0
        %v1672 = vmax.f32 %v1574, %v1669
        %v1673 = vsel %vm1596, 3.4e+38, %v1575
        %v1674 = vsel %vm413, %v1673, inf
        %1675 = vmin.xlane.f32.xlu0 %v1674
        %v1676 = vpop.xlane.xlu0 %1675
        %vm1677 = vcmp.le.f32.partialorder %v1673, %v1676
        %v1678 = vsel %vm1677, %v498, 32
        %v1679 = vsel %vm413, %v1678, 2147483647
        %v1680 = vand.u32 %v1679, 65535
        %v1681 = vshra.s32 %v1679, 16
        %v1682 = vcvt.s32.f32 %v1680
        %v1683 = vcvt.s32.f32 %v1681
        %1684 = vmin.xlane.f32.xlu0 %v1683
        %v1685 = vpop.xlane.xlu0 %1684
        %vm1686 = vcmp.eq.f32.partialorder %v1683, %v1685
        %v1687 = vsel %vm1686, %v1682, inf
        %1688 = vmin.xlane.f32.xlu0 %v1687
        %v1689 = vpop.xlane.xlu0 %1688
        %v1690 = vcvt.f32.s32 %v1689
        %v1691 = vcvt.f32.s32 %v1685
        %v1692 = vshll.u32 %v1691, 16
        %v1693 = vadd.s32 %v1692, %v1690
        %vm1694 = vcmp.eq.s32.totalorder %v498, %v1693
        %v1695 = vsel %vm1694, 1, 0
        %v1696 = vcvt.s32.f32 %v1695
        %v1698 = vsel %vm413, %v1696, 0
        %1700 = vmatprep.subr.mxu0 0.0
        %1701 = vmatpush1.msra.mxu0 0.0
        %1702 = vmatprep.subr.mxu0 0.0
        %1703 = vmatpush1.msra.mxu0 0.0
        %1704 = vmatprep.subr.mxu0 0.0
        %1705 = vmatpush1.msra.mxu0 0.0
        %1706 = vmatprep.subr.mxu0 0.0
        %1707 = vmatpush1.msra.mxu0 0.0
        %1708 = vmatprep.subr.mxu0 0.0
        %1709 = vmatpush1.msra.mxu0 0.0
        %1710 = vmatprep.subr.mxu0 0.0
        %1711 = vmatpush1.msra.mxu0 0.0
        %1712 = vmatprep.subr.mxu0 0.0
        %1713 = vmatpush1.msra.mxu0 0.0
        %1714 = vmatprep.subr.mxu0 0.0
        %1715 = vmatpush1.msra.mxu0 0.0
        %1716 = vmatprep.subr.mxu0 0.0
        %1717 = vmatpush1.msra.mxu0 0.0
        %1718 = vmatprep.subr.mxu0 0.0
        %1719 = vmatpush1.msra.mxu0 0.0
        %1720 = vmatprep.subr.mxu0 0.0
        %1721 = vmatpush1.msra.mxu0 0.0
        %1722 = vmatprep.subr.mxu0 0.0
        %1723 = vmatpush1.msra.mxu0 0.0
        %1724 = vmatprep.subr.mxu0 0.0
        %1725 = vmatpush1.msra.mxu0 %v411
        %1726 = vmatprep.subr.mxu0 0.0
        %1727 = vmatpush1.msra.mxu0 %v410
        %1728 = vmatprep.subr.mxu0 0.0
        %1729 = vmatpush1.msra.mxu0 %v409
        %1730 = vmatprep.subr.mxu0 0.0
        %1731 = vmatpush1.msra.mxu0 %v408
        %1732 = vmatprep.subr.mxu0 0.0
        %1733 = vmatpush2.msra.mxu0 0.0
        %1734 = vmatprep.subr.mxu0 0.0
        %1735 = vmatpush2.msra.mxu0 0.0
        %1736 = vmatprep.subr.mxu0 0.0
        %1737 = vmatpush2.msra.mxu0 0.0
        %1738 = vmatprep.subr.mxu0 0.0
        %1739 = vmatpush2.msra.mxu0 0.0
        %1740 = vmatprep.subr.mxu0 0.0
        %1741 = vmatpush2.msra.mxu0 0.0
        %1742 = vmatprep.subr.mxu0 0.0
        %1743 = vmatpush2.msra.mxu0 0.0
        %1744 = vmatprep.subr.mxu0 0.0
        %1745 = vmatpush2.msra.mxu0 0.0
        %1746 = vmatprep.subr.mxu0 0.0
        %1747 = vmatpush2.msra.mxu0 0.0
        %1748 = vmatprep.subr.mxu0 0.0
        %1749 = vmatpush2.msra.mxu0 0.0
        %1750 = vmatprep.subr.mxu0 0.0
        %1751 = vmatpush2.msra.mxu0 0.0
        %1752 = vmatprep.subr.mxu0 0.0
        %1753 = vmatpush2.msra.mxu0 0.0
        %1754 = vmatprep.subr.mxu0 0.0
        %1755 = vmatpush2.msra.mxu0 0.0
        %1756 = vmatprep.subr.mxu0 0.0
        %1757 = vmatpush2.msra.mxu0 0.0
        %1758 = vmatprep.subr.mxu0 0.0
        %1759 = vmatpush2.msra.mxu0 0.0
        %1760 = vmatprep.subr.mxu0 0.0
        %1761 = vmatpush2.msra.mxu0 0.0
        %1762 = vmatprep.subr.mxu0 0.0
        %1763 = vmatpush2.msra.mxu0 0.0
        %1764 = vmatprep.mubr.f32.mxu0 0.0
        %1765 = vmatmul.mubr.f32.gmra.mxu0 %v1698
        %v1766 = vpop.f32.mrf.mxu0
        %v1767 = vadd.f32 0.0, %v1766
        %v1768 = vpop.f32.mrf.mxu0
        %1769 = vdwg.mxu0
        %v1770 = vmax.f32 %v1672, %v1767
        %v1771 = vsel %vm1694, 3.4e+38, %v1673
        %v1772 = vsel %vm413, %v1771, inf
        %1773 = vmin.xlane.f32.xlu0 %v1772
        %v1774 = vpop.xlane.xlu0 %1773
        %vm1775 = vcmp.le.f32.partialorder %v1771, %v1774
        %v1776 = vsel %vm1775, %v498, 32
        %v1777 = vsel %vm413, %v1776, 2147483647
        %v1778 = vand.u32 %v1777, 65535
        %v1779 = vshra.s32 %v1777, 16
        %v1780 = vcvt.s32.f32 %v1778
        %v1781 = vcvt.s32.f32 %v1779
        %1782 = vmin.xlane.f32.xlu0 %v1781
        %v1783 = vpop.xlane.xlu0 %1782
        %vm1784 = vcmp.eq.f32.partialorder %v1781, %v1783
        %v1785 = vsel %vm1784, %v1780, inf
        %1786 = vmin.xlane.f32.xlu0 %v1785
        %v1787 = vpop.xlane.xlu0 %1786
        %v1788 = vcvt.f32.s32 %v1787
        %v1789 = vcvt.f32.s32 %v1783
        %v1790 = vshll.u32 %v1789, 16
        %v1791 = vadd.s32 %v1790, %v1788
        %vm1792 = vcmp.eq.s32.totalorder %v498, %v1791
        %v1793 = vsel %vm1792, 1, 0
        %v1794 = vcvt.s32.f32 %v1793
        %v1796 = vsel %vm413, %v1794, 0
        %1798 = vmatprep.subr.mxu0 0.0
        %1799 = vmatpush1.msra.mxu0 0.0
        %1800 = vmatprep.subr.mxu0 0.0
        %1801 = vmatpush1.msra.mxu0 0.0
        %1802 = vmatprep.subr.mxu0 0.0
        %1803 = vmatpush1.msra.mxu0 0.0
        %1804 = vmatprep.subr.mxu0 0.0
        %1805 = vmatpush1.msra.mxu0 0.0
        %1806 = vmatprep.subr.mxu0 0.0
        %1807 = vmatpush1.msra.mxu0 0.0
        %1808 = vmatprep.subr.mxu0 0.0
        %1809 = vmatpush1.msra.mxu0 0.0
        %1810 = vmatprep.subr.mxu0 0.0
        %1811 = vmatpush1.msra.mxu0 0.0
        %1812 = vmatprep.subr.mxu0 0.0
        %1813 = vmatpush1.msra.mxu0 0.0
        %1814 = vmatprep.subr.mxu0 0.0
        %1815 = vmatpush1.msra.mxu0 0.0
        %1816 = vmatprep.subr.mxu0 0.0
        %1817 = vmatpush1.msra.mxu0 0.0
        %1818 = vmatprep.subr.mxu0 0.0
        %1819 = vmatpush1.msra.mxu0 0.0
        %1820 = vmatprep.subr.mxu0 0.0
        %1821 = vmatpush1.msra.mxu0 0.0
        %1822 = vmatprep.subr.mxu0 0.0
        %1823 = vmatpush1.msra.mxu0 %v411
        %1824 = vmatprep.subr.mxu0 0.0
        %1825 = vmatpush1.msra.mxu0 %v410
        %1826 = vmatprep.subr.mxu0 0.0
        %1827 = vmatpush1.msra.mxu0 %v409
        %1828 = vmatprep.subr.mxu0 0.0
        %1829 = vmatpush1.msra.mxu0 %v408
        %1830 = vmatprep.subr.mxu0 0.0
        %1831 = vmatpush2.msra.mxu0 0.0
        %1832 = vmatprep.subr.mxu0 0.0
        %1833 = vmatpush2.msra.mxu0 0.0
        %1834 = vmatprep.subr.mxu0 0.0
        %1835 = vmatpush2.msra.mxu0 0.0
        %1836 = vmatprep.subr.mxu0 0.0
        %1837 = vmatpush2.msra.mxu0 0.0
        %1838 = vmatprep.subr.mxu0 0.0
        %1839 = vmatpush2.msra.mxu0 0.0
        %1840 = vmatprep.subr.mxu0 0.0
        %1841 = vmatpush2.msra.mxu0 0.0
        %1842 = vmatprep.subr.mxu0 0.0
        %1843 = vmatpush2.msra.mxu0 0.0
        %1844 = vmatprep.subr.mxu0 0.0
        %1845 = vmatpush2.msra.mxu0 0.0
        %1846 = vmatprep.subr.mxu0 0.0
        %1847 = vmatpush2.msra.mxu0 0.0
        %1848 = vmatprep.subr.mxu0 0.0
        %1849 = vmatpush2.msra.mxu0 0.0
        %1850 = vmatprep.subr.mxu0 0.0
        %1851 = vmatpush2.msra.mxu0 0.0
        %1852 = vmatprep.subr.mxu0 0.0
        %1853 = vmatpush2.msra.mxu0 0.0
        %1854 = vmatprep.subr.mxu0 0.0
        %1855 = vmatpush2.msra.mxu0 0.0
        %1856 = vmatprep.subr.mxu0 0.0
        %1857 = vmatpush2.msra.mxu0 0.0
        %1858 = vmatprep.subr.mxu0 0.0
        %1859 = vmatpush2.msra.mxu0 0.0
        %1860 = vmatprep.subr.mxu0 0.0
        %1861 = vmatpush2.msra.mxu0 0.0
        %1862 = vmatprep.mubr.f32.mxu0 0.0
        %1863 = vmatmul.mubr.f32.gmra.mxu0 %v1796
        %v1864 = vpop.f32.mrf.mxu0
        %v1865 = vadd.f32 0.0, %v1864
        %v1866 = vpop.f32.mrf.mxu0
        %1867 = vdwg.mxu0
        %v1868 = vmax.f32 %v1770, %v1865
        %v1869 = vsel %vm1792, 3.4e+38, %v1771
        %v1870 = vsel %vm413, %v1869, inf
        %1871 = vmin.xlane.f32.xlu0 %v1870
        %v1872 = vpop.xlane.xlu0 %1871
        %vm1873 = vcmp.le.f32.partialorder %v1869, %v1872
        %v1874 = vsel %vm1873, %v498, 32
        %v1875 = vsel %vm413, %v1874, 2147483647
        %v1876 = vand.u32 %v1875, 65535
        %v1877 = vshra.s32 %v1875, 16
        %v1878 = vcvt.s32.f32 %v1876
        %v1879 = vcvt.s32.f32 %v1877
        %1880 = vmin.xlane.f32.xlu0 %v1879
        %v1881 = vpop.xlane.xlu0 %1880
        %vm1882 = vcmp.eq.f32.partialorder %v1879, %v1881
        %v1883 = vsel %vm1882, %v1878, inf
        %1884 = vmin.xlane.f32.xlu0 %v1883
        %v1885 = vpop.xlane.xlu0 %1884
        %v1886 = vcvt.f32.s32 %v1885
        %v1887 = vcvt.f32.s32 %v1881
        %v1888 = vshll.u32 %v1887, 16
        %v1889 = vadd.s32 %v1888, %v1886
        %vm1890 = vcmp.eq.s32.totalorder %v498, %v1889
        %v1891 = vsel %vm1890, 1, 0
        %v1892 = vcvt.s32.f32 %v1891
        %v1894 = vsel %vm413, %v1892, 0
        %1896 = vmatprep.subr.mxu0 0.0
        %1897 = vmatpush1.msra.mxu0 0.0
        %1898 = vmatprep.subr.mxu0 0.0
        %1899 = vmatpush1.msra.mxu0 0.0
        %1900 = vmatprep.subr.mxu0 0.0
        %1901 = vmatpush1.msra.mxu0 0.0
        %1902 = vmatprep.subr.mxu0 0.0
        %1903 = vmatpush1.msra.mxu0 0.0
        %1904 = vmatprep.subr.mxu0 0.0
        %1905 = vmatpush1.msra.mxu0 0.0
        %1906 = vmatprep.subr.mxu0 0.0
        %1907 = vmatpush1.msra.mxu0 0.0
        %1908 = vmatprep.subr.mxu0 0.0
        %1909 = vmatpush1.msra.mxu0 0.0
        %1910 = vmatprep.subr.mxu0 0.0
        %1911 = vmatpush1.msra.mxu0 0.0
        %1912 = vmatprep.subr.mxu0 0.0
        %1913 = vmatpush1.msra.mxu0 0.0
        %1914 = vmatprep.subr.mxu0 0.0
        %1915 = vmatpush1.msra.mxu0 0.0
        %1916 = vmatprep.subr.mxu0 0.0
        %1917 = vmatpush1.msra.mxu0 0.0
        %1918 = vmatprep.subr.mxu0 0.0
        %1919 = vmatpush1.msra.mxu0 0.0
        %1920 = vmatprep.subr.mxu0 0.0
        %1921 = vmatpush1.msra.mxu0 %v411
        %1922 = vmatprep.subr.mxu0 0.0
        %1923 = vmatpush1.msra.mxu0 %v410
        %1924 = vmatprep.subr.mxu0 0.0
        %1925 = vmatpush1.msra.mxu0 %v409
        %1926 = vmatprep.subr.mxu0 0.0
        %1927 = vmatpush1.msra.mxu0 %v408
        %1928 = vmatprep.subr.mxu0 0.0
        %1929 = vmatpush2.msra.mxu0 0.0
        %1930 = vmatprep.subr.mxu0 0.0
        %1931 = vmatpush2.msra.mxu0 0.0
        %1932 = vmatprep.subr.mxu0 0.0
        %1933 = vmatpush2.msra.mxu0 0.0
        %1934 = vmatprep.subr.mxu0 0.0
        %1935 = vmatpush2.msra.mxu0 0.0
        %1936 = vmatprep.subr.mxu0 0.0
        %1937 = vmatpush2.msra.mxu0 0.0
        %1938 = vmatprep.subr.mxu0 0.0
        %1939 = vmatpush2.msra.mxu0 0.0
        %1940 = vmatprep.subr.mxu0 0.0
        %1941 = vmatpush2.msra.mxu0 0.0
        %1942 = vmatprep.subr.mxu0 0.0
        %1943 = vmatpush2.msra.mxu0 0.0
        %1944 = vmatprep.subr.mxu0 0.0
        %1945 = vmatpush2.msra.mxu0 0.0
        %1946 = vmatprep.subr.mxu0 0.0
        %1947 = vmatpush2.msra.mxu0 0.0
        %1948 = vmatprep.subr.mxu0 0.0
        %1949 = vmatpush2.msra.mxu0 0.0
        %1950 = vmatprep.subr.mxu0 0.0
        %1951 = vmatpush2.msra.mxu0 0.0
        %1952 = vmatprep.subr.mxu0 0.0
        %1953 = vmatpush2.msra.mxu0 0.0
        %1954 = vmatprep.subr.mxu0 0.0
        %1955 = vmatpush2.msra.mxu0 0.0
        %1956 = vmatprep.subr.mxu0 0.0
        %1957 = vmatpush2.msra.mxu0 0.0
        %1958 = vmatprep.subr.mxu0 0.0
        %1959 = vmatpush2.msra.mxu0 0.0
        %1960 = vmatprep.mubr.f32.mxu0 0.0
        %1961 = vmatmul.mubr.f32.gmra.mxu0 %v1894
        %v1962 = vpop.f32.mrf.mxu0
        %v1963 = vadd.f32 0.0, %v1962
        %v1964 = vpop.f32.mrf.mxu0
        %1965 = vdwg.mxu0
        %v1966 = vmax.f32 %v1868, %v1963
        %v1967 = vsel %vm1890, 3.4e+38, %v1869
        %v1968 = vsel %vm413, %v1967, inf
        %1969 = vmin.xlane.f32.xlu0 %v1968
        %v1970 = vpop.xlane.xlu0 %1969
        %vm1971 = vcmp.le.f32.partialorder %v1967, %v1970
        %v1972 = vsel %vm1971, %v498, 32
        %v1973 = vsel %vm413, %v1972, 2147483647
        %v1974 = vand.u32 %v1973, 65535
        %v1975 = vshra.s32 %v1973, 16
        %v1976 = vcvt.s32.f32 %v1974
        %v1977 = vcvt.s32.f32 %v1975
        %1978 = vmin.xlane.f32.xlu0 %v1977
        %v1979 = vpop.xlane.xlu0 %1978
        %vm1980 = vcmp.eq.f32.partialorder %v1977, %v1979
        %v1981 = vsel %vm1980, %v1976, inf
        %1982 = vmin.xlane.f32.xlu0 %v1981
        %v1983 = vpop.xlane.xlu0 %1982
        %v1984 = vcvt.f32.s32 %v1983
        %v1985 = vcvt.f32.s32 %v1979
        %v1986 = vshll.u32 %v1985, 16
        %v1987 = vadd.s32 %v1986, %v1984
        %vm1988 = vcmp.eq.s32.totalorder %v498, %v1987
        %v1989 = vsel %vm1988, 1, 0
        %v1990 = vcvt.s32.f32 %v1989
        %v1992 = vsel %vm413, %v1990, 0
        %1994 = vmatprep.subr.mxu0 0.0
        %1995 = vmatpush1.msra.mxu0 0.0
        %1996 = vmatprep.subr.mxu0 0.0
        %1997 = vmatpush1.msra.mxu0 0.0
        %1998 = vmatprep.subr.mxu0 0.0
        %1999 = vmatpush1.msra.mxu0 0.0
        %2000 = vmatprep.subr.mxu0 0.0
        %2001 = vmatpush1.msra.mxu0 0.0
        %2002 = vmatprep.subr.mxu0 0.0
        %2003 = vmatpush1.msra.mxu0 0.0
        %2004 = vmatprep.subr.mxu0 0.0
        %2005 = vmatpush1.msra.mxu0 0.0
        %2006 = vmatprep.subr.mxu0 0.0
        %2007 = vmatpush1.msra.mxu0 0.0
        %2008 = vmatprep.subr.mxu0 0.0
        %2009 = vmatpush1.msra.mxu0 0.0
        %2010 = vmatprep.subr.mxu0 0.0
        %2011 = vmatpush1.msra.mxu0 0.0
        %2012 = vmatprep.subr.mxu0 0.0
        %2013 = vmatpush1.msra.mxu0 0.0
        %2014 = vmatprep.subr.mxu0 0.0
        %2015 = vmatpush1.msra.mxu0 0.0
        %2016 = vmatprep.subr.mxu0 0.0
        %2017 = vmatpush1.msra.mxu0 0.0
        %2018 = vmatprep.subr.mxu0 0.0
        %2019 = vmatpush1.msra.mxu0 %v411
        %2020 = vmatprep.subr.mxu0 0.0
        %2021 = vmatpush1.msra.mxu0 %v410
        %2022 = vmatprep.subr.mxu0 0.0
        %2023 = vmatpush1.msra.mxu0 %v409
        %2024 = vmatprep.subr.mxu0 0.0
        %2025 = vmatpush1.msra.mxu0 %v408
        %2026 = vmatprep.subr.mxu0 0.0
        %2027 = vmatpush2.msra.mxu0 0.0
        %2028 = vmatprep.subr.mxu0 0.0
        %2029 = vmatpush2.msra.mxu0 0.0
        %2030 = vmatprep.subr.mxu0 0.0
        %2031 = vmatpush2.msra.mxu0 0.0
        %2032 = vmatprep.subr.mxu0 0.0
        %2033 = vmatpush2.msra.mxu0 0.0
        %2034 = vmatprep.subr.mxu0 0.0
        %2035 = vmatpush2.msra.mxu0 0.0
        %2036 = vmatprep.subr.mxu0 0.0
        %2037 = vmatpush2.msra.mxu0 0.0
        %2038 = vmatprep.subr.mxu0 0.0
        %2039 = vmatpush2.msra.mxu0 0.0
        %2040 = vmatprep.subr.mxu0 0.0
        %2041 = vmatpush2.msra.mxu0 0.0
        %2042 = vmatprep.subr.mxu0 0.0
        %2043 = vmatpush2.msra.mxu0 0.0
        %2044 = vmatprep.subr.mxu0 0.0
        %2045 = vmatpush2.msra.mxu0 0.0
        %2046 = vmatprep.subr.mxu0 0.0
        %2047 = vmatpush2.msra.mxu0 0.0
        %2048 = vmatprep.subr.mxu0 0.0
        %2049 = vmatpush2.msra.mxu0 0.0
        %2050 = vmatprep.subr.mxu0 0.0
        %2051 = vmatpush2.msra.mxu0 0.0
        %2052 = vmatprep.subr.mxu0 0.0
        %2053 = vmatpush2.msra.mxu0 0.0
        %2054 = vmatprep.subr.mxu0 0.0
        %2055 = vmatpush2.msra.mxu0 0.0
        %2056 = vmatprep.subr.mxu0 0.0
        %2057 = vmatpush2.msra.mxu0 0.0
        %2058 = vmatprep.mubr.f32.mxu0 0.0
        %2059 = vmatmul.mubr.f32.gmra.mxu0 %v1992
        %v2060 = vpop.f32.mrf.mxu0
        %v2061 = vadd.f32 0.0, %v2060
        %v2062 = vpop.f32.mrf.mxu0
        %2063 = vdwg.mxu0
        %v2064 = vmax.f32 %v1966, %v2061
        %2065 = vst.msk [vmem:[%s265] sm:$0xff] %vm413, %v2064
        %s2066 = sand.u32 %s163, 1
        %s2067 = scalar_lea.sflag [#allocation4], %s2066
        %s2068 = sand.u32 %s163, 1
        %s2069 = smul.addr %s2068, 8
        %s2070 = scalar_lea.vmem [#allocation3], %s2069
        // Predicated region
        $region45: #{transition_down.5} parent=39 // pred_check
          %p2071 = pneg %p173
        $region46: #{transition_down.5} parent=39 // pred_check_branch
          %2073 = sbr.rel (%p2071) target = $region48
        $region47: #{transition_down.5} parent=39 // pred_region
          %s2075 = ssub.s32 128, 128
          %2076 = vsyncadd %s2067, %s2075
          %s2077 = sadd.s32 %s24, %s23
          %s2078 = smul.addr %s2077, 128
          %s2079 = scalar_lea.hbm %s5, %s2078
          %s2081 = sshll.u32 %s2070, 4
          %s2082 = int_to_ptr.vmem [resolvable:$true] %s2081
          %2084 = dma.vmem_to_hbm [thread:$0]  %s2082, 128, %s2079, %s2067
        $region48: #{transition_down.5} parent=39 // pred_fallthru
          _
      $region40: #{transition_down.5} parent=5 // pred_fallthru
        _
      %p2085 = scmp.le.s32.totalorder 2, %s14
      // Predicated region
      $region49: #{transition_down.5} parent=5 // pred_check
        %p2086 = pneg %p2085
      $region50: #{transition_down.5} parent=5 // pred_check_branch
        %2088 = sbr.rel (%p2086) target = $region52
      $region51: #{transition_down.5} parent=5 // pred_region
        %s2089 = ssub.s32 %s14, 2
        // Predicated region
        $region53: #{transition_down.5} parent=51 // pred_check
          %p2090 = pneg %p179
        $region54: #{transition_down.5} parent=51 // pred_check_branch
          %2092 = sbr.rel (%p2090) target = $region56
        $region55: #{transition_down.5} parent=51 // pred_region
          %s2093 = sand.u32 %s164, 1
          %s2094 = scalar_lea.sflag [#allocation4], %s2093
          %s2095 = sand.u32 %s164, 1
          %s2096 = smul.addr %s2095, 8
          %s2097 = scalar_lea.vmem [#allocation3], %s2096
          %2098 = dma.done %s2094, 128
        $region56: #{transition_down.5} parent=51 // pred_fallthru
          _
      $region52: #{transition_down.5} parent=5 // pred_fallthru
        _
    $region6: #{transition_down.5} parent=1 // loop_footer
      %s18 = sadd.s32 1, %s14
    $region7: #{transition_down.5} parent=1 // loop_footer_branch
      %13 = sbr.rel target = $region3
    $region8: #{transition_down.5} parent=1 // loop_exit
      _
    %2099 = vsyncpa [#allocation4], 1
    %s2100 = scalar_lea.sflag [#allocation4], 1
    %2101 = vsyncpa %s2100, 1

</llo_original>
